<compile_context>
chip_gen: v7x
topology: tpu7x:2x2x1
jax: 0.10.0
libtpu: 0.0.40
codegen_flags: <defaults>
</compile_context>

<pallas_src>
import functools

import jax
import jax.numpy as jnp
from jax import lax
from jax.experimental import pallas as pl
from jax.experimental.pallas import tpu as pltpu

LANE = 128  # pad all feature dims to this so vregs / MXU columns / stores are dense


def _round_up(v, m):
    return (v + m - 1) // m * m


def _gin_fused_kernel(num_layers, n_nodes, g_per_block, dpad,
                      eps_ref, adj_ref, x_ref, w1_ref, w2_ref,
                      gamma_ref, beta_ref, o_ref):
    """One grid step = G independent graphs; all L GIN layers fused (unrolled).

    Block shapes (padded):
      eps_ref   : [L]          f32  SMEM  (whole array)
      adj_ref   : [G, N, N]    bf16       (per grid step, double-buffered)
      x_ref     : [G, N, Dp]   f32
      w1_ref    : [L, Dp, Dp]  bf16       (constant block index -> resident)
      w2_ref    : [L, Dp, Dp]  bf16
      gamma_ref : [L, 1, Dp]   f32
      beta_ref  : [L, 1, Dp]   f32
      o_ref     : [G, N, Dp]   f32
    """
    G, N, Dp = g_per_block, n_nodes, dpad
    inv_n = 1.0 / float(N)

    adj = adj_ref[...]                     # (G, N, N) bf16, reused by every layer
    h = x_ref[...].reshape(G * N, Dp)      # (G*N, Dp) f32 running node features

    for l in range(num_layers):            # static unroll (L is small)
        h_bf = h.astype(jnp.bfloat16)

        # Per-graph neighborhood sum-aggregation on the MXU (bf16 in, f32 acc).
        # adj is block-diagonal across the G stacked graphs, so each graph gets
        # its own (N x N) @ (N x Dp) matmul.
        aggs = [jnp.dot(adj[g], h_bf[g * N:(g + 1) * N],
                        preferred_element_type=jnp.float32)
                for g in range(G)]
        agg = aggs[0] if G == 1 else jnp.concatenate(aggs, axis=0)

        # (1 + eps) * x + aggregate   (eps is a per-layer SMEM scalar)
        scale = 1.0 + eps_ref[l]
        z = scale * h + agg

        # Two-layer MLP, rows of all G graphs stacked -> M = G*N rows per MXU op
        # (>= 256 when G == 2: full occupancy of the 256-wide v6e/v7x MXU).
        h1 = jnp.maximum(
            jnp.dot(z.astype(jnp.bfloat16), w1_ref[l],
                    preferred_element_type=jnp.float32), 0.0)
        h2 = jnp.maximum(
            jnp.dot(h1.astype(jnp.bfloat16), w2_ref[l],
                    preferred_element_type=jnp.float32), 0.0)

        # Per-graph BatchNorm1d (training mode, biased variance). A single
        # cross-sublane reduce produces both sum and sum-of-squares by
        # concatenating [h2 | h2*h2] along the lane axis. One-pass variance can
        # cancel in f32, so clamp at 0 to keep rsqrt well-defined.
        stats = jnp.concatenate([h2, h2 * h2], axis=-1).reshape(G, N, 2 * Dp)
        sums = jnp.sum(stats, axis=1, keepdims=True)          # (G, 1, 2*Dp)
        mean = sums[:, :, :Dp] * inv_n
        var = jnp.maximum(sums[:, :, Dp:] * inv_n - mean * mean, 0.0)
        # Padded-column invariant: mean = var = 0 there and gamma = beta = 0
        # (zero-padded in the wrapper), so padded lanes stay exactly 0.
        hg = (h2.reshape(G, N, Dp) - mean) * lax.rsqrt(var + 1e-5)
        hg = hg * gamma_ref[l] + beta_ref[l]
        h = hg.reshape(G * N, Dp)

    o_ref[...] = h.reshape(G, N, Dp).astype(o_ref.dtype)


def gin_forward_batched(x, adj, params):
    """x: [B, N, Din] f32, adj: [B, N, N] 0/1.  Returns [B, N, Dout].

    Each graph in the batch is processed independently (per-graph BatchNorm),
    i.e. vmap semantics of the original single-graph GIN.forward(x, adj).
    """
    bsz, n, din = x.shape
    num_layers = len(params)
    assert adj.shape == (bsz, n, n)
    assert n % 8 == 0, "node count must be a multiple of 8 (sublane alignment)"

    dims = [din]
    for p in params:
        dims.append(p["w1"].shape[1])
        dims.append(p["w2"].shape[1])
    dpad = _round_up(max(max(dims), LANE), LANE)
    d_out = params[-1]["w2"].shape[1]

    # Stack >= 2 graphs per grid step when possible so the MLP matmuls present
    # M = G*N >= 256 rows to the MXU (v6e / v7x MXUs are 256 wide).
    g_per_block = 2 if (bsz % 2 == 0 and n < 256) else 1
    grid = (bsz // g_per_block,)

    # Zero-pad features to the lane-dense width. Padded columns stay exactly 0
    # through aggregation, the zero-padded MLP weights and BatchNorm because
    # gamma / beta are zero-padded as well -- keep that invariant!
    x_p = jnp.zeros((bsz, n, dpad), jnp.float32).at[:, :, :din].set(
        x.astype(jnp.float32))
    adj_bf = adj.astype(jnp.bfloat16)   # 0/1 values: exact in bf16

    w1s, w2s, gammas, betas, epss = [], [], [], [], []
    for p in params:
        d_i, d_h = p["w1"].shape
        d_o = p["w2"].shape[1]
        w1p = jnp.zeros((dpad, dpad), jnp.float32).at[:d_i, :d_h].set(p["w1"])
        w2p = jnp.zeros((dpad, dpad), jnp.float32).at[:d_h, :d_o].set(p["w2"])
        gp = jnp.zeros((1, dpad), jnp.float32).at[:, :d_o].set(p["gamma"])
        bp = jnp.zeros((1, dpad), jnp.float32).at[:, :d_o].set(p["beta"])
        w1s.append(w1p.astype(jnp.bfloat16))
        w2s.append(w2p.astype(jnp.bfloat16))
        gammas.append(gp)
        betas.append(bp)
        epss.append(jnp.asarray(p["eps"], jnp.float32))

    w1_stack = jnp.stack(w1s)        # [L, Dp, Dp] bf16
    w2_stack = jnp.stack(w2s)        # [L, Dp, Dp] bf16
    gamma_stack = jnp.stack(gammas)  # [L, 1, Dp]  f32
    beta_stack = jnp.stack(betas)    # [L, 1, Dp]  f32
    eps_vec = jnp.stack(epss)        # [L]         f32 (SMEM)

    # VMEM budget: per-step adj/x/out blocks (double-buffered), resident weight
    # stacks, plus in-kernel f32 temps; generous headroom, below physical VMEM.
    g = g_per_block
    est = (2 * g * n * n * 2                        # adj blocks (bf16, 2 buffers)
           + 4 * g * n * dpad * 4                   # x + out blocks (f32, 2 each)
           + 2 * 2 * num_layers * dpad * dpad * 2   # w1 + w2 stacks (bf16, slack)
           + 4 * num_layers * dpad * 4              # gamma + beta
           + 12 * g * n * dpad * 4)                 # elementwise / BN temps
    vmem_limit = int(min(est + (16 << 20), 64 << 20))

    flops = bsz * num_layers * (2 * n * n * dpad + 4 * n * dpad * dpad)
    bytes_accessed = (adj_bf.size * 2 + x_p.size * 4 + bsz * n * dpad * 4
                      + w1_stack.size * 2 + w2_stack.size * 2
                      + (gamma_stack.size + beta_stack.size) * 4)
    cost = pl.CostEstimate(flops=int(flops),
                           transcendentals=int(bsz * num_layers * dpad),
                           bytes_accessed=int(bytes_accessed))

    kernel = functools.partial(_gin_fused_kernel, num_layers, n, g_per_block,
                               dpad)
    out_pad = pl.pallas_call(
        kernel,
        grid=grid,
        out_shape=jax.ShapeDtypeStruct((bsz, n, dpad), jnp.float32),
        in_specs=[
            # eps [L] -- whole (tiny) array resident in SMEM.
            pl.BlockSpec(memory_space=pltpu.MemorySpace.SMEM),
            # Per-grid-step graph blocks: pipelined / double-buffered DMA.
            pl.BlockSpec((g, n, n), lambda i: (i, 0, 0),
                         pipeline_mode=pl.Buffered(2)),
            pl.BlockSpec((g, n, dpad), lambda i: (i, 0, 0),
                         pipeline_mode=pl.Buffered(2)),
            # Weight stacks: constant block index -> DMA'd once, stay resident.
            pl.BlockSpec((num_layers, dpad, dpad), lambda i: (0, 0, 0)),
            pl.BlockSpec((num_layers, dpad, dpad), lambda i: (0, 0, 0)),
            pl.BlockSpec((num_layers, 1, dpad), lambda i: (0, 0, 0)),
            pl.BlockSpec((num_layers, 1, dpad), lambda i: (0, 0, 0)),
        ],
        out_specs=pl.BlockSpec((g, n, dpad), lambda i: (i, 0, 0)),
        compiler_params=pltpu.CompilerParams(
            dimension_semantics=("parallel",),
            vmem_limit_bytes=vmem_limit),
        cost_estimate=cost,
    )(eps_vec, adj_bf, x_p, w1_stack, w2_stack, gamma_stack, beta_stack)

    # Slice the padded (all-zero) columns back off.
    # TODO(synk): callers that can consume the lane-padded [B, N, 128] buffer
    # directly should do so and skip this extra XLA slice copy.
    return out_pad[:, :, :d_out]


gin_forward = jax.jit(gin_forward_batched)


def gin_forward_single(x, adj, params):
    """Original single-graph GIN.forward(x, adj) semantics."""
    return gin_forward(x[None], adj[None], params)[0]


def gin_reference(x, adj, params):
    """Pure-JAX single-graph reference with the same bf16-in / f32-acc matmuls."""
    h = x.astype(jnp.float32)
    adj_bf = adj.astype(jnp.bfloat16)
    for p in params:
        agg = jnp.dot(adj_bf, h.astype(jnp.bfloat16),
                      preferred_element_type=jnp.float32)
        z = (1.0 + p["eps"]) * h + agg
        h1 = jnp.maximum(
            jnp.dot(z.astype(jnp.bfloat16), p["w1"].astype(jnp.bfloat16),
                    preferred_element_type=jnp.float32), 0.0)
        h2 = jnp.maximum(
            jnp.dot(h1.astype(jnp.bfloat16), p["w2"].astype(jnp.bfloat16),
                    preferred_element_type=jnp.float32), 0.0)
        mean = jnp.mean(h2, axis=0, keepdims=True)
        var = jnp.mean((h2 - mean) ** 2, axis=0, keepdims=True)
        h = (h2 - mean) * lax.rsqrt(var + 1e-5) * p["gamma"] + p["beta"]
    return h


def gin_reference_batched(x, adj, params):
    return jnp.stack([gin_reference(x[i], adj[i], params)
                      for i in range(x.shape[0])])


def init_gin_params(key, input_dim, hidden_dim, output_dim, num_layers):
    """Xavier-normal-ish init; weights pre-transposed to [Din, Dout]; eps=0,
    BatchNorm gamma=1 / beta=0 (PyTorch defaults)."""
    params = []
    for layer in range(num_layers):
        if layer == 0:
            din, dh, dout = input_dim, hidden_dim, hidden_dim
        elif layer == num_layers - 1:
            din, dh, dout = hidden_dim, hidden_dim, output_dim
        else:
            din, dh, dout = hidden_dim, hidden_dim, hidden_dim
        key, k1, k2 = jax.random.split(key, 3)
        w1 = jax.random.normal(k1, (din, dh), jnp.float32) * jnp.sqrt(
            2.0 / (din + dh))
        w2 = jax.random.normal(k2, (dh, dout), jnp.float32) * jnp.sqrt(
            2.0 / (dh + dout))
        gamma = jnp.ones((1, dout), jnp.float32)
        beta = jnp.zeros((1, dout), jnp.float32)
        params.append(dict(w1=w1, w2=w2, gamma=gamma, beta=beta,
                           eps=jnp.float32(0.0)))
    return params


if __name__ == "__main__":
    key = jax.random.PRNGKey(0)
    B = 4              # batch of independent graphs (parallel grid axis)
    N = 128            # nodes per graph
    input_dim = 16
    hidden_dim = 32
    output_dim = 8
    num_layers = 3

    key, kx, ka = jax.random.split(key, 3)
    x = jax.random.normal(kx, (B, N, input_dim), jnp.float32)
    # Symmetric random 0/1 adjacencies (no self loops) -- deterministic.
    a = (jax.random.uniform(ka, (B, N, N)) < 0.1).astype(jnp.float32)
    adj = jnp.triu(a, 1)
    adj = adj + jnp.swapaxes(adj, -1, -2)

    params = tuple(init_gin_params(key, input_dim, hidden_dim, output_dim,
                                   num_layers))

    out = gin_forward(x, adj, params)          # batched path (G=2, grid=(2,))
    jax.block_until_ready(out)
    assert out.shape == (B, N, output_dim)

    out1 = gin_forward_single(x[0], adj[0], params)   # single-graph path (G=1)
    jax.block_until_ready(out1)
    assert out1.shape == (N, output_dim)

    ref = gin_reference_batched(x, adj, params)
    assert bool(jnp.all(jnp.isfinite(out)))
    assert bool(jnp.allclose(out, ref, atol=1e-2, rtol=1e-2))
    assert bool(jnp.allclose(out1, ref[0], atol=1e-2, rtol=1e-2))

    print("KERNEL_OK")
</pallas_src>

<mosaic_0001>
module attributes {stable_mosaic.version = 11 : i64} {
  func.func @_gin_fused_kernel(%arg0: i32, %arg1: memref<3xf32, #tpu.memory_space<smem>>, %arg2: memref<2x128x128xbf16, #tpu.memory_space<vmem>>, %arg3: memref<2x128x128xf32, #tpu.memory_space<vmem>>, %arg4: memref<3x128x128xbf16, #tpu.memory_space<vmem>>, %arg5: memref<3x128x128xbf16, #tpu.memory_space<vmem>>, %arg6: memref<3x1x128xf32, #tpu.memory_space<vmem>>, %arg7: memref<3x1x128xf32, #tpu.memory_space<vmem>>, %arg8: memref<2x128x128xf32, #tpu.memory_space<vmem>>) attributes {dimension_semantics = [#tpu.dimension_semantics<parallel>], iteration_bounds = array<i64: 2>, scalar_prefetch = 0 : i64, scratch_operands = 0 : i64, tpu.core_type = #tpu.core_type<tc>, window_params = [{transform_indices = @transform_0, window_bounds = array<i64: 3>}, {pipeline_mode = #tpu.pipeline_mode<double_buffered>, transform_indices = @transform_1, window_bounds = array<i64: 2, 128, 128>}, {pipeline_mode = #tpu.pipeline_mode<double_buffered>, transform_indices = @transform_2, window_bounds = array<i64: 2, 128, 128>}, {pipeline_mode = #tpu.pipeline_mode<synchronous>, transform_indices = @transform_3, window_bounds = array<i64: 3, 128, 128>}, {pipeline_mode = #tpu.pipeline_mode<synchronous>, transform_indices = @transform_4, window_bounds = array<i64: 3, 128, 128>}, {pipeline_mode = #tpu.pipeline_mode<synchronous>, transform_indices = @transform_5, window_bounds = array<i64: 3, 1, 128>}, {pipeline_mode = #tpu.pipeline_mode<synchronous>, transform_indices = @transform_6, window_bounds = array<i64: 3, 1, 128>}, {transform_indices = @transform_7, window_bounds = array<i64: 2, 128, 128>}]} {
    %c0 = arith.constant 0 : index
    %c0_0 = arith.constant 0 : index
    %c0_1 = arith.constant 0 : index
    %0 = vector.load %arg2[%c0, %c0_0, %c0_1] : memref<2x128x128xbf16, #tpu.memory_space<vmem>>, vector<2x128x128xbf16>
    %c0_2 = arith.constant 0 : index
    %c0_3 = arith.constant 0 : index
    %c0_4 = arith.constant 0 : index
    %1 = vector.load %arg3[%c0_2, %c0_3, %c0_4] : memref<2x128x128xf32, #tpu.memory_space<vmem>>, vector<2x128x128xf32>
    %2 = vector.shape_cast %1 : vector<2x128x128xf32> to vector<256x128xf32>
    %3 = arith.truncf %2 : vector<256x128xf32> to vector<256x128xbf16>
    %4 = vector.extract_strided_slice %0 {offsets = [0, 0, 0], sizes = [1, 128, 128], strides = [1, 1, 1]} : vector<2x128x128xbf16> to vector<1x128x128xbf16>
    %5 = vector.shape_cast %4 : vector<1x128x128xbf16> to vector<128x128xbf16>
    %6 = vector.extract_strided_slice %3 {offsets = [0, 0], sizes = [128, 128], strides = [1, 1]} : vector<256x128xbf16> to vector<128x128xbf16>
    %cst = arith.constant dense<0.000000e+00> : vector<128x128xf32>
    %7 = tpu.matmul %5, %6, %cst {dimension_numbers = #tpu.dot_dimension_numbers<[1], [0], [0], [1], [0, 0, 1, 1], [], []>} : vector<128x128xbf16>, vector<128x128xbf16>, vector<128x128xf32> -> vector<128x128xf32>
    %8 = vector.extract_strided_slice %0 {offsets = [1, 0, 0], sizes = [1, 128, 128], strides = [1, 1, 1]} : vector<2x128x128xbf16> to vector<1x128x128xbf16>
    %9 = vector.shape_cast %8 : vector<1x128x128xbf16> to vector<128x128xbf16>
    %10 = vector.extract_strided_slice %3 {offsets = [128, 0], sizes = [128, 128], strides = [1, 1]} : vector<256x128xbf16> to vector<128x128xbf16>
    %cst_5 = arith.constant dense<0.000000e+00> : vector<128x128xf32>
    %11 = tpu.matmul %9, %10, %cst_5 {dimension_numbers = #tpu.dot_dimension_numbers<[1], [0], [0], [1], [0, 0, 1, 1], [], []>} : vector<128x128xbf16>, vector<128x128xbf16>, vector<128x128xf32> -> vector<128x128xf32>
    %12 = tpu.concatenate %7, %11 in 0 : vector<128x128xf32>, vector<128x128xf32> -> vector<256x128xf32>
    %c0_6 = arith.constant 0 : index
    %13 = memref.load %arg1[%c0_6] : memref<3xf32, #tpu.memory_space<smem>>
    %cst_7 = arith.constant 1.000000e+00 : f32
    %14 = arith.addf %cst_7, %13 : f32
    %15 = vector.broadcast %14 : f32 to vector<256x128xf32>
    %16 = arith.mulf %15, %2 : vector<256x128xf32>
    %17 = arith.addf %16, %12 : vector<256x128xf32>
    %18 = arith.truncf %17 : vector<256x128xf32> to vector<256x128xbf16>
    %c0_8 = arith.constant 0 : index
    %c0_9 = arith.constant 0 : index
    %c0_10 = arith.constant 0 : index
    %19 = vector.load %arg4[%c0_8, %c0_9, %c0_10] : memref<3x128x128xbf16, #tpu.memory_space<vmem>>, vector<1x128x128xbf16>
    %20 = vector.shape_cast %19 : vector<1x128x128xbf16> to vector<128x128xbf16>
    %cst_11 = arith.constant dense<0.000000e+00> : vector<256x128xf32>
    %21 = tpu.matmul %18, %20, %cst_11 {dimension_numbers = #tpu.dot_dimension_numbers<[1], [0], [0], [1], [0, 0, 1, 1], [], []>} : vector<256x128xbf16>, vector<128x128xbf16>, vector<256x128xf32> -> vector<256x128xf32>
    %cst_12 = arith.constant 0.000000e+00 : f32
    %22 = vector.broadcast %cst_12 : f32 to vector<256x128xf32>
    %23 = arith.maximumf %21, %22 : vector<256x128xf32>
    %24 = arith.truncf %23 : vector<256x128xf32> to vector<256x128xbf16>
    %c0_13 = arith.constant 0 : index
    %c0_14 = arith.constant 0 : index
    %c0_15 = arith.constant 0 : index
    %25 = vector.load %arg5[%c0_13, %c0_14, %c0_15] : memref<3x128x128xbf16, #tpu.memory_space<vmem>>, vector<1x128x128xbf16>
    %26 = vector.shape_cast %25 : vector<1x128x128xbf16> to vector<128x128xbf16>
    %cst_16 = arith.constant dense<0.000000e+00> : vector<256x128xf32>
    %27 = tpu.matmul %24, %26, %cst_16 {dimension_numbers = #tpu.dot_dimension_numbers<[1], [0], [0], [1], [0, 0, 1, 1], [], []>} : vector<256x128xbf16>, vector<128x128xbf16>, vector<256x128xf32> -> vector<256x128xf32>
    %cst_17 = arith.constant 0.000000e+00 : f32
    %28 = vector.broadcast %cst_17 : f32 to vector<256x128xf32>
    %29 = arith.maximumf %27, %28 : vector<256x128xf32>
    %30 = arith.mulf %29, %29 : vector<256x128xf32>
    %31 = tpu.concatenate %29, %30 in 1 : vector<256x128xf32>, vector<256x128xf32> -> vector<256x256xf32>
    %32 = vector.shape_cast %31 : vector<256x256xf32> to vector<2x128x256xf32>
    %cst_18 = arith.constant dense<0.000000e+00> : vector<2x256xf32>
    %33 = vector.multi_reduction <add>, %32, %cst_18 [1] : vector<2x128x256xf32> to vector<2x256xf32>
    %34 = vector.shape_cast %33 : vector<2x256xf32> to vector<2x1x256xf32>
    %35 = vector.extract_strided_slice %34 {offsets = [0, 0, 0], sizes = [2, 1, 128], strides = [1, 1, 1]} : vector<2x1x256xf32> to vector<2x1x128xf32>
    %cst_19 = arith.constant 7.812500e-03 : f32
    %36 = vector.broadcast %cst_19 : f32 to vector<2x1x128xf32>
    %37 = arith.mulf %35, %36 : vector<2x1x128xf32>
    %38 = vector.extract_strided_slice %34 {offsets = [0, 0, 128], sizes = [2, 1, 128], strides = [1, 1, 1]} : vector<2x1x256xf32> to vector<2x1x128xf32>
    %cst_20 = arith.constant 7.812500e-03 : f32
    %39 = vector.broadcast %cst_20 : f32 to vector<2x1x128xf32>
    %40 = arith.mulf %38, %39 : vector<2x1x128xf32>
    %41 = arith.mulf %37, %37 : vector<2x1x128xf32>
    %42 = arith.subf %40, %41 : vector<2x1x128xf32>
    %cst_21 = arith.constant 0.000000e+00 : f32
    %43 = vector.broadcast %cst_21 : f32 to vector<2x1x128xf32>
    %44 = arith.maximumf %42, %43 : vector<2x1x128xf32>
    %45 = vector.shape_cast %29 : vector<256x128xf32> to vector<2x128x128xf32>
    %46 = vector.broadcast %37 : vector<2x1x128xf32> to vector<2x128x128xf32>
    %47 = arith.subf %45, %46 : vector<2x128x128xf32>
    %cst_22 = arith.constant 9.99999974E-6 : f32
    %48 = vector.broadcast %cst_22 : f32 to vector<2x1x128xf32>
    %49 = arith.addf %44, %48 : vector<2x1x128xf32>
    %50 = math.rsqrt %49 : vector<2x1x128xf32>
    %51 = vector.broadcast %50 : vector<2x1x128xf32> to vector<2x128x128xf32>
    %52 = arith.mulf %47, %51 : vector<2x128x128xf32>
    %c0_23 = arith.constant 0 : index
    %c0_24 = arith.constant 0 : index
    %c0_25 = arith.constant 0 : index
    %53 = vector.load %arg6[%c0_23, %c0_24, %c0_25] : memref<3x1x128xf32, #tpu.memory_space<vmem>>, vector<1x1x128xf32>
    %54 = vector.shape_cast %53 : vector<1x1x128xf32> to vector<1x128xf32>
    %55 = vector.shape_cast %54 : vector<1x128xf32> to vector<1x1x128xf32>
    %56 = vector.broadcast %55 : vector<1x1x128xf32> to vector<2x128x128xf32>
    %57 = arith.mulf %52, %56 : vector<2x128x128xf32>
    %c0_26 = arith.constant 0 : index
    %c0_27 = arith.constant 0 : index
    %c0_28 = arith.constant 0 : index
    %58 = vector.load %arg7[%c0_26, %c0_27, %c0_28] : memref<3x1x128xf32, #tpu.memory_space<vmem>>, vector<1x1x128xf32>
    %59 = vector.shape_cast %58 : vector<1x1x128xf32> to vector<1x128xf32>
    %60 = vector.shape_cast %59 : vector<1x128xf32> to vector<1x1x128xf32>
    %61 = vector.broadcast %60 : vector<1x1x128xf32> to vector<2x128x128xf32>
    %62 = arith.addf %57, %61 : vector<2x128x128xf32>
    %63 = vector.shape_cast %62 : vector<2x128x128xf32> to vector<256x128xf32>
    %64 = arith.truncf %63 : vector<256x128xf32> to vector<256x128xbf16>
    %65 = vector.extract_strided_slice %0 {offsets = [0, 0, 0], sizes = [1, 128, 128], strides = [1, 1, 1]} : vector<2x128x128xbf16> to vector<1x128x128xbf16>
    %66 = vector.shape_cast %65 : vector<1x128x128xbf16> to vector<128x128xbf16>
    %67 = vector.extract_strided_slice %64 {offsets = [0, 0], sizes = [128, 128], strides = [1, 1]} : vector<256x128xbf16> to vector<128x128xbf16>
    %cst_29 = arith.constant dense<0.000000e+00> : vector<128x128xf32>
    %68 = tpu.matmul %66, %67, %cst_29 {dimension_numbers = #tpu.dot_dimension_numbers<[1], [0], [0], [1], [0, 0, 1, 1], [], []>} : vector<128x128xbf16>, vector<128x128xbf16>, vector<128x128xf32> -> vector<128x128xf32>
    %69 = vector.extract_strided_slice %0 {offsets = [1, 0, 0], sizes = [1, 128, 128], strides = [1, 1, 1]} : vector<2x128x128xbf16> to vector<1x128x128xbf16>
    %70 = vector.shape_cast %69 : vector<1x128x128xbf16> to vector<128x128xbf16>
    %71 = vector.extract_strided_slice %64 {offsets = [128, 0], sizes = [128, 128], strides = [1, 1]} : vector<256x128xbf16> to vector<128x128xbf16>
    %cst_30 = arith.constant dense<0.000000e+00> : vector<128x128xf32>
    %72 = tpu.matmul %70, %71, %cst_30 {dimension_numbers = #tpu.dot_dimension_numbers<[1], [0], [0], [1], [0, 0, 1, 1], [], []>} : vector<128x128xbf16>, vector<128x128xbf16>, vector<128x128xf32> -> vector<128x128xf32>
    %73 = tpu.concatenate %68, %72 in 0 : vector<128x128xf32>, vector<128x128xf32> -> vector<256x128xf32>
    %c1 = arith.constant 1 : index
    %74 = memref.load %arg1[%c1] : memref<3xf32, #tpu.memory_space<smem>>
    %cst_31 = arith.constant 1.000000e+00 : f32
    %75 = arith.addf %cst_31, %74 : f32
    %76 = vector.broadcast %75 : f32 to vector<256x128xf32>
    %77 = arith.mulf %76, %63 : vector<256x128xf32>
    %78 = arith.addf %77, %73 : vector<256x128xf32>
    %79 = arith.truncf %78 : vector<256x128xf32> to vector<256x128xbf16>
    %c1_32 = arith.constant 1 : index
    %c0_33 = arith.constant 0 : index
    %c0_34 = arith.constant 0 : index
    %80 = vector.load %arg4[%c1_32, %c0_33, %c0_34] : memref<3x128x128xbf16, #tpu.memory_space<vmem>>, vector<1x128x128xbf16>
    %81 = vector.shape_cast %80 : vector<1x128x128xbf16> to vector<128x128xbf16>
    %cst_35 = arith.constant dense<0.000000e+00> : vector<256x128xf32>
    %82 = tpu.matmul %79, %81, %cst_35 {dimension_numbers = #tpu.dot_dimension_numbers<[1], [0], [0], [1], [0, 0, 1, 1], [], []>} : vector<256x128xbf16>, vector<128x128xbf16>, vector<256x128xf32> -> vector<256x128xf32>
    %cst_36 = arith.constant 0.000000e+00 : f32
    %83 = vector.broadcast %cst_36 : f32 to vector<256x128xf32>
    %84 = arith.maximumf %82, %83 : vector<256x128xf32>
    %85 = arith.truncf %84 : vector<256x128xf32> to vector<256x128xbf16>
    %c1_37 = arith.constant 1 : index
    %c0_38 = arith.constant 0 : index
    %c0_39 = arith.constant 0 : index
    %86 = vector.load %arg5[%c1_37, %c0_38, %c0_39] : memref<3x128x128xbf16, #tpu.memory_space<vmem>>, vector<1x128x128xbf16>
    %87 = vector.shape_cast %86 : vector<1x128x128xbf16> to vector<128x128xbf16>
    %cst_40 = arith.constant dense<0.000000e+00> : vector<256x128xf32>
    %88 = tpu.matmul %85, %87, %cst_40 {dimension_numbers = #tpu.dot_dimension_numbers<[1], [0], [0], [1], [0, 0, 1, 1], [], []>} : vector<256x128xbf16>, vector<128x128xbf16>, vector<256x128xf32> -> vector<256x128xf32>
    %cst_41 = arith.constant 0.000000e+00 : f32
    %89 = vector.broadcast %cst_41 : f32 to vector<256x128xf32>
    %90 = arith.maximumf %88, %89 : vector<256x128xf32>
    %91 = arith.mulf %90, %90 : vector<256x128xf32>
    %92 = tpu.concatenate %90, %91 in 1 : vector<256x128xf32>, vector<256x128xf32> -> vector<256x256xf32>
    %93 = vector.shape_cast %92 : vector<256x256xf32> to vector<2x128x256xf32>
    %cst_42 = arith.constant dense<0.000000e+00> : vector<2x256xf32>
    %94 = vector.multi_reduction <add>, %93, %cst_42 [1] : vector<2x128x256xf32> to vector<2x256xf32>
    %95 = vector.shape_cast %94 : vector<2x256xf32> to vector<2x1x256xf32>
    %96 = vector.extract_strided_slice %95 {offsets = [0, 0, 0], sizes = [2, 1, 128], strides = [1, 1, 1]} : vector<2x1x256xf32> to vector<2x1x128xf32>
    %cst_43 = arith.constant 7.812500e-03 : f32
    %97 = vector.broadcast %cst_43 : f32 to vector<2x1x128xf32>
    %98 = arith.mulf %96, %97 : vector<2x1x128xf32>
    %99 = vector.extract_strided_slice %95 {offsets = [0, 0, 128], sizes = [2, 1, 128], strides = [1, 1, 1]} : vector<2x1x256xf32> to vector<2x1x128xf32>
    %cst_44 = arith.constant 7.812500e-03 : f32
    %100 = vector.broadcast %cst_44 : f32 to vector<2x1x128xf32>
    %101 = arith.mulf %99, %100 : vector<2x1x128xf32>
    %102 = arith.mulf %98, %98 : vector<2x1x128xf32>
    %103 = arith.subf %101, %102 : vector<2x1x128xf32>
    %cst_45 = arith.constant 0.000000e+00 : f32
    %104 = vector.broadcast %cst_45 : f32 to vector<2x1x128xf32>
    %105 = arith.maximumf %103, %104 : vector<2x1x128xf32>
    %106 = vector.shape_cast %90 : vector<256x128xf32> to vector<2x128x128xf32>
    %107 = vector.broadcast %98 : vector<2x1x128xf32> to vector<2x128x128xf32>
    %108 = arith.subf %106, %107 : vector<2x128x128xf32>
    %cst_46 = arith.constant 9.99999974E-6 : f32
    %109 = vector.broadcast %cst_46 : f32 to vector<2x1x128xf32>
    %110 = arith.addf %105, %109 : vector<2x1x128xf32>
    %111 = math.rsqrt %110 : vector<2x1x128xf32>
    %112 = vector.broadcast %111 : vector<2x1x128xf32> to vector<2x128x128xf32>
    %113 = arith.mulf %108, %112 : vector<2x128x128xf32>
    %c1_47 = arith.constant 1 : index
    %c0_48 = arith.constant 0 : index
    %c0_49 = arith.constant 0 : index
    %114 = vector.load %arg6[%c1_47, %c0_48, %c0_49] : memref<3x1x128xf32, #tpu.memory_space<vmem>>, vector<1x1x128xf32>
    %115 = vector.shape_cast %114 : vector<1x1x128xf32> to vector<1x128xf32>
    %116 = vector.shape_cast %115 : vector<1x128xf32> to vector<1x1x128xf32>
    %117 = vector.broadcast %116 : vector<1x1x128xf32> to vector<2x128x128xf32>
    %118 = arith.mulf %113, %117 : vector<2x128x128xf32>
    %c1_50 = arith.constant 1 : index
    %c0_51 = arith.constant 0 : index
    %c0_52 = arith.constant 0 : index
    %119 = vector.load %arg7[%c1_50, %c0_51, %c0_52] : memref<3x1x128xf32, #tpu.memory_space<vmem>>, vector<1x1x128xf32>
    %120 = vector.shape_cast %119 : vector<1x1x128xf32> to vector<1x128xf32>
    %121 = vector.shape_cast %120 : vector<1x128xf32> to vector<1x1x128xf32>
    %122 = vector.broadcast %121 : vector<1x1x128xf32> to vector<2x128x128xf32>
    %123 = arith.addf %118, %122 : vector<2x128x128xf32>
    %124 = vector.shape_cast %123 : vector<2x128x128xf32> to vector<256x128xf32>
    %125 = arith.truncf %124 : vector<256x128xf32> to vector<256x128xbf16>
    %126 = vector.extract_strided_slice %0 {offsets = [0, 0, 0], sizes = [1, 128, 128], strides = [1, 1, 1]} : vector<2x128x128xbf16> to vector<1x128x128xbf16>
    %127 = vector.shape_cast %126 : vector<1x128x128xbf16> to vector<128x128xbf16>
    %128 = vector.extract_strided_slice %125 {offsets = [0, 0], sizes = [128, 128], strides = [1, 1]} : vector<256x128xbf16> to vector<128x128xbf16>
    %cst_53 = arith.constant dense<0.000000e+00> : vector<128x128xf32>
    %129 = tpu.matmul %127, %128, %cst_53 {dimension_numbers = #tpu.dot_dimension_numbers<[1], [0], [0], [1], [0, 0, 1, 1], [], []>} : vector<128x128xbf16>, vector<128x128xbf16>, vector<128x128xf32> -> vector<128x128xf32>
    %130 = vector.extract_strided_slice %0 {offsets = [1, 0, 0], sizes = [1, 128, 128], strides = [1, 1, 1]} : vector<2x128x128xbf16> to vector<1x128x128xbf16>
    %131 = vector.shape_cast %130 : vector<1x128x128xbf16> to vector<128x128xbf16>
    %132 = vector.extract_strided_slice %125 {offsets = [128, 0], sizes = [128, 128], strides = [1, 1]} : vector<256x128xbf16> to vector<128x128xbf16>
    %cst_54 = arith.constant dense<0.000000e+00> : vector<128x128xf32>
    %133 = tpu.matmul %131, %132, %cst_54 {dimension_numbers = #tpu.dot_dimension_numbers<[1], [0], [0], [1], [0, 0, 1, 1], [], []>} : vector<128x128xbf16>, vector<128x128xbf16>, vector<128x128xf32> -> vector<128x128xf32>
    %134 = tpu.concatenate %129, %133 in 0 : vector<128x128xf32>, vector<128x128xf32> -> vector<256x128xf32>
    %c2 = arith.constant 2 : index
    %135 = memref.load %arg1[%c2] : memref<3xf32, #tpu.memory_space<smem>>
    %cst_55 = arith.constant 1.000000e+00 : f32
    %136 = arith.addf %cst_55, %135 : f32
    %137 = vector.broadcast %136 : f32 to vector<256x128xf32>
    %138 = arith.mulf %137, %124 : vector<256x128xf32>
    %139 = arith.addf %138, %134 : vector<256x128xf32>
    %140 = arith.truncf %139 : vector<256x128xf32> to vector<256x128xbf16>
    %c2_56 = arith.constant 2 : index
    %c0_57 = arith.constant 0 : index
    %c0_58 = arith.constant 0 : index
    %141 = vector.load %arg4[%c2_56, %c0_57, %c0_58] : memref<3x128x128xbf16, #tpu.memory_space<vmem>>, vector<1x128x128xbf16>
    %142 = vector.shape_cast %141 : vector<1x128x128xbf16> to vector<128x128xbf16>
    %cst_59 = arith.constant dense<0.000000e+00> : vector<256x128xf32>
    %143 = tpu.matmul %140, %142, %cst_59 {dimension_numbers = #tpu.dot_dimension_numbers<[1], [0], [0], [1], [0, 0, 1, 1], [], []>} : vector<256x128xbf16>, vector<128x128xbf16>, vector<256x128xf32> -> vector<256x128xf32>
    %cst_60 = arith.constant 0.000000e+00 : f32
    %144 = vector.broadcast %cst_60 : f32 to vector<256x128xf32>
    %145 = arith.maximumf %143, %144 : vector<256x128xf32>
    %146 = arith.truncf %145 : vector<256x128xf32> to vector<256x128xbf16>
    %c2_61 = arith.constant 2 : index
    %c0_62 = arith.constant 0 : index
    %c0_63 = arith.constant 0 : index
    %147 = vector.load %arg5[%c2_61, %c0_62, %c0_63] : memref<3x128x128xbf16, #tpu.memory_space<vmem>>, vector<1x128x128xbf16>
    %148 = vector.shape_cast %147 : vector<1x128x128xbf16> to vector<128x128xbf16>
    %cst_64 = arith.constant dense<0.000000e+00> : vector<256x128xf32>
    %149 = tpu.matmul %146, %148, %cst_64 {dimension_numbers = #tpu.dot_dimension_numbers<[1], [0], [0], [1], [0, 0, 1, 1], [], []>} : vector<256x128xbf16>, vector<128x128xbf16>, vector<256x128xf32> -> vector<256x128xf32>
    %cst_65 = arith.constant 0.000000e+00 : f32
    %150 = vector.broadcast %cst_65 : f32 to vector<256x128xf32>
    %151 = arith.maximumf %149, %150 : vector<256x128xf32>
    %152 = arith.mulf %151, %151 : vector<256x128xf32>
    %153 = tpu.concatenate %151, %152 in 1 : vector<256x128xf32>, vector<256x128xf32> -> vector<256x256xf32>
    %154 = vector.shape_cast %153 : vector<256x256xf32> to vector<2x128x256xf32>
    %cst_66 = arith.constant dense<0.000000e+00> : vector<2x256xf32>
    %155 = vector.multi_reduction <add>, %154, %cst_66 [1] : vector<2x128x256xf32> to vector<2x256xf32>
    %156 = vector.shape_cast %155 : vector<2x256xf32> to vector<2x1x256xf32>
    %157 = vector.extract_strided_slice %156 {offsets = [0, 0, 0], sizes = [2, 1, 128], strides = [1, 1, 1]} : vector<2x1x256xf32> to vector<2x1x128xf32>
    %cst_67 = arith.constant 7.812500e-03 : f32
    %158 = vector.broadcast %cst_67 : f32 to vector<2x1x128xf32>
    %159 = arith.mulf %157, %158 : vector<2x1x128xf32>
    %160 = vector.extract_strided_slice %156 {offsets = [0, 0, 128], sizes = [2, 1, 128], strides = [1, 1, 1]} : vector<2x1x256xf32> to vector<2x1x128xf32>
    %cst_68 = arith.constant 7.812500e-03 : f32
    %161 = vector.broadcast %cst_68 : f32 to vector<2x1x128xf32>
    %162 = arith.mulf %160, %161 : vector<2x1x128xf32>
    %163 = arith.mulf %159, %159 : vector<2x1x128xf32>
    %164 = arith.subf %162, %163 : vector<2x1x128xf32>
    %cst_69 = arith.constant 0.000000e+00 : f32
    %165 = vector.broadcast %cst_69 : f32 to vector<2x1x128xf32>
    %166 = arith.maximumf %164, %165 : vector<2x1x128xf32>
    %167 = vector.shape_cast %151 : vector<256x128xf32> to vector<2x128x128xf32>
    %168 = vector.broadcast %159 : vector<2x1x128xf32> to vector<2x128x128xf32>
    %169 = arith.subf %167, %168 : vector<2x128x128xf32>
    %cst_70 = arith.constant 9.99999974E-6 : f32
    %170 = vector.broadcast %cst_70 : f32 to vector<2x1x128xf32>
    %171 = arith.addf %166, %170 : vector<2x1x128xf32>
    %172 = math.rsqrt %171 : vector<2x1x128xf32>
    %173 = vector.broadcast %172 : vector<2x1x128xf32> to vector<2x128x128xf32>
    %174 = arith.mulf %169, %173 : vector<2x128x128xf32>
    %c2_71 = arith.constant 2 : index
    %c0_72 = arith.constant 0 : index
    %c0_73 = arith.constant 0 : index
    %175 = vector.load %arg6[%c2_71, %c0_72, %c0_73] : memref<3x1x128xf32, #tpu.memory_space<vmem>>, vector<1x1x128xf32>
    %176 = vector.shape_cast %175 : vector<1x1x128xf32> to vector<1x128xf32>
    %177 = vector.shape_cast %176 : vector<1x128xf32> to vector<1x1x128xf32>
    %178 = vector.broadcast %177 : vector<1x1x128xf32> to vector<2x128x128xf32>
    %179 = arith.mulf %174, %178 : vector<2x128x128xf32>
    %c2_74 = arith.constant 2 : index
    %c0_75 = arith.constant 0 : index
    %c0_76 = arith.constant 0 : index
    %180 = vector.load %arg7[%c2_74, %c0_75, %c0_76] : memref<3x1x128xf32, #tpu.memory_space<vmem>>, vector<1x1x128xf32>
    %181 = vector.shape_cast %180 : vector<1x1x128xf32> to vector<1x128xf32>
    %182 = vector.shape_cast %181 : vector<1x128xf32> to vector<1x1x128xf32>
    %183 = vector.broadcast %182 : vector<1x1x128xf32> to vector<2x128x128xf32>
    %184 = arith.addf %179, %183 : vector<2x128x128xf32>
    %185 = vector.shape_cast %184 : vector<2x128x128xf32> to vector<256x128xf32>
    %186 = vector.shape_cast %185 : vector<256x128xf32> to vector<2x128x128xf32>
    %c0_77 = arith.constant 0 : index
    %c0_78 = arith.constant 0 : index
    %c0_79 = arith.constant 0 : index
    %187 = vector.load %arg8[%c0_77, %c0_78, %c0_79] : memref<2x128x128xf32, #tpu.memory_space<vmem>>, vector<2x128x128xf32>
    tpu.vector_store %arg8[%c0_77, %c0_78, %c0_79], %186 {strides = array<i32>} : memref<2x128x128xf32, #tpu.memory_space<vmem>>, vector<2x128x128xf32>,
    return
  }
  func.func @transform_0(%arg0: i32) -> i32 {
    %c0_i32 = arith.constant 0 : i32
    %c0_i32_0 = arith.constant 0 : i32
    return %c0_i32 : i32
  }
  func.func @transform_1(%arg0: i32) -> (i32, i32, i32) {
    %c0_i32 = arith.constant 0 : i32
    %c0_i32_0 = arith.constant 0 : i32
    %c0_i32_1 = arith.constant 0 : i32
    return %arg0, %c0_i32, %c0_i32_0 : i32, i32, i32
  }
  func.func @transform_2(%arg0: i32) -> (i32, i32, i32) {
    %c0_i32 = arith.constant 0 : i32
    %c0_i32_0 = arith.constant 0 : i32
    %c0_i32_1 = arith.constant 0 : i32
    return %arg0, %c0_i32, %c0_i32_0 : i32, i32, i32
  }
  func.func @transform_3(%arg0: i32) -> (i32, i32, i32) {
    %c0_i32 = arith.constant 0 : i32
    %c0_i32_0 = arith.constant 0 : i32
    %c0_i32_1 = arith.constant 0 : i32
    %c0_i32_2 = arith.constant 0 : i32
    return %c0_i32, %c0_i32_0, %c0_i32_1 : i32, i32, i32
  }
  func.func @transform_4(%arg0: i32) -> (i32, i32, i32) {
    %c0_i32 = arith.constant 0 : i32
    %c0_i32_0 = arith.constant 0 : i32
    %c0_i32_1 = arith.constant 0 : i32
    %c0_i32_2 = arith.constant 0 : i32
    return %c0_i32, %c0_i32_0, %c0_i32_1 : i32, i32, i32
  }
  func.func @transform_5(%arg0: i32) -> (i32, i32, i32) {
    %c0_i32 = arith.constant 0 : i32
    %c0_i32_0 = arith.constant 0 : i32
    %c0_i32_1 = arith.constant 0 : i32
    %c0_i32_2 = arith.constant 0 : i32
    return %c0_i32, %c0_i32_0, %c0_i32_1 : i32, i32, i32
  }
  func.func @transform_6(%arg0: i32) -> (i32, i32, i32) {
    %c0_i32 = arith.constant 0 : i32
    %c0_i32_0 = arith.constant 0 : i32
    %c0_i32_1 = arith.constant 0 : i32
    %c0_i32_2 = arith.constant 0 : i32
    return %c0_i32, %c0_i32_0, %c0_i32_1 : i32, i32, i32
  }
  func.func @transform_7(%arg0: i32) -> (i32, i32, i32) {
    %c0_i32 = arith.constant 0 : i32
    %c0_i32_0 = arith.constant 0 : i32
    %c0_i32_1 = arith.constant 0 : i32
    return %arg0, %c0_i32, %c0_i32_0 : i32, i32, i32
  }
}

</mosaic_0001>

<llo_original>
// kernel: gin_forward_batched.1
$region0: #{gin_forward_batched.1}
  #allocation0 [shape = 'u32[]', space=smem, size = 0x4, offset = 0x4, fixed_abs, tag = 'smem constant byte address 0x4 - core index']
  #allocation1 [shape = 'u32[144,128]{1,0:T(1,128)}', space=vmem, size = 0x12000, scoped, tag = 'internal scratch']
  %s0 = inlined_call_operand.vmem [shape: f32[3], index: 0, kind: input, shape index: {}]
  %s1 = inlined_call_operand.vmem [shape: bf16[4,128,128], index: 1, kind: input, shape index: {}]
  %s2 = inlined_call_operand.vmem [shape: f32[4,128,128], index: 2, kind: input, shape index: {}]
  %s3 = inlined_call_operand.vmem [shape: bf16[3,128,128], index: 3, kind: input, shape index: {}]
  %s4 = inlined_call_operand.vmem [shape: bf16[3,128,128], index: 4, kind: input, shape index: {}]
  %s5 = inlined_call_operand.vmem [shape: f32[3,1,128], index: 5, kind: input, shape index: {}]
  %s6 = inlined_call_operand.vmem [shape: f32[3,1,128], index: 6, kind: input, shape index: {}]
  %s7 = inlined_call_operand.vmem [shape: f32[4,128,128], index: 7, kind: output, shape index: {}]
  %s8 = sld [smem:[#allocation0]]
  $region65: #{gin_forward_batched.1} parent=0
    _
  %s10 = ssub.s32 1, %s8
  %s11 = scalar_select 0, %s10, %s8
  $region1: #{gin_forward_batched.1} parent=0
    #allocation2 [shape = 'u8[512]{0}', space=smem, size = 0x200, scoped, tag = 'input window, operand 0, single buffered']
    #allocation3 [shape = 's32[2]{0}', space=sflag, size = 0x8, scoped, tag = 'scoped memory for gin_forward_batched.1']
    %12 = vsyncpa [#allocation3], 0
    loop: start=0, step=1, limit=4
    $region2: #{gin_forward_batched.1} parent=1 // loop_pre_header
      _
    $region3: #{gin_forward_batched.1} parent=1 // loop_header
      %s14 = sphi 0, %s18
      %p15 = scmp.ge.s32.totalorder %s14, 4
      %s22 = sphi 0, %s22
      %s24 = sphi 0, %s22
      %s25 = sphi 0, %s24
      %s39 = sphi 0, %s25
      %s45 = sphi 0, %s47
      %s48 = sphi 0, %s45
      %s49 = sphi 0, %s48
      %s65 = sphi 0, %s49
      %s71 = sphi 0, %s73
      %s74 = sphi 0, %s71
      %s75 = sphi 0, %s74
      %s91 = sphi 0, %s75
      %s95 = sphi 0, %s95
      %s97 = sphi 0, %s95
      %s98 = sphi 0, %s97
      %s112 = sphi 0, %s98
      %s116 = sphi 0, %s116
      %s118 = sphi 0, %s116
      %s119 = sphi 0, %s118
      %s133 = sphi 0, %s119
      %s137 = sphi 0, %s137
      %s139 = sphi 0, %s137
      %s140 = sphi 0, %s139
      %s154 = sphi 0, %s140
      %s158 = sphi 0, %s158
      %s160 = sphi 0, %s158
      %s161 = sphi 0, %s160
      %s175 = sphi 0, %s161
      %s181 = sphi 0, %s183
      %s184 = sphi 0, %s181
      %s185 = sphi 0, %s184
      %s201 = sphi 0, %s185
    $region4: #{gin_forward_batched.1} parent=1 // loop_header_branch
      %17 = sbr.rel (%p15) target = $region8
    $region5: #{gin_forward_batched.1} parent=1 // loop_body
      %s19 = ssub.s32 %s14, 1
      %s20 = ssub.s32 %s14, 2
      %s21 = sadd.s32 %s14, 1
      %s23 = sadd.s32 %s22, 1
      %p26 = scmp.eq.s32.totalorder %s14, 1
      %p27 = scmp.ne.s32.totalorder %s22, %s24
      %p28 = scmp.eq.s32.totalorder %s14, 0
      %p29 = por %p27, %p28
      %p30 = scmp.ne.s32.totalorder %s22, %s24
      %p31 = scmp.eq.s32.totalorder %s19, 1
      %p32 = por %p30, %p31
      %p33 = scmp.ne.s32.totalorder %s24, %s25
      %p34 = scmp.eq.s32.totalorder %s19, 0
      %p35 = por %p33, %p34
      %p36 = scmp.ne.s32.totalorder %s24, %s25
      %p37 = scmp.eq.s32.totalorder %s20, 1
      %p38 = por %p36, %p37
      %p40 = scmp.ne.s32.totalorder %s25, %s39
      %p41 = scmp.eq.s32.totalorder %s20, 0
      %p42 = por %p40, %p41
      %s43 = ssub.s32 %s14, %s21
      %p44 = scmp.eq.s32.totalorder %s43, 0
      %s46 = sadd.s32 %s45, 1
      %s47 = scalar_select %p44, %s45, %s46
      %p50 = pneg %p44
      %p51 = scmp.eq.s32.totalorder %s14, 1
      %p52 = por %p50, %p51
      %p53 = scmp.ne.s32.totalorder %s45, %s48
      %p54 = scmp.eq.s32.totalorder %s14, 0
      %p55 = por %p53, %p54
      %p56 = scmp.ne.s32.totalorder %s45, %s48
      %p57 = scmp.eq.s32.totalorder %s19, 1
      %p58 = por %p56, %p57
      %p59 = scmp.ne.s32.totalorder %s48, %s49
      %p60 = scmp.eq.s32.totalorder %s19, 0
      %p61 = por %p59, %p60
      %p62 = scmp.ne.s32.totalorder %s48, %s49
      %p63 = scmp.eq.s32.totalorder %s20, 1
      %p64 = por %p62, %p63
      %p66 = scmp.ne.s32.totalorder %s49, %s65
      %p67 = scmp.eq.s32.totalorder %s20, 0
      %p68 = por %p66, %p67
      %s69 = ssub.s32 %s14, %s21
      %p70 = scmp.eq.s32.totalorder %s69, 0
      %s72 = sadd.s32 %s71, 1
      %s73 = scalar_select %p70, %s71, %s72
      %p76 = pneg %p70
      %p77 = scmp.eq.s32.totalorder %s14, 1
      %p78 = por %p76, %p77
      %p79 = scmp.ne.s32.totalorder %s71, %s74
      %p80 = scmp.eq.s32.totalorder %s14, 0
      %p81 = por %p79, %p80
      %p82 = scmp.ne.s32.totalorder %s71, %s74
      %p83 = scmp.eq.s32.totalorder %s19, 1
      %p84 = por %p82, %p83
      %p85 = scmp.ne.s32.totalorder %s74, %s75
      %p86 = scmp.eq.s32.totalorder %s19, 0
      %p87 = por %p85, %p86
      %p88 = scmp.ne.s32.totalorder %s74, %s75
      %p89 = scmp.eq.s32.totalorder %s20, 1
      %p90 = por %p88, %p89
      %p92 = scmp.ne.s32.totalorder %s75, %s91
      %p93 = scmp.eq.s32.totalorder %s20, 0
      %p94 = por %p92, %p93
      %s96 = sadd.s32 %s95, 1
      %p99 = scmp.eq.s32.totalorder %s14, 1
      %p100 = scmp.ne.s32.totalorder %s95, %s97
      %p101 = scmp.eq.s32.totalorder %s14, 0
      %p102 = por %p100, %p101
      %p103 = scmp.ne.s32.totalorder %s95, %s97
      %p104 = scmp.eq.s32.totalorder %s19, 1
      %p105 = por %p103, %p104
      %p106 = scmp.ne.s32.totalorder %s97, %s98
      %p107 = scmp.eq.s32.totalorder %s19, 0
      %p108 = por %p106, %p107
      %p109 = scmp.ne.s32.totalorder %s97, %s98
      %p110 = scmp.eq.s32.totalorder %s20, 1
      %p111 = por %p109, %p110
      %p113 = scmp.ne.s32.totalorder %s98, %s112
      %p114 = scmp.eq.s32.totalorder %s20, 0
      %p115 = por %p113, %p114
      %s117 = sadd.s32 %s116, 1
      %p120 = scmp.eq.s32.totalorder %s14, 1
      %p121 = scmp.ne.s32.totalorder %s116, %s118
      %p122 = scmp.eq.s32.totalorder %s14, 0
      %p123 = por %p121, %p122
      %p124 = scmp.ne.s32.totalorder %s116, %s118
      %p125 = scmp.eq.s32.totalorder %s19, 1
      %p126 = por %p124, %p125
      %p127 = scmp.ne.s32.totalorder %s118, %s119
      %p128 = scmp.eq.s32.totalorder %s19, 0
      %p129 = por %p127, %p128
      %p130 = scmp.ne.s32.totalorder %s118, %s119
      %p131 = scmp.eq.s32.totalorder %s20, 1
      %p132 = por %p130, %p131
      %p134 = scmp.ne.s32.totalorder %s119, %s133
      %p135 = scmp.eq.s32.totalorder %s20, 0
      %p136 = por %p134, %p135
      %s138 = sadd.s32 %s137, 1
      %p141 = scmp.eq.s32.totalorder %s14, 1
      %p142 = scmp.ne.s32.totalorder %s137, %s139
      %p143 = scmp.eq.s32.totalorder %s14, 0
      %p144 = por %p142, %p143
      %p145 = scmp.ne.s32.totalorder %s137, %s139
      %p146 = scmp.eq.s32.totalorder %s19, 1
      %p147 = por %p145, %p146
      %p148 = scmp.ne.s32.totalorder %s139, %s140
      %p149 = scmp.eq.s32.totalorder %s19, 0
      %p150 = por %p148, %p149
      %p151 = scmp.ne.s32.totalorder %s139, %s140
      %p152 = scmp.eq.s32.totalorder %s20, 1
      %p153 = por %p151, %p152
      %p155 = scmp.ne.s32.totalorder %s140, %s154
      %p156 = scmp.eq.s32.totalorder %s20, 0
      %p157 = por %p155, %p156
      %s159 = sadd.s32 %s158, 1
      %p162 = scmp.eq.s32.totalorder %s14, 1
      %p163 = scmp.ne.s32.totalorder %s158, %s160
      %p164 = scmp.eq.s32.totalorder %s14, 0
      %p165 = por %p163, %p164
      %p166 = scmp.ne.s32.totalorder %s158, %s160
      %p167 = scmp.eq.s32.totalorder %s19, 1
      %p168 = por %p166, %p167
      %p169 = scmp.ne.s32.totalorder %s160, %s161
      %p170 = scmp.eq.s32.totalorder %s19, 0
      %p171 = por %p169, %p170
      %p172 = scmp.ne.s32.totalorder %s160, %s161
      %p173 = scmp.eq.s32.totalorder %s20, 1
      %p174 = por %p172, %p173
      %p176 = scmp.ne.s32.totalorder %s161, %s175
      %p177 = scmp.eq.s32.totalorder %s20, 0
      %p178 = por %p176, %p177
      %s179 = ssub.s32 %s14, %s21
      %p180 = scmp.eq.s32.totalorder %s179, 0
      %s182 = sadd.s32 %s181, 1
      %s183 = scalar_select %p180, %s181, %s182
      %p186 = pneg %p180
      %p187 = scmp.eq.s32.totalorder %s14, 1
      %p188 = por %p186, %p187
      %p189 = scmp.ne.s32.totalorder %s181, %s184
      %p190 = scmp.eq.s32.totalorder %s14, 0
      %p191 = por %p189, %p190
      %p192 = scmp.ne.s32.totalorder %s181, %s184
      %p193 = scmp.eq.s32.totalorder %s19, 1
      %p194 = por %p192, %p193
      %p195 = scmp.ne.s32.totalorder %s184, %s185
      %p196 = scmp.eq.s32.totalorder %s19, 0
      %p197 = por %p195, %p196
      %p198 = scmp.ne.s32.totalorder %s184, %s185
      %p199 = scmp.eq.s32.totalorder %s20, 1
      %p200 = por %p198, %p199
      %p202 = scmp.ne.s32.totalorder %s185, %s201
      %p203 = scmp.eq.s32.totalorder %s20, 0
      %p204 = por %p202, %p203
      %p205 = scmp.le.s32.totalorder 1, %s14
      %p206 = scmp.lt.s32.totalorder %s14, 3
      %p207 = pnand %p205, %p206
      %p208 = pneg %p207
      // Predicated region
      $region9: #{gin_forward_batched.1} parent=5 // pred_check
        _
      $region10: #{gin_forward_batched.1} parent=5 // pred_check_branch
        %210 = sbr.rel (%p207) target = $region12
      $region11: #{gin_forward_batched.1} parent=5 // pred_region
        %s211 = ssub.s32 %s14, 1
        // Predicated region
        $region13: #{gin_forward_batched.1} parent=11 // pred_check
          %p212 = pneg %p35
        $region14: #{gin_forward_batched.1} parent=11 // pred_check_branch
          %214 = sbr.rel (%p212) target = $region16
        $region15: #{gin_forward_batched.1} parent=11 // pred_region
          %s216 = ssub.s32 16, 16
          %217 = vsyncadd [#allocation3], %s216
          %s219 = sshll.u32 %s0, 4
          %s220 = int_to_ptr.vmem [resolvable:$true] %s219
          %222 = dma.vmem_to_smem %s220, 16, [#allocation2], [#allocation3]
        $region16: #{gin_forward_batched.1} parent=11 // pred_fallthru
          _
        // Predicated region
        $region17: #{gin_forward_batched.1} parent=11 // pred_check
          %p223 = pneg %p108
        $region18: #{gin_forward_batched.1} parent=11 // pred_check_branch
          %225 = sbr.rel (%p223) target = $region20
        $region19: #{gin_forward_batched.1} parent=11 // pred_region
          _
        $region20: #{gin_forward_batched.1} parent=11 // pred_fallthru
          _
        // Predicated region
        $region21: #{gin_forward_batched.1} parent=11 // pred_check
          %p226 = pneg %p129
        $region22: #{gin_forward_batched.1} parent=11 // pred_check_branch
          %228 = sbr.rel (%p226) target = $region24
        $region23: #{gin_forward_batched.1} parent=11 // pred_region
          _
        $region24: #{gin_forward_batched.1} parent=11 // pred_fallthru
          _
        // Predicated region
        $region25: #{gin_forward_batched.1} parent=11 // pred_check
          %p229 = pneg %p150
        $region26: #{gin_forward_batched.1} parent=11 // pred_check_branch
          %231 = sbr.rel (%p229) target = $region28
        $region27: #{gin_forward_batched.1} parent=11 // pred_region
          _
        $region28: #{gin_forward_batched.1} parent=11 // pred_fallthru
          _
        // Predicated region
        $region29: #{gin_forward_batched.1} parent=11 // pred_check
          %p232 = pneg %p171
        $region30: #{gin_forward_batched.1} parent=11 // pred_check_branch
          %234 = sbr.rel (%p232) target = $region32
        $region31: #{gin_forward_batched.1} parent=11 // pred_region
          _
        $region32: #{gin_forward_batched.1} parent=11 // pred_fallthru
          _
      $region12: #{gin_forward_batched.1} parent=5 // pred_fallthru
        _
      %p235 = scmp.lt.s32.totalorder %s14, 2
      // Predicated region
      $region33: #{gin_forward_batched.1} parent=5 // pred_check
        %p236 = pneg %p235
      $region34: #{gin_forward_batched.1} parent=5 // pred_check_branch
        %238 = sbr.rel (%p236) target = $region36
      $region35: #{gin_forward_batched.1} parent=5 // pred_region
        // Predicated region
        $region37: #{gin_forward_batched.1} parent=35 // pred_check
          %p239 = pneg %p55
        $region38: #{gin_forward_batched.1} parent=35 // pred_check_branch
          %241 = sbr.rel (%p239) target = $region40
        $region39: #{gin_forward_batched.1} parent=35 // pred_region
          %s242 = smul.u32 2, %s14
          %p243 = scmp.lt.s32.totalorder %s242, 3
          %s244 = scalar_select %p243, %s242, 3
          %s245 = smul.addr %s244, 16
          %s246 = smul.addr %s245, 4
          %s247 = scalar_lea.vmem %s1, %s246
          %s248 = smul.u32 2, %s14
        $region40: #{gin_forward_batched.1} parent=35 // pred_fallthru
          _
        // Predicated region
        $region41: #{gin_forward_batched.1} parent=35 // pred_check
          %p249 = pneg %p81
        $region42: #{gin_forward_batched.1} parent=35 // pred_check_branch
          %251 = sbr.rel (%p249) target = $region44
        $region43: #{gin_forward_batched.1} parent=35 // pred_region
          %s252 = smul.u32 2, %s14
          %p253 = scmp.lt.s32.totalorder %s252, 3
          %s254 = scalar_select %p253, %s252, 3
          %s255 = smul.addr %s254, 16
          %s256 = smul.addr %s255, 8
          %s257 = scalar_lea.vmem %s2, %s256
          %s258 = smul.u32 2, %s14
        $region44: #{gin_forward_batched.1} parent=35 // pred_fallthru
          _
      $region36: #{gin_forward_batched.1} parent=5 // pred_fallthru
        _
      %p259 = scmp.le.s32.totalorder 1, %s14
      %p260 = scmp.lt.s32.totalorder %s14, 3
      %p261 = pnand %p259, %p260
      %p262 = pneg %p261
      // Predicated region
      $region45: #{gin_forward_batched.1} parent=5 // pred_check
        _
      $region46: #{gin_forward_batched.1} parent=5 // pred_check_branch
        %264 = sbr.rel (%p261) target = $region48
      $region47: #{gin_forward_batched.1} parent=5 // pred_region
        %s265 = ssub.s32 %s14, 1
        // Predicated region
        $region49: #{gin_forward_batched.1} parent=47 // pred_check
          %p266 = pneg %p35
        $region50: #{gin_forward_batched.1} parent=47 // pred_check_branch
          %268 = sbr.rel (%p266) target = $region52
        $region51: #{gin_forward_batched.1} parent=47 // pred_region
          %269 = dma.done [#allocation3], 16
        $region52: #{gin_forward_batched.1} parent=47 // pred_fallthru
          _
        %270 = sfence
        %p271 = pneg %p35
        %p272 = pneg %p32
        %s273 = smul.u32 2, %s19
        %p274 = scmp.lt.s32.totalorder %s273, 3
        %s275 = scalar_select %p274, %s273, 3
        %s276 = smul.addr %s275, 16
        %s277 = smul.addr %s276, 4
        %s278 = scalar_lea.vmem %s1, %s277
        %p279 = pneg %p61
        %p280 = pneg %p58
        %s281 = smul.u32 2, %s19
        %p282 = scmp.lt.s32.totalorder %s281, 3
        %s283 = scalar_select %p282, %s281, 3
        %s284 = smul.addr %s283, 16
        %s285 = smul.addr %s284, 8
        %s286 = scalar_lea.vmem %s2, %s285
        %p287 = pneg %p87
        %p288 = pneg %p84
        %p289 = pneg %p108
        %p290 = pneg %p105
        %p291 = pneg %p129
        %p292 = pneg %p126
        %p293 = pneg %p150
        %p294 = pneg %p147
        %p295 = pneg %p171
        %p296 = pneg %p168
        %p297 = pneg %p197
        %p298 = pneg %p194
        %s299 = smul.u32 2, %s19
        %p300 = scmp.lt.s32.totalorder %s299, 3
        %s301 = scalar_select %p300, %s299, 3
        %s302 = smul.addr %s301, 16
        %s303 = smul.addr %s302, 8
        %s304 = scalar_lea.vmem %s7, %s303
        %s305 = smul.u32 2, %s19
        %p306 = scmp.lt.s32.totalorder %s305, 3
        %s307 = scalar_select %p306, %s305, 3
        %s308 = smul.addr %s307, 16
        %s309 = smul.addr %s308, 4
        %s310 = scalar_lea.vmem %s1, %s309
        %s311 = smul.u32 2, %s19
        %s312 = smul.u32 2, %s19
        %p313 = scmp.lt.s32.totalorder %s312, 3
        %s314 = scalar_select %p313, %s312, 3
        %s315 = smul.addr %s314, 16
        %s316 = smul.addr %s315, 8
        %s317 = scalar_lea.vmem %s2, %s316
        %s318 = smul.u32 2, %s19
        %s319 = smul.u32 2, %s19
        %p320 = scmp.lt.s32.totalorder %s319, 3
        %s321 = scalar_select %p320, %s319, 3
        %s322 = smul.addr %s321, 16
        %s323 = smul.addr %s322, 8
        %s324 = scalar_lea.vmem %s7, %s323
        %s325 = smul.u32 2, %s19
        %v327 = vld [vmem:[%s310] sm:$0xf]
        %v328 = vld [vmem:[%s310 + $0x4] sm:$0xf]
        %v329 = vld [vmem:[%s310 + $0x8] sm:$0xf]
        %v330 = vld [vmem:[%s310 + $0xc] sm:$0xf]
        %v331 = vld [vmem:[%s310 + $0x10] sm:$0xf]
        %v332 = vld [vmem:[%s310 + $0x14] sm:$0xf]
        %v333 = vld [vmem:[%s310 + $0x18] sm:$0xf]
        %v334 = vld [vmem:[%s310 + $0x1c] sm:$0xf]
        %v335 = vld [vmem:[%s310 + $0x20] sm:$0xf]
        %v336 = vld [vmem:[%s310 + $0x24] sm:$0xf]
        %v337 = vld [vmem:[%s310 + $0x28] sm:$0xf]
        %v338 = vld [vmem:[%s310 + $0x2c] sm:$0xf]
        %v339 = vld [vmem:[%s310 + $0x30] sm:$0xf]
        %v340 = vld [vmem:[%s310 + $0x34] sm:$0xf]
        %v341 = vld [vmem:[%s310 + $0x38] sm:$0xf]
        %v342 = vld [vmem:[%s310 + $0x3c] sm:$0xf]
        %v343 = vld [vmem:[%s310 + $0x40] sm:$0xf]
        %v344 = vld [vmem:[%s310 + $0x44] sm:$0xf]
        %v345 = vld [vmem:[%s310 + $0x48] sm:$0xf]
        %v346 = vld [vmem:[%s310 + $0x4c] sm:$0xf]
        %v347 = vld [vmem:[%s310 + $0x50] sm:$0xf]
        %v348 = vld [vmem:[%s310 + $0x54] sm:$0xf]
        %v349 = vld [vmem:[%s310 + $0x58] sm:$0xf]
        %v350 = vld [vmem:[%s310 + $0x5c] sm:$0xf]
        %v351 = vld [vmem:[%s310 + $0x60] sm:$0xf]
        %v352 = vld [vmem:[%s310 + $0x64] sm:$0xf]
        %v353 = vld [vmem:[%s310 + $0x68] sm:$0xf]
        %v354 = vld [vmem:[%s310 + $0x6c] sm:$0xf]
        %v355 = vld [vmem:[%s310 + $0x70] sm:$0xf]
        %v356 = vld [vmem:[%s310 + $0x74] sm:$0xf]
        %v357 = vld [vmem:[%s310 + $0x78] sm:$0xf]
        %v358 = vld [vmem:[%s310 + $0x7c] sm:$0xf]
        %v359 = vld [vmem:[%s317] sm:$0xff]
        %v360 = vld [vmem:[%s317 + $0x8] sm:$0xff]
        %v361 = vld [vmem:[%s317 + $0x10] sm:$0xff]
        %v362 = vld [vmem:[%s317 + $0x18] sm:$0xff]
        %v363 = vld [vmem:[%s317 + $0x20] sm:$0xff]
        %v364 = vld [vmem:[%s317 + $0x28] sm:$0xff]
        %v365 = vld [vmem:[%s317 + $0x30] sm:$0xff]
        %v366 = vld [vmem:[%s317 + $0x38] sm:$0xff]
        %v367 = vld [vmem:[%s317 + $0x40] sm:$0xff]
        %v368 = vld [vmem:[%s317 + $0x48] sm:$0xff]
        %v369 = vld [vmem:[%s317 + $0x50] sm:$0xff]
        %v370 = vld [vmem:[%s317 + $0x58] sm:$0xff]
        %v371 = vld [vmem:[%s317 + $0x60] sm:$0xff]
        %v372 = vld [vmem:[%s317 + $0x68] sm:$0xff]
        %v373 = vld [vmem:[%s317 + $0x70] sm:$0xff]
        %v374 = vld [vmem:[%s317 + $0x78] sm:$0xff]
        %v375 = vld [vmem:[%s317 + $0x80] sm:$0xff]
        %v376 = vld [vmem:[%s317 + $0x88] sm:$0xff]
        %v377 = vld [vmem:[%s317 + $0x90] sm:$0xff]
        %v378 = vld [vmem:[%s317 + $0x98] sm:$0xff]
        %v379 = vld [vmem:[%s317 + $0xa0] sm:$0xff]
        %v380 = vld [vmem:[%s317 + $0xa8] sm:$0xff]
        %v381 = vld [vmem:[%s317 + $0xb0] sm:$0xff]
        %v382 = vld [vmem:[%s317 + $0xb8] sm:$0xff]
        %v383 = vld [vmem:[%s317 + $0xc0] sm:$0xff]
        %v384 = vld [vmem:[%s317 + $0xc8] sm:$0xff]
        %v385 = vld [vmem:[%s317 + $0xd0] sm:$0xff]
        %v386 = vld [vmem:[%s317 + $0xd8] sm:$0xff]
        %v387 = vld [vmem:[%s317 + $0xe0] sm:$0xff]
        %v388 = vld [vmem:[%s317 + $0xe8] sm:$0xff]
        %v389 = vld [vmem:[%s317 + $0xf0] sm:$0xff]
        %v390 = vld [vmem:[%s317 + $0xf8] sm:$0xff]
        %v391 = vpack.c.bf16 %v360, %v359
        %v392 = vpack.c.bf16 %v362, %v361
        %v393 = vpack.c.bf16 %v364, %v363
        %v394 = vpack.c.bf16 %v366, %v365
        %v395 = vpack.c.bf16 %v368, %v367
        %v396 = vpack.c.bf16 %v370, %v369
        %v397 = vpack.c.bf16 %v372, %v371
        %v398 = vpack.c.bf16 %v374, %v373
        %v399 = vpack.c.bf16 %v376, %v375
        %v400 = vpack.c.bf16 %v378, %v377
        %v401 = vpack.c.bf16 %v380, %v379
        %v402 = vpack.c.bf16 %v382, %v381
        %v403 = vpack.c.bf16 %v384, %v383
        %v404 = vpack.c.bf16 %v386, %v385
        %v405 = vpack.c.bf16 %v388, %v387
        %v406 = vpack.c.bf16 %v390, %v389
        %v423 = vunpack.c.l.b16 %v327
        %v424 = vunpack.c.l.b16 %v328
        %v425 = vunpack.c.l.b16 %v329
        %v426 = vunpack.c.l.b16 %v330
        %v427 = vunpack.c.l.b16 %v331
        %v428 = vunpack.c.l.b16 %v332
        %v429 = vunpack.c.l.b16 %v333
        %v430 = vunpack.c.l.b16 %v334
        %v431 = vunpack.c.l.b16 %v335
        %v432 = vunpack.c.l.b16 %v336
        %v433 = vunpack.c.l.b16 %v337
        %v434 = vunpack.c.l.b16 %v338
        %v435 = vunpack.c.l.b16 %v339
        %v436 = vunpack.c.l.b16 %v340
        %v437 = vunpack.c.l.b16 %v341
        %v438 = vunpack.c.l.b16 %v342
        %v439 = vpack.c.b16 %v424, %v423
        %v440 = vpack.c.b16 %v426, %v425
        %v441 = vpack.c.b16 %v428, %v427
        %v442 = vpack.c.b16 %v430, %v429
        %v443 = vpack.c.b16 %v432, %v431
        %v444 = vpack.c.b16 %v434, %v433
        %v445 = vpack.c.b16 %v436, %v435
        %v446 = vpack.c.b16 %v438, %v437
        %455 = vmatprep.subr.bf16.mxu0 0
        %456 = vmatpush1.bf16.msra.mxu0 %v391
        %457 = vmatprep.subr.bf16.mxu0 0
        %458 = vmatpush1.bf16.msra.mxu0 %v392
        %459 = vmatprep.subr.bf16.mxu0 0
        %460 = vmatpush1.bf16.msra.mxu0 %v393
        %461 = vmatprep.subr.bf16.mxu0 0
        %462 = vmatpush1.bf16.msra.mxu0 %v394
        %463 = vmatprep.subr.bf16.mxu0 0
        %464 = vmatpush1.bf16.msra.mxu0 %v395
        %465 = vmatprep.subr.bf16.mxu0 0
        %466 = vmatpush1.bf16.msra.mxu0 %v396
        %467 = vmatprep.subr.bf16.mxu0 0
        %468 = vmatpush1.bf16.msra.mxu0 %v397
        %469 = vmatprep.subr.bf16.mxu0 0
        %470 = vmatpush1.bf16.msra.mxu0 %v398
        %471 = vmatprep.subr.bf16.mxu0 0
        %472 = vmatpush1.bf16.msra.mxu0 0
        %473 = vmatprep.subr.bf16.mxu0 0
        %474 = vmatpush1.bf16.msra.mxu0 0
        %475 = vmatprep.subr.bf16.mxu0 0
        %476 = vmatpush1.bf16.msra.mxu0 0
        %477 = vmatprep.subr.bf16.mxu0 0
        %478 = vmatpush1.bf16.msra.mxu0 0
        %479 = vmatprep.subr.bf16.mxu0 0
        %480 = vmatpush1.bf16.msra.mxu0 0
        %481 = vmatprep.subr.bf16.mxu0 0
        %482 = vmatpush1.bf16.msra.mxu0 0
        %483 = vmatprep.subr.bf16.mxu0 0
        %484 = vmatpush1.bf16.msra.mxu0 0
        %485 = vmatprep.subr.bf16.mxu0 0
        %486 = vmatpush1.bf16.msra.mxu0 0
        %487 = vmatprep.mubr.bf16.mxu0 0
        %488 = vmatmul.mubr.bf16.gmra.mrb[0].mxu0 %v439
        %v489 = vpop.f32.mrb[0].mxu0
        %v490 = vadd.f32 0.0, %v489
        %v491 = vpop.f32.mrb[0].mxu0
        %v492 = vpop.f32.mrb[0].mxu0
        %v493 = vadd.f32 0.0, %v492
        %v494 = vpop.f32.mrb[0].mxu0
        %495 = vmatprep.mubr.bf16.mxu0 0
        %496 = vmatmul.mubr.bf16.gmra.mrb[0].mxu0 %v440
        %v497 = vpop.f32.mrb[0].mxu0
        %v498 = vadd.f32 0.0, %v497
        %v499 = vpop.f32.mrb[0].mxu0
        %v500 = vpop.f32.mrb[0].mxu0
        %v501 = vadd.f32 0.0, %v500
        %v502 = vpop.f32.mrb[0].mxu0
        %503 = vmatprep.mubr.bf16.mxu0 0
        %504 = vmatmul.mubr.bf16.gmra.mrb[0].mxu0 %v441
        %v505 = vpop.f32.mrb[0].mxu0
        %v506 = vadd.f32 0.0, %v505
        %v507 = vpop.f32.mrb[0].mxu0
        %v508 = vpop.f32.mrb[0].mxu0
        %v509 = vadd.f32 0.0, %v508
        %v510 = vpop.f32.mrb[0].mxu0
        %511 = vmatprep.mubr.bf16.mxu0 0
        %512 = vmatmul.mubr.bf16.gmra.mrb[0].mxu0 %v442
        %v513 = vpop.f32.mrb[0].mxu0
        %v514 = vadd.f32 0.0, %v513
        %v515 = vpop.f32.mrb[0].mxu0
        %v516 = vpop.f32.mrb[0].mxu0
        %v517 = vadd.f32 0.0, %v516
        %v518 = vpop.f32.mrb[0].mxu0
        %519 = vmatprep.mubr.bf16.mxu0 0
        %520 = vmatmul.mubr.bf16.gmra.mrb[0].mxu0 %v443
        %v521 = vpop.f32.mrb[0].mxu0
        %v522 = vadd.f32 0.0, %v521
        %v523 = vpop.f32.mrb[0].mxu0
        %v524 = vpop.f32.mrb[0].mxu0
        %v525 = vadd.f32 0.0, %v524
        %v526 = vpop.f32.mrb[0].mxu0
        %527 = vmatprep.mubr.bf16.mxu0 0
        %528 = vmatmul.mubr.bf16.gmra.mrb[0].mxu0 %v444
        %v529 = vpop.f32.mrb[0].mxu0
        %v530 = vadd.f32 0.0, %v529
        %v531 = vpop.f32.mrb[0].mxu0
        %v532 = vpop.f32.mrb[0].mxu0
        %v533 = vadd.f32 0.0, %v532
        %v534 = vpop.f32.mrb[0].mxu0
        %535 = vmatprep.mubr.bf16.mxu0 0
        %536 = vmatmul.mubr.bf16.gmra.mrb[0].mxu0 %v445
        %v537 = vpop.f32.mrb[0].mxu0
        %v538 = vadd.f32 0.0, %v537
        %v539 = vpop.f32.mrb[0].mxu0
        %v540 = vpop.f32.mrb[0].mxu0
        %v541 = vadd.f32 0.0, %v540
        %v542 = vpop.f32.mrb[0].mxu0
        %543 = vmatprep.mubr.bf16.mxu0 0
        %544 = vmatmul.mubr.bf16.gmra.mrb[0].mxu0 %v446
        %v545 = vpop.f32.mrb[0].mxu0
        %v546 = vadd.f32 0.0, %v545
        %v547 = vpop.f32.mrb[0].mxu0
        %v548 = vpop.f32.mrb[0].mxu0
        %v549 = vadd.f32 0.0, %v548
        %v550 = vpop.f32.mrb[0].mxu0
        %551 = vdwg.mxu0
        %v568 = vunpack.c.l.b16 %v343
        %v569 = vunpack.c.l.b16 %v344
        %v570 = vunpack.c.l.b16 %v345
        %v571 = vunpack.c.l.b16 %v346
        %v572 = vunpack.c.l.b16 %v347
        %v573 = vunpack.c.l.b16 %v348
        %v574 = vunpack.c.l.b16 %v349
        %v575 = vunpack.c.l.b16 %v350
        %v576 = vunpack.c.l.b16 %v351
        %v577 = vunpack.c.l.b16 %v352
        %v578 = vunpack.c.l.b16 %v353
        %v579 = vunpack.c.l.b16 %v354
        %v580 = vunpack.c.l.b16 %v355
        %v581 = vunpack.c.l.b16 %v356
        %v582 = vunpack.c.l.b16 %v357
        %v583 = vunpack.c.l.b16 %v358
        %v584 = vpack.c.b16 %v569, %v568
        %v585 = vpack.c.b16 %v571, %v570
        %v586 = vpack.c.b16 %v573, %v572
        %v587 = vpack.c.b16 %v575, %v574
        %v588 = vpack.c.b16 %v577, %v576
        %v589 = vpack.c.b16 %v579, %v578
        %v590 = vpack.c.b16 %v581, %v580
        %v591 = vpack.c.b16 %v583, %v582
        %600 = vmatprep.subr.bf16.mxu0 0
        %601 = vmatpush1.bf16.msra.mxu0 %v399
        %602 = vmatprep.subr.bf16.mxu0 0
        %603 = vmatpush1.bf16.msra.mxu0 %v400
        %604 = vmatprep.subr.bf16.mxu0 0
        %605 = vmatpush1.bf16.msra.mxu0 %v401
        %606 = vmatprep.subr.bf16.mxu0 0
        %607 = vmatpush1.bf16.msra.mxu0 %v402
        %608 = vmatprep.subr.bf16.mxu0 0
        %609 = vmatpush1.bf16.msra.mxu0 %v403
        %610 = vmatprep.subr.bf16.mxu0 0
        %611 = vmatpush1.bf16.msra.mxu0 %v404
        %612 = vmatprep.subr.bf16.mxu0 0
        %613 = vmatpush1.bf16.msra.mxu0 %v405
        %614 = vmatprep.subr.bf16.mxu0 0
        %615 = vmatpush1.bf16.msra.mxu0 %v406
        %616 = vmatprep.subr.bf16.mxu0 0
        %617 = vmatpush1.bf16.msra.mxu0 0
        %618 = vmatprep.subr.bf16.mxu0 0
        %619 = vmatpush1.bf16.msra.mxu0 0
        %620 = vmatprep.subr.bf16.mxu0 0
        %621 = vmatpush1.bf16.msra.mxu0 0
        %622 = vmatprep.subr.bf16.mxu0 0
        %623 = vmatpush1.bf16.msra.mxu0 0
        %624 = vmatprep.subr.bf16.mxu0 0
        %625 = vmatpush1.bf16.msra.mxu0 0
        %626 = vmatprep.subr.bf16.mxu0 0
        %627 = vmatpush1.bf16.msra.mxu0 0
        %628 = vmatprep.subr.bf16.mxu0 0
        %629 = vmatpush1.bf16.msra.mxu0 0
        %630 = vmatprep.subr.bf16.mxu0 0
        %631 = vmatpush1.bf16.msra.mxu0 0
        %632 = vmatprep.mubr.bf16.mxu0 0
        %633 = vmatmul.mubr.bf16.gmra.mrb[0].mxu0 %v584
        %v634 = vpop.f32.mrb[0].mxu0
        %v635 = vadd.f32 0.0, %v634
        %v636 = vpop.f32.mrb[0].mxu0
        %v637 = vpop.f32.mrb[0].mxu0
        %v638 = vadd.f32 0.0, %v637
        %v639 = vpop.f32.mrb[0].mxu0
        %640 = vmatprep.mubr.bf16.mxu0 0
        %641 = vmatmul.mubr.bf16.gmra.mrb[0].mxu0 %v585
        %v642 = vpop.f32.mrb[0].mxu0
        %v643 = vadd.f32 0.0, %v642
        %v644 = vpop.f32.mrb[0].mxu0
        %v645 = vpop.f32.mrb[0].mxu0
        %v646 = vadd.f32 0.0, %v645
        %v647 = vpop.f32.mrb[0].mxu0
        %648 = vmatprep.mubr.bf16.mxu0 0
        %649 = vmatmul.mubr.bf16.gmra.mrb[0].mxu0 %v586
        %v650 = vpop.f32.mrb[0].mxu0
        %v651 = vadd.f32 0.0, %v650
        %v652 = vpop.f32.mrb[0].mxu0
        %v653 = vpop.f32.mrb[0].mxu0
        %v654 = vadd.f32 0.0, %v653
        %v655 = vpop.f32.mrb[0].mxu0
        %656 = vmatprep.mubr.bf16.mxu0 0
        %657 = vmatmul.mubr.bf16.gmra.mrb[0].mxu0 %v587
        %v658 = vpop.f32.mrb[0].mxu0
        %v659 = vadd.f32 0.0, %v658
        %v660 = vpop.f32.mrb[0].mxu0
        %v661 = vpop.f32.mrb[0].mxu0
        %v662 = vadd.f32 0.0, %v661
        %v663 = vpop.f32.mrb[0].mxu0
        %664 = vmatprep.mubr.bf16.mxu0 0
        %665 = vmatmul.mubr.bf16.gmra.mrb[0].mxu0 %v588
        %v666 = vpop.f32.mrb[0].mxu0
        %v667 = vadd.f32 0.0, %v666
        %v668 = vpop.f32.mrb[0].mxu0
        %v669 = vpop.f32.mrb[0].mxu0
        %v670 = vadd.f32 0.0, %v669
        %v671 = vpop.f32.mrb[0].mxu0
        %672 = vmatprep.mubr.bf16.mxu0 0
        %673 = vmatmul.mubr.bf16.gmra.mrb[0].mxu0 %v589
        %v674 = vpop.f32.mrb[0].mxu0
        %v675 = vadd.f32 0.0, %v674
        %v676 = vpop.f32.mrb[0].mxu0
        %v677 = vpop.f32.mrb[0].mxu0
        %v678 = vadd.f32 0.0, %v677
        %v679 = vpop.f32.mrb[0].mxu0
        %680 = vmatprep.mubr.bf16.mxu0 0
        %681 = vmatmul.mubr.bf16.gmra.mrb[0].mxu0 %v590
        %v682 = vpop.f32.mrb[0].mxu0
        %v683 = vadd.f32 0.0, %v682
        %v684 = vpop.f32.mrb[0].mxu0
        %v685 = vpop.f32.mrb[0].mxu0
        %v686 = vadd.f32 0.0, %v685
        %v687 = vpop.f32.mrb[0].mxu0
        %688 = vmatprep.mubr.bf16.mxu0 0
        %689 = vmatmul.mubr.bf16.gmra.mrb[0].mxu0 %v591
        %v690 = vpop.f32.mrb[0].mxu0
        %v691 = vadd.f32 0.0, %v690
        %v692 = vpop.f32.mrb[0].mxu0
        %v693 = vpop.f32.mrb[0].mxu0
        %v694 = vadd.f32 0.0, %v693
        %v695 = vpop.f32.mrb[0].mxu0
        %696 = vdwg.mxu0
        %s697 = sld [smem:[#allocation2]]
        %s698 = sadd.f32 %s697, 1.0
        %v699 = vstv %s698
        %v700 = vmul.f32 %v699, %v359
        %v701 = vmul.f32 %v699, %v360
        %v702 = vmul.f32 %v699, %v361
        %v703 = vmul.f32 %v699, %v362
        %v704 = vmul.f32 %v699, %v363
        %v705 = vmul.f32 %v699, %v364
        %v706 = vmul.f32 %v699, %v365
        %v707 = vmul.f32 %v699, %v366
        %v708 = vmul.f32 %v699, %v367
        %v709 = vmul.f32 %v699, %v368
        %v710 = vmul.f32 %v699, %v369
        %v711 = vmul.f32 %v699, %v370
        %v712 = vmul.f32 %v699, %v371
        %v713 = vmul.f32 %v699, %v372
        %v714 = vmul.f32 %v699, %v373
        %v715 = vmul.f32 %v699, %v374
        %v716 = vmul.f32 %v699, %v375
        %v717 = vmul.f32 %v699, %v376
        %v718 = vmul.f32 %v699, %v377
        %v719 = vmul.f32 %v699, %v378
        %v720 = vmul.f32 %v699, %v379
        %v721 = vmul.f32 %v699, %v380
        %v722 = vmul.f32 %v699, %v381
        %v723 = vmul.f32 %v699, %v382
        %v724 = vmul.f32 %v699, %v383
        %v725 = vmul.f32 %v699, %v384
        %v726 = vmul.f32 %v699, %v385
        %v727 = vmul.f32 %v699, %v386
        %v728 = vmul.f32 %v699, %v387
        %v729 = vmul.f32 %v699, %v388
        %v730 = vmul.f32 %v699, %v389
        %v731 = vmul.f32 %v699, %v390
        %v732 = vadd.f32 %v700, %v490
        %v733 = vadd.f32 %v701, %v493
        %v734 = vadd.f32 %v702, %v498
        %v735 = vadd.f32 %v703, %v501
        %v736 = vadd.f32 %v704, %v506
        %v737 = vadd.f32 %v705, %v509
        %v738 = vadd.f32 %v706, %v514
        %v739 = vadd.f32 %v707, %v517
        %v740 = vadd.f32 %v708, %v522
        %v741 = vadd.f32 %v709, %v525
        %v742 = vadd.f32 %v710, %v530
        %v743 = vadd.f32 %v711, %v533
        %v744 = vadd.f32 %v712, %v538
        %v745 = vadd.f32 %v713, %v541
        %v746 = vadd.f32 %v714, %v546
        %v747 = vadd.f32 %v715, %v549
        %v748 = vadd.f32 %v716, %v635
        %v749 = vadd.f32 %v717, %v638
        %v750 = vadd.f32 %v718, %v643
        %v751 = vadd.f32 %v719, %v646
        %v752 = vadd.f32 %v720, %v651
        %v753 = vadd.f32 %v721, %v654
        %v754 = vadd.f32 %v722, %v659
        %v755 = vadd.f32 %v723, %v662
        %v756 = vadd.f32 %v724, %v667
        %v757 = vadd.f32 %v725, %v670
        %v758 = vadd.f32 %v726, %v675
        %v759 = vadd.f32 %v727, %v678
        %v760 = vadd.f32 %v728, %v683
        %v761 = vadd.f32 %v729, %v686
        %v762 = vadd.f32 %v730, %v691
        %v763 = vadd.f32 %v731, %v694
        %v764 = vpack.c.bf16 %v733, %v732
        %v765 = vpack.c.bf16 %v735, %v734
        %v766 = vpack.c.bf16 %v737, %v736
        %v767 = vpack.c.bf16 %v739, %v738
        %v768 = vpack.c.bf16 %v741, %v740
        %v769 = vpack.c.bf16 %v743, %v742
        %v770 = vpack.c.bf16 %v745, %v744
        %v771 = vpack.c.bf16 %v747, %v746
        %v772 = vpack.c.bf16 %v749, %v748
        %v773 = vpack.c.bf16 %v751, %v750
        %v774 = vpack.c.bf16 %v753, %v752
        %v775 = vpack.c.bf16 %v755, %v754
        %v776 = vpack.c.bf16 %v757, %v756
        %v777 = vpack.c.bf16 %v759, %v758
        %v778 = vpack.c.bf16 %v761, %v760
        %v779 = vpack.c.bf16 %v763, %v762
        %v780 = vld [vmem:[%s3] sm:$0xf]
        %v781 = vld [vmem:[%s3 + $0x4] sm:$0xf]
        %v782 = vld [vmem:[%s3 + $0x8] sm:$0xf]
        %v783 = vld [vmem:[%s3 + $0xc] sm:$0xf]
        %v784 = vld [vmem:[%s3 + $0x10] sm:$0xf]
        %v785 = vld [vmem:[%s3 + $0x14] sm:$0xf]
        %v786 = vld [vmem:[%s3 + $0x18] sm:$0xf]
        %v787 = vld [vmem:[%s3 + $0x1c] sm:$0xf]
        %v788 = vld [vmem:[%s3 + $0x20] sm:$0xf]
        %v789 = vld [vmem:[%s3 + $0x24] sm:$0xf]
        %v790 = vld [vmem:[%s3 + $0x28] sm:$0xf]
        %v791 = vld [vmem:[%s3 + $0x2c] sm:$0xf]
        %v792 = vld [vmem:[%s3 + $0x30] sm:$0xf]
        %v793 = vld [vmem:[%s3 + $0x34] sm:$0xf]
        %v794 = vld [vmem:[%s3 + $0x38] sm:$0xf]
        %v795 = vld [vmem:[%s3 + $0x3c] sm:$0xf]
        %v812 = vunpack.c.l.b16 %v780
        %v813 = vunpack.c.l.b16 %v781
        %v814 = vunpack.c.l.b16 %v782
        %v815 = vunpack.c.l.b16 %v783
        %v816 = vunpack.c.l.b16 %v784
        %v817 = vunpack.c.l.b16 %v785
        %v818 = vunpack.c.l.b16 %v786
        %v819 = vunpack.c.l.b16 %v787
        %v820 = vunpack.c.l.b16 %v788
        %v821 = vunpack.c.l.b16 %v789
        %v822 = vunpack.c.l.b16 %v790
        %v823 = vunpack.c.l.b16 %v791
        %v824 = vunpack.c.l.b16 %v792
        %v825 = vunpack.c.l.b16 %v793
        %v826 = vunpack.c.l.b16 %v794
        %v827 = vunpack.c.l.b16 %v795
        %v828 = vpack.c.b16 %v813, %v812
        %v829 = vpack.c.b16 %v815, %v814
        %v830 = vpack.c.b16 %v817, %v816
        %v831 = vpack.c.b16 %v819, %v818
        %v832 = vpack.c.b16 %v821, %v820
        %v833 = vpack.c.b16 %v823, %v822
        %v834 = vpack.c.b16 %v825, %v824
        %v835 = vpack.c.b16 %v827, %v826
        %844 = vmatprep.subr.bf16.mxu0 0
        %845 = vmatpush1.bf16.msra.mxu0 %v828
        %846 = vmatprep.subr.bf16.mxu0 0
        %847 = vmatpush1.bf16.msra.mxu0 %v829
        %848 = vmatprep.subr.bf16.mxu0 0
        %849 = vmatpush1.bf16.msra.mxu0 %v830
        %850 = vmatprep.subr.bf16.mxu0 0
        %851 = vmatpush1.bf16.msra.mxu0 %v831
        %852 = vmatprep.subr.bf16.mxu0 0
        %853 = vmatpush1.bf16.msra.mxu0 %v832
        %854 = vmatprep.subr.bf16.mxu0 0
        %855 = vmatpush1.bf16.msra.mxu0 %v833
        %856 = vmatprep.subr.bf16.mxu0 0
        %857 = vmatpush1.bf16.msra.mxu0 %v834
        %858 = vmatprep.subr.bf16.mxu0 0
        %859 = vmatpush1.bf16.msra.mxu0 %v835
        %860 = vmatprep.subr.bf16.mxu0 0
        %861 = vmatpush1.bf16.msra.mxu0 0
        %862 = vmatprep.subr.bf16.mxu0 0
        %863 = vmatpush1.bf16.msra.mxu0 0
        %864 = vmatprep.subr.bf16.mxu0 0
        %865 = vmatpush1.bf16.msra.mxu0 0
        %866 = vmatprep.subr.bf16.mxu0 0
        %867 = vmatpush1.bf16.msra.mxu0 0
        %868 = vmatprep.subr.bf16.mxu0 0
        %869 = vmatpush1.bf16.msra.mxu0 0
        %870 = vmatprep.subr.bf16.mxu0 0
        %871 = vmatpush1.bf16.msra.mxu0 0
        %872 = vmatprep.subr.bf16.mxu0 0
        %873 = vmatpush1.bf16.msra.mxu0 0
        %874 = vmatprep.subr.bf16.mxu0 0
        %875 = vmatpush1.bf16.msra.mxu0 0
        %876 = vmatprep.mubr.bf16.mxu0 0
        %877 = vmatmul.mubr.bf16.gmra.mrb[0].mxu0 %v764
        %v878 = vpop.f32.mrb[0].mxu0
        %v879 = vadd.f32 0.0, %v878
        %v880 = vpop.f32.mrb[0].mxu0
        %v881 = vpop.f32.mrb[0].mxu0
        %v882 = vadd.f32 0.0, %v881
        %v883 = vpop.f32.mrb[0].mxu0
        %884 = vmatprep.mubr.bf16.mxu0 0
        %885 = vmatmul.mubr.bf16.gmra.mrb[0].mxu0 %v765
        %v886 = vpop.f32.mrb[0].mxu0
        %v887 = vadd.f32 0.0, %v886
        %v888 = vpop.f32.mrb[0].mxu0
        %v889 = vpop.f32.mrb[0].mxu0
        %v890 = vadd.f32 0.0, %v889
        %v891 = vpop.f32.mrb[0].mxu0
        %892 = vmatprep.mubr.bf16.mxu0 0
        %893 = vmatmul.mubr.bf16.gmra.mrb[0].mxu0 %v766
        %v894 = vpop.f32.mrb[0].mxu0
        %v895 = vadd.f32 0.0, %v894
        %v896 = vpop.f32.mrb[0].mxu0
        %v897 = vpop.f32.mrb[0].mxu0
        %v898 = vadd.f32 0.0, %v897
        %v899 = vpop.f32.mrb[0].mxu0
        %900 = vmatprep.mubr.bf16.mxu0 0
        %901 = vmatmul.mubr.bf16.gmra.mrb[0].mxu0 %v767
        %v902 = vpop.f32.mrb[0].mxu0
        %v903 = vadd.f32 0.0, %v902
        %v904 = vpop.f32.mrb[0].mxu0
        %v905 = vpop.f32.mrb[0].mxu0
        %v906 = vadd.f32 0.0, %v905
        %v907 = vpop.f32.mrb[0].mxu0
        %908 = vmatprep.mubr.bf16.mxu0 0
        %909 = vmatmul.mubr.bf16.gmra.mrb[0].mxu0 %v768
        %v910 = vpop.f32.mrb[0].mxu0
        %v911 = vadd.f32 0.0, %v910
        %v912 = vpop.f32.mrb[0].mxu0
        %v913 = vpop.f32.mrb[0].mxu0
        %v914 = vadd.f32 0.0, %v913
        %v915 = vpop.f32.mrb[0].mxu0
        %916 = vmatprep.mubr.bf16.mxu0 0
        %917 = vmatmul.mubr.bf16.gmra.mrb[0].mxu0 %v769
        %v918 = vpop.f32.mrb[0].mxu0
        %v919 = vadd.f32 0.0, %v918
        %v920 = vpop.f32.mrb[0].mxu0
        %v921 = vpop.f32.mrb[0].mxu0
        %v922 = vadd.f32 0.0, %v921
        %v923 = vpop.f32.mrb[0].mxu0
        %924 = vmatprep.mubr.bf16.mxu0 0
        %925 = vmatmul.mubr.bf16.gmra.mrb[0].mxu0 %v770
        %v926 = vpop.f32.mrb[0].mxu0
        %v927 = vadd.f32 0.0, %v926
        %v928 = vpop.f32.mrb[0].mxu0
        %v929 = vpop.f32.mrb[0].mxu0
        %v930 = vadd.f32 0.0, %v929
        %v931 = vpop.f32.mrb[0].mxu0
        %932 = vmatprep.mubr.bf16.mxu0 0
        %933 = vmatmul.mubr.bf16.gmra.mrb[0].mxu0 %v771
        %v934 = vpop.f32.mrb[0].mxu0
        %v935 = vadd.f32 0.0, %v934
        %v936 = vpop.f32.mrb[0].mxu0
        %v937 = vpop.f32.mrb[0].mxu0
        %v938 = vadd.f32 0.0, %v937
        %v939 = vpop.f32.mrb[0].mxu0
        %940 = vmatprep.mubr.bf16.mxu0 0
        %941 = vmatmul.mubr.bf16.gmra.mrb[0].mxu0 %v772
        %v942 = vpop.f32.mrb[0].mxu0
        %v943 = vadd.f32 0.0, %v942
        %v944 = vpop.f32.mrb[0].mxu0
        %v945 = vpop.f32.mrb[0].mxu0
        %v946 = vadd.f32 0.0, %v945
        %v947 = vpop.f32.mrb[0].mxu0
        %948 = vmatprep.mubr.bf16.mxu0 0
        %949 = vmatmul.mubr.bf16.gmra.mrb[0].mxu0 %v773
        %v950 = vpop.f32.mrb[0].mxu0
        %v951 = vadd.f32 0.0, %v950
        %v952 = vpop.f32.mrb[0].mxu0
        %v953 = vpop.f32.mrb[0].mxu0
        %v954 = vadd.f32 0.0, %v953
        %v955 = vpop.f32.mrb[0].mxu0
        %956 = vmatprep.mubr.bf16.mxu0 0
        %957 = vmatmul.mubr.bf16.gmra.mrb[0].mxu0 %v774
        %v958 = vpop.f32.mrb[0].mxu0
        %v959 = vadd.f32 0.0, %v958
        %v960 = vpop.f32.mrb[0].mxu0
        %v961 = vpop.f32.mrb[0].mxu0
        %v962 = vadd.f32 0.0, %v961
        %v963 = vpop.f32.mrb[0].mxu0
        %964 = vmatprep.mubr.bf16.mxu0 0
        %965 = vmatmul.mubr.bf16.gmra.mrb[0].mxu0 %v775
        %v966 = vpop.f32.mrb[0].mxu0
        %v967 = vadd.f32 0.0, %v966
        %v968 = vpop.f32.mrb[0].mxu0
        %v969 = vpop.f32.mrb[0].mxu0
        %v970 = vadd.f32 0.0, %v969
        %v971 = vpop.f32.mrb[0].mxu0
        %972 = vmatprep.mubr.bf16.mxu0 0
        %973 = vmatmul.mubr.bf16.gmra.mrb[0].mxu0 %v776
        %v974 = vpop.f32.mrb[0].mxu0
        %v975 = vadd.f32 0.0, %v974
        %v976 = vpop.f32.mrb[0].mxu0
        %v977 = vpop.f32.mrb[0].mxu0
        %v978 = vadd.f32 0.0, %v977
        %v979 = vpop.f32.mrb[0].mxu0
        %980 = vmatprep.mubr.bf16.mxu0 0
        %981 = vmatmul.mubr.bf16.gmra.mrb[0].mxu0 %v777
        %v982 = vpop.f32.mrb[0].mxu0
        %v983 = vadd.f32 0.0, %v982
        %v984 = vpop.f32.mrb[0].mxu0
        %v985 = vpop.f32.mrb[0].mxu0
        %v986 = vadd.f32 0.0, %v985
        %v987 = vpop.f32.mrb[0].mxu0
        %988 = vmatprep.mubr.bf16.mxu0 0
        %989 = vmatmul.mubr.bf16.gmra.mrb[0].mxu0 %v778
        %v990 = vpop.f32.mrb[0].mxu0
        %v991 = vadd.f32 0.0, %v990
        %v992 = vpop.f32.mrb[0].mxu0
        %v993 = vpop.f32.mrb[0].mxu0
        %v994 = vadd.f32 0.0, %v993
        %v995 = vpop.f32.mrb[0].mxu0
        %996 = vmatprep.mubr.bf16.mxu0 0
        %997 = vmatmul.mubr.bf16.gmra.mrb[0].mxu0 %v779
        %v998 = vpop.f32.mrb[0].mxu0
        %v999 = vadd.f32 0.0, %v998
        %v1000 = vpop.f32.mrb[0].mxu0
        %v1001 = vpop.f32.mrb[0].mxu0
        %v1002 = vadd.f32 0.0, %v1001
        %v1003 = vpop.f32.mrb[0].mxu0
        %1004 = vdwg.mxu0
        %v1005 = vmax.f32 %v879, 0.0
        %v1006 = vmax.f32 %v882, 0.0
        %v1007 = vmax.f32 %v887, 0.0
        %v1008 = vmax.f32 %v890, 0.0
        %v1009 = vmax.f32 %v895, 0.0
        %v1010 = vmax.f32 %v898, 0.0
        %v1011 = vmax.f32 %v903, 0.0
        %v1012 = vmax.f32 %v906, 0.0
        %v1013 = vmax.f32 %v911, 0.0
        %v1014 = vmax.f32 %v914, 0.0
        %v1015 = vmax.f32 %v919, 0.0
        %v1016 = vmax.f32 %v922, 0.0
        %v1017 = vmax.f32 %v927, 0.0
        %v1018 = vmax.f32 %v930, 0.0
        %v1019 = vmax.f32 %v935, 0.0
        %v1020 = vmax.f32 %v938, 0.0
        %v1021 = vmax.f32 %v943, 0.0
        %v1022 = vmax.f32 %v946, 0.0
        %v1023 = vmax.f32 %v951, 0.0
        %v1024 = vmax.f32 %v954, 0.0
        %v1025 = vmax.f32 %v959, 0.0
        %v1026 = vmax.f32 %v962, 0.0
        %v1027 = vmax.f32 %v967, 0.0
        %v1028 = vmax.f32 %v970, 0.0
        %v1029 = vmax.f32 %v975, 0.0
        %v1030 = vmax.f32 %v978, 0.0
        %v1031 = vmax.f32 %v983, 0.0
        %v1032 = vmax.f32 %v986, 0.0
        %v1033 = vmax.f32 %v991, 0.0
        %v1034 = vmax.f32 %v994, 0.0
        %v1035 = vmax.f32 %v999, 0.0
        %v1036 = vmax.f32 %v1002, 0.0
        %v1037 = vpack.c.bf16 %v1006, %v1005
        %v1038 = vpack.c.bf16 %v1008, %v1007
        %v1039 = vpack.c.bf16 %v1010, %v1009
        %v1040 = vpack.c.bf16 %v1012, %v1011
        %v1041 = vpack.c.bf16 %v1014, %v1013
        %v1042 = vpack.c.bf16 %v1016, %v1015
        %v1043 = vpack.c.bf16 %v1018, %v1017
        %v1044 = vpack.c.bf16 %v1020, %v1019
        %v1045 = vpack.c.bf16 %v1022, %v1021
        %v1046 = vpack.c.bf16 %v1024, %v1023
        %v1047 = vpack.c.bf16 %v1026, %v1025
        %v1048 = vpack.c.bf16 %v1028, %v1027
        %v1049 = vpack.c.bf16 %v1030, %v1029
        %v1050 = vpack.c.bf16 %v1032, %v1031
        %v1051 = vpack.c.bf16 %v1034, %v1033
        %v1052 = vpack.c.bf16 %v1036, %v1035
        %v1053 = vld [vmem:[%s4] sm:$0xf]
        %v1054 = vld [vmem:[%s4 + $0x4] sm:$0xf]
        %v1055 = vld [vmem:[%s4 + $0x8] sm:$0xf]
        %v1056 = vld [vmem:[%s4 + $0xc] sm:$0xf]
        %v1057 = vld [vmem:[%s4 + $0x10] sm:$0xf]
        %v1058 = vld [vmem:[%s4 + $0x14] sm:$0xf]
        %v1059 = vld [vmem:[%s4 + $0x18] sm:$0xf]
        %v1060 = vld [vmem:[%s4 + $0x1c] sm:$0xf]
        %v1061 = vld [vmem:[%s4 + $0x20] sm:$0xf]
        %v1062 = vld [vmem:[%s4 + $0x24] sm:$0xf]
        %v1063 = vld [vmem:[%s4 + $0x28] sm:$0xf]
        %v1064 = vld [vmem:[%s4 + $0x2c] sm:$0xf]
        %v1065 = vld [vmem:[%s4 + $0x30] sm:$0xf]
        %v1066 = vld [vmem:[%s4 + $0x34] sm:$0xf]
        %v1067 = vld [vmem:[%s4 + $0x38] sm:$0xf]
        %v1068 = vld [vmem:[%s4 + $0x3c] sm:$0xf]
        %v1085 = vunpack.c.l.b16 %v1053
        %v1086 = vunpack.c.l.b16 %v1054
        %v1087 = vunpack.c.l.b16 %v1055
        %v1088 = vunpack.c.l.b16 %v1056
        %v1089 = vunpack.c.l.b16 %v1057
        %v1090 = vunpack.c.l.b16 %v1058
        %v1091 = vunpack.c.l.b16 %v1059
        %v1092 = vunpack.c.l.b16 %v1060
        %v1093 = vunpack.c.l.b16 %v1061
        %v1094 = vunpack.c.l.b16 %v1062
        %v1095 = vunpack.c.l.b16 %v1063
        %v1096 = vunpack.c.l.b16 %v1064
        %v1097 = vunpack.c.l.b16 %v1065
        %v1098 = vunpack.c.l.b16 %v1066
        %v1099 = vunpack.c.l.b16 %v1067
        %v1100 = vunpack.c.l.b16 %v1068
        %v1101 = vpack.c.b16 %v1086, %v1085
        %v1102 = vpack.c.b16 %v1088, %v1087
        %v1103 = vpack.c.b16 %v1090, %v1089
        %v1104 = vpack.c.b16 %v1092, %v1091
        %v1105 = vpack.c.b16 %v1094, %v1093
        %v1106 = vpack.c.b16 %v1096, %v1095
        %v1107 = vpack.c.b16 %v1098, %v1097
        %v1108 = vpack.c.b16 %v1100, %v1099
        %1117 = vmatprep.subr.bf16.mxu0 0
        %1118 = vmatpush1.bf16.msra.mxu0 %v1101
        %1119 = vmatprep.subr.bf16.mxu0 0
        %1120 = vmatpush1.bf16.msra.mxu0 %v1102
        %1121 = vmatprep.subr.bf16.mxu0 0
        %1122 = vmatpush1.bf16.msra.mxu0 %v1103
        %1123 = vmatprep.subr.bf16.mxu0 0
        %1124 = vmatpush1.bf16.msra.mxu0 %v1104
        %1125 = vmatprep.subr.bf16.mxu0 0
        %1126 = vmatpush1.bf16.msra.mxu0 %v1105
        %1127 = vmatprep.subr.bf16.mxu0 0
        %1128 = vmatpush1.bf16.msra.mxu0 %v1106
        %1129 = vmatprep.subr.bf16.mxu0 0
        %1130 = vmatpush1.bf16.msra.mxu0 %v1107
        %1131 = vmatprep.subr.bf16.mxu0 0
        %1132 = vmatpush1.bf16.msra.mxu0 %v1108
        %1133 = vmatprep.subr.bf16.mxu0 0
        %1134 = vmatpush1.bf16.msra.mxu0 0
        %1135 = vmatprep.subr.bf16.mxu0 0
        %1136 = vmatpush1.bf16.msra.mxu0 0
        %1137 = vmatprep.subr.bf16.mxu0 0
        %1138 = vmatpush1.bf16.msra.mxu0 0
        %1139 = vmatprep.subr.bf16.mxu0 0
        %1140 = vmatpush1.bf16.msra.mxu0 0
        %1141 = vmatprep.subr.bf16.mxu0 0
        %1142 = vmatpush1.bf16.msra.mxu0 0
        %1143 = vmatprep.subr.bf16.mxu0 0
        %1144 = vmatpush1.bf16.msra.mxu0 0
        %1145 = vmatprep.subr.bf16.mxu0 0
        %1146 = vmatpush1.bf16.msra.mxu0 0
        %1147 = vmatprep.subr.bf16.mxu0 0
        %1148 = vmatpush1.bf16.msra.mxu0 0
        %1149 = vmatprep.mubr.bf16.mxu0 0
        %1150 = vmatmul.mubr.bf16.gmra.mrb[0].mxu0 %v1037
        %v1151 = vpop.f32.mrb[0].mxu0
        %v1152 = vadd.f32 0.0, %v1151
        %v1153 = vpop.f32.mrb[0].mxu0
        %v1154 = vpop.f32.mrb[0].mxu0
        %v1155 = vadd.f32 0.0, %v1154
        %v1156 = vpop.f32.mrb[0].mxu0
        %1157 = vmatprep.mubr.bf16.mxu0 0
        %1158 = vmatmul.mubr.bf16.gmra.mrb[0].mxu0 %v1038
        %v1159 = vpop.f32.mrb[0].mxu0
        %v1160 = vadd.f32 0.0, %v1159
        %v1161 = vpop.f32.mrb[0].mxu0
        %v1162 = vpop.f32.mrb[0].mxu0
        %v1163 = vadd.f32 0.0, %v1162
        %v1164 = vpop.f32.mrb[0].mxu0
        %1165 = vmatprep.mubr.bf16.mxu0 0
        %1166 = vmatmul.mubr.bf16.gmra.mrb[0].mxu0 %v1039
        %v1167 = vpop.f32.mrb[0].mxu0
        %v1168 = vadd.f32 0.0, %v1167
        %v1169 = vpop.f32.mrb[0].mxu0
        %v1170 = vpop.f32.mrb[0].mxu0
        %v1171 = vadd.f32 0.0, %v1170
        %v1172 = vpop.f32.mrb[0].mxu0
        %1173 = vmatprep.mubr.bf16.mxu0 0
        %1174 = vmatmul.mubr.bf16.gmra.mrb[0].mxu0 %v1040
        %v1175 = vpop.f32.mrb[0].mxu0
        %v1176 = vadd.f32 0.0, %v1175
        %v1177 = vpop.f32.mrb[0].mxu0
        %v1178 = vpop.f32.mrb[0].mxu0
        %v1179 = vadd.f32 0.0, %v1178
        %v1180 = vpop.f32.mrb[0].mxu0
        %1181 = vmatprep.mubr.bf16.mxu0 0
        %1182 = vmatmul.mubr.bf16.gmra.mrb[0].mxu0 %v1041
        %v1183 = vpop.f32.mrb[0].mxu0
        %v1184 = vadd.f32 0.0, %v1183
        %v1185 = vpop.f32.mrb[0].mxu0
        %v1186 = vpop.f32.mrb[0].mxu0
        %v1187 = vadd.f32 0.0, %v1186
        %v1188 = vpop.f32.mrb[0].mxu0
        %1189 = vmatprep.mubr.bf16.mxu0 0
        %1190 = vmatmul.mubr.bf16.gmra.mrb[0].mxu0 %v1042
        %v1191 = vpop.f32.mrb[0].mxu0
        %v1192 = vadd.f32 0.0, %v1191
        %v1193 = vpop.f32.mrb[0].mxu0
        %v1194 = vpop.f32.mrb[0].mxu0
        %v1195 = vadd.f32 0.0, %v1194
        %v1196 = vpop.f32.mrb[0].mxu0
        %1197 = vmatprep.mubr.bf16.mxu0 0
        %1198 = vmatmul.mubr.bf16.gmra.mrb[0].mxu0 %v1043
        %v1199 = vpop.f32.mrb[0].mxu0
        %v1200 = vadd.f32 0.0, %v1199
        %v1201 = vpop.f32.mrb[0].mxu0
        %v1202 = vpop.f32.mrb[0].mxu0
        %v1203 = vadd.f32 0.0, %v1202
        %v1204 = vpop.f32.mrb[0].mxu0
        %1205 = vmatprep.mubr.bf16.mxu0 0
        %1206 = vmatmul.mubr.bf16.gmra.mrb[0].mxu0 %v1044
        %v1207 = vpop.f32.mrb[0].mxu0
        %v1208 = vadd.f32 0.0, %v1207
        %v1209 = vpop.f32.mrb[0].mxu0
        %v1210 = vpop.f32.mrb[0].mxu0
        %v1211 = vadd.f32 0.0, %v1210
        %v1212 = vpop.f32.mrb[0].mxu0
        %1213 = vmatprep.mubr.bf16.mxu0 0
        %1214 = vmatmul.mubr.bf16.gmra.mrb[0].mxu0 %v1045
        %v1215 = vpop.f32.mrb[0].mxu0
        %v1216 = vadd.f32 0.0, %v1215
        %v1217 = vpop.f32.mrb[0].mxu0
        %v1218 = vpop.f32.mrb[0].mxu0
        %v1219 = vadd.f32 0.0, %v1218
        %v1220 = vpop.f32.mrb[0].mxu0
        %1221 = vmatprep.mubr.bf16.mxu0 0
        %1222 = vmatmul.mubr.bf16.gmra.mrb[0].mxu0 %v1046
        %v1223 = vpop.f32.mrb[0].mxu0
        %v1224 = vadd.f32 0.0, %v1223
        %v1225 = vpop.f32.mrb[0].mxu0
        %v1226 = vpop.f32.mrb[0].mxu0
        %v1227 = vadd.f32 0.0, %v1226
        %v1228 = vpop.f32.mrb[0].mxu0
        %1229 = vmatprep.mubr.bf16.mxu0 0
        %1230 = vmatmul.mubr.bf16.gmra.mrb[0].mxu0 %v1047
        %v1231 = vpop.f32.mrb[0].mxu0
        %v1232 = vadd.f32 0.0, %v1231
        %v1233 = vpop.f32.mrb[0].mxu0
        %v1234 = vpop.f32.mrb[0].mxu0
        %v1235 = vadd.f32 0.0, %v1234
        %v1236 = vpop.f32.mrb[0].mxu0
        %1237 = vmatprep.mubr.bf16.mxu0 0
        %1238 = vmatmul.mubr.bf16.gmra.mrb[0].mxu0 %v1048
        %v1239 = vpop.f32.mrb[0].mxu0
        %v1240 = vadd.f32 0.0, %v1239
        %v1241 = vpop.f32.mrb[0].mxu0
        %v1242 = vpop.f32.mrb[0].mxu0
        %v1243 = vadd.f32 0.0, %v1242
        %v1244 = vpop.f32.mrb[0].mxu0
        %1245 = vmatprep.mubr.bf16.mxu0 0
        %1246 = vmatmul.mubr.bf16.gmra.mrb[0].mxu0 %v1049
        %v1247 = vpop.f32.mrb[0].mxu0
        %v1248 = vadd.f32 0.0, %v1247
        %v1249 = vpop.f32.mrb[0].mxu0
        %v1250 = vpop.f32.mrb[0].mxu0
        %v1251 = vadd.f32 0.0, %v1250
        %v1252 = vpop.f32.mrb[0].mxu0
        %1253 = vmatprep.mubr.bf16.mxu0 0
        %1254 = vmatmul.mubr.bf16.gmra.mrb[0].mxu0 %v1050
        %v1255 = vpop.f32.mrb[0].mxu0
        %v1256 = vadd.f32 0.0, %v1255
        %v1257 = vpop.f32.mrb[0].mxu0
        %v1258 = vpop.f32.mrb[0].mxu0
        %v1259 = vadd.f32 0.0, %v1258
        %v1260 = vpop.f32.mrb[0].mxu0
        %1261 = vmatprep.mubr.bf16.mxu0 0
        %1262 = vmatmul.mubr.bf16.gmra.mrb[0].mxu0 %v1051
        %v1263 = vpop.f32.mrb[0].mxu0
        %v1264 = vadd.f32 0.0, %v1263
        %v1265 = vpop.f32.mrb[0].mxu0
        %v1266 = vpop.f32.mrb[0].mxu0
        %v1267 = vadd.f32 0.0, %v1266
        %v1268 = vpop.f32.mrb[0].mxu0
        %1269 = vmatprep.mubr.bf16.mxu0 0
        %1270 = vmatmul.mubr.bf16.gmra.mrb[0].mxu0 %v1052
        %v1271 = vpop.f32.mrb[0].mxu0
        %v1272 = vadd.f32 0.0, %v1271
        %v1273 = vpop.f32.mrb[0].mxu0
        %v1274 = vpop.f32.mrb[0].mxu0
        %v1275 = vadd.f32 0.0, %v1274
        %v1276 = vpop.f32.mrb[0].mxu0
        %1277 = vdwg.mxu0
        %v1278 = vmax.f32 %v1152, 0.0
        %v1279 = vmax.f32 %v1155, 0.0
        %v1280 = vmax.f32 %v1160, 0.0
        %v1281 = vmax.f32 %v1163, 0.0
        %v1282 = vmax.f32 %v1168, 0.0
        %v1283 = vmax.f32 %v1171, 0.0
        %v1284 = vmax.f32 %v1176, 0.0
        %v1285 = vmax.f32 %v1179, 0.0
        %v1286 = vmax.f32 %v1184, 0.0
        %v1287 = vmax.f32 %v1187, 0.0
        %v1288 = vmax.f32 %v1192, 0.0
        %v1289 = vmax.f32 %v1195, 0.0
        %v1290 = vmax.f32 %v1200, 0.0
        %v1291 = vmax.f32 %v1203, 0.0
        %v1292 = vmax.f32 %v1208, 0.0
        %v1293 = vmax.f32 %v1211, 0.0
        %v1294 = vmax.f32 %v1216, 0.0
        %v1295 = vmax.f32 %v1219, 0.0
        %v1296 = vmax.f32 %v1224, 0.0
        %v1297 = vmax.f32 %v1227, 0.0
        %v1298 = vmax.f32 %v1232, 0.0
        %v1299 = vmax.f32 %v1235, 0.0
        %v1300 = vmax.f32 %v1240, 0.0
        %v1301 = vmax.f32 %v1243, 0.0
        %v1302 = vmax.f32 %v1248, 0.0
        %v1303 = vmax.f32 %v1251, 0.0
        %v1304 = vmax.f32 %v1256, 0.0
        %v1305 = vmax.f32 %v1259, 0.0
        %v1306 = vmax.f32 %v1264, 0.0
        %v1307 = vmax.f32 %v1267, 0.0
        %v1308 = vmax.f32 %v1272, 0.0
        %v1309 = vmax.f32 %v1275, 0.0
        %v1310 = vmul.f32 %v1278, %v1278
        %v1311 = vmul.f32 %v1279, %v1279
        %v1312 = vmul.f32 %v1280, %v1280
        %v1313 = vmul.f32 %v1281, %v1281
        %v1314 = vmul.f32 %v1282, %v1282
        %v1315 = vmul.f32 %v1283, %v1283
        %v1316 = vmul.f32 %v1284, %v1284
        %v1317 = vmul.f32 %v1285, %v1285
        %v1318 = vmul.f32 %v1286, %v1286
        %v1319 = vmul.f32 %v1287, %v1287
        %v1320 = vmul.f32 %v1288, %v1288
        %v1321 = vmul.f32 %v1289, %v1289
        %v1322 = vmul.f32 %v1290, %v1290
        %v1323 = vmul.f32 %v1291, %v1291
        %v1324 = vmul.f32 %v1292, %v1292
        %v1325 = vmul.f32 %v1293, %v1293
        %v1326 = vmul.f32 %v1294, %v1294
        %v1327 = vmul.f32 %v1295, %v1295
        %v1328 = vmul.f32 %v1296, %v1296
        %v1329 = vmul.f32 %v1297, %v1297
        %v1330 = vmul.f32 %v1298, %v1298
        %v1331 = vmul.f32 %v1299, %v1299
        %v1332 = vmul.f32 %v1300, %v1300
        %v1333 = vmul.f32 %v1301, %v1301
        %v1334 = vmul.f32 %v1302, %v1302
        %v1335 = vmul.f32 %v1303, %v1303
        %v1336 = vmul.f32 %v1304, %v1304
        %v1337 = vmul.f32 %v1305, %v1305
        %v1338 = vmul.f32 %v1306, %v1306
        %v1339 = vmul.f32 %v1307, %v1307
        %v1340 = vmul.f32 %v1308, %v1308
        %v1341 = vmul.f32 %v1309, %v1309
        %v1342 = vadd.f32 %v1278, %v1279
        %v1343 = vadd.f32 %v1342, %v1280
        %v1344 = vadd.f32 %v1343, %v1281
        %v1345 = vadd.f32 %v1344, %v1282
        %v1346 = vadd.f32 %v1345, %v1283
        %v1347 = vadd.f32 %v1346, %v1284
        %v1348 = vadd.f32 %v1347, %v1285
        %v1349 = vadd.f32 %v1348, %v1286
        %v1350 = vadd.f32 %v1349, %v1287
        %v1351 = vadd.f32 %v1350, %v1288
        %v1352 = vadd.f32 %v1351, %v1289
        %v1353 = vadd.f32 %v1352, %v1290
        %v1354 = vadd.f32 %v1353, %v1291
        %v1355 = vadd.f32 %v1354, %v1292
        %v1356 = vadd.f32 %v1355, %v1293
        %v1357 = vrot.slane %v1356, 4
        %v1358 = vadd.f32 %v1356, %v1357
        %v1359 = vrot.slane %v1358, 2
        %v1360 = vadd.f32 %v1358, %v1359
        %v1361 = vrot.slane %v1360, 1
        %v1362 = vadd.f32 %v1360, %v1361
        %v1363 = vadd.f32 %v1310, %v1311
        %v1364 = vadd.f32 %v1363, %v1312
        %v1365 = vadd.f32 %v1364, %v1313
        %v1366 = vadd.f32 %v1365, %v1314
        %v1367 = vadd.f32 %v1366, %v1315
        %v1368 = vadd.f32 %v1367, %v1316
        %v1369 = vadd.f32 %v1368, %v1317
        %v1370 = vadd.f32 %v1369, %v1318
        %v1371 = vadd.f32 %v1370, %v1319
        %v1372 = vadd.f32 %v1371, %v1320
        %v1373 = vadd.f32 %v1372, %v1321
        %v1374 = vadd.f32 %v1373, %v1322
        %v1375 = vadd.f32 %v1374, %v1323
        %v1376 = vadd.f32 %v1375, %v1324
        %v1377 = vadd.f32 %v1376, %v1325
        %v1378 = vrot.slane %v1377, 4
        %v1379 = vadd.f32 %v1377, %v1378
        %v1380 = vrot.slane %v1379, 2
        %v1381 = vadd.f32 %v1379, %v1380
        %v1382 = vrot.slane %v1381, 1
        %v1383 = vadd.f32 %v1381, %v1382
        %v1384 = vadd.f32 %v1294, %v1295
        %v1385 = vadd.f32 %v1384, %v1296
        %v1386 = vadd.f32 %v1385, %v1297
        %v1387 = vadd.f32 %v1386, %v1298
        %v1388 = vadd.f32 %v1387, %v1299
        %v1389 = vadd.f32 %v1388, %v1300
        %v1390 = vadd.f32 %v1389, %v1301
        %v1391 = vadd.f32 %v1390, %v1302
        %v1392 = vadd.f32 %v1391, %v1303
        %v1393 = vadd.f32 %v1392, %v1304
        %v1394 = vadd.f32 %v1393, %v1305
        %v1395 = vadd.f32 %v1394, %v1306
        %v1396 = vadd.f32 %v1395, %v1307
        %v1397 = vadd.f32 %v1396, %v1308
        %v1398 = vadd.f32 %v1397, %v1309
        %v1399 = vrot.slane %v1398, 4
        %v1400 = vadd.f32 %v1398, %v1399
        %v1401 = vrot.slane %v1400, 2
        %v1402 = vadd.f32 %v1400, %v1401
        %v1403 = vrot.slane %v1402, 1
        %v1404 = vadd.f32 %v1402, %v1403
        %v1405 = vadd.f32 %v1326, %v1327
        %v1406 = vadd.f32 %v1405, %v1328
        %v1407 = vadd.f32 %v1406, %v1329
        %v1408 = vadd.f32 %v1407, %v1330
        %v1409 = vadd.f32 %v1408, %v1331
        %v1410 = vadd.f32 %v1409, %v1332
        %v1411 = vadd.f32 %v1410, %v1333
        %v1412 = vadd.f32 %v1411, %v1334
        %v1413 = vadd.f32 %v1412, %v1335
        %v1414 = vadd.f32 %v1413, %v1336
        %v1415 = vadd.f32 %v1414, %v1337
        %v1416 = vadd.f32 %v1415, %v1338
        %v1417 = vadd.f32 %v1416, %v1339
        %v1418 = vadd.f32 %v1417, %v1340
        %v1419 = vadd.f32 %v1418, %v1341
        %v1420 = vrot.slane %v1419, 4
        %v1421 = vadd.f32 %v1419, %v1420
        %v1422 = vrot.slane %v1421, 2
        %v1423 = vadd.f32 %v1421, %v1422
        %v1424 = vrot.slane %v1423, 1
        %v1425 = vadd.f32 %v1423, %v1424
        %v1426 = vmul.f32 %v1362, 0.0078125
        %v1427 = vmul.f32 %v1404, 0.0078125
        %v1428 = vmul.f32 %v1383, 0.0078125
        %v1429 = vmul.f32 %v1425, 0.0078125
        %v1430 = vmul.f32 %v1426, %v1426
        %v1431 = vmul.f32 %v1427, %v1427
        %v1432 = vsub.f32 %v1428, %v1430
        %v1433 = vsub.f32 %v1429, %v1431
        %v1434 = vmax.f32 %v1432, 0.0
        %v1435 = vmax.f32 %v1433, 0.0
        %v1436 = vsub.f32 %v1278, %v1426
        %v1437 = vsub.f32 %v1279, %v1426
        %v1438 = vsub.f32 %v1280, %v1426
        %v1439 = vsub.f32 %v1281, %v1426
        %v1440 = vsub.f32 %v1282, %v1426
        %v1441 = vsub.f32 %v1283, %v1426
        %v1442 = vsub.f32 %v1284, %v1426
        %v1443 = vsub.f32 %v1285, %v1426
        %v1444 = vsub.f32 %v1286, %v1426
        %v1445 = vsub.f32 %v1287, %v1426
        %v1446 = vsub.f32 %v1288, %v1426
        %v1447 = vsub.f32 %v1289, %v1426
        %v1448 = vsub.f32 %v1290, %v1426
        %v1449 = vsub.f32 %v1291, %v1426
        %v1450 = vsub.f32 %v1292, %v1426
        %v1451 = vsub.f32 %v1293, %v1426
        %v1452 = vsub.f32 %v1294, %v1427
        %v1453 = vsub.f32 %v1295, %v1427
        %v1454 = vsub.f32 %v1296, %v1427
        %v1455 = vsub.f32 %v1297, %v1427
        %v1456 = vsub.f32 %v1298, %v1427
        %v1457 = vsub.f32 %v1299, %v1427
        %v1458 = vsub.f32 %v1300, %v1427
        %v1459 = vsub.f32 %v1301, %v1427
        %v1460 = vsub.f32 %v1302, %v1427
        %v1461 = vsub.f32 %v1303, %v1427
        %v1462 = vsub.f32 %v1304, %v1427
        %v1463 = vsub.f32 %v1305, %v1427
        %v1464 = vsub.f32 %v1306, %v1427
        %v1465 = vsub.f32 %v1307, %v1427
        %v1466 = vsub.f32 %v1308, %v1427
        %v1467 = vsub.f32 %v1309, %v1427
        %v1468 = vadd.f32 %v1434, 1e-05
        %v1469 = vadd.f32 %v1435, 1e-05
        %v1470 = vrsqrt.pop %v1468
        %v1471 = vrsqrt.pop %v1469
        %v1472 = vmul.f32 %v1436, %v1470
        %v1473 = vmul.f32 %v1437, %v1470
        %v1474 = vmul.f32 %v1438, %v1470
        %v1475 = vmul.f32 %v1439, %v1470
        %v1476 = vmul.f32 %v1440, %v1470
        %v1477 = vmul.f32 %v1441, %v1470
        %v1478 = vmul.f32 %v1442, %v1470
        %v1479 = vmul.f32 %v1443, %v1470
        %v1480 = vmul.f32 %v1444, %v1470
        %v1481 = vmul.f32 %v1445, %v1470
        %v1482 = vmul.f32 %v1446, %v1470
        %v1483 = vmul.f32 %v1447, %v1470
        %v1484 = vmul.f32 %v1448, %v1470
        %v1485 = vmul.f32 %v1449, %v1470
        %v1486 = vmul.f32 %v1450, %v1470
        %v1487 = vmul.f32 %v1451, %v1470
        %v1488 = vmul.f32 %v1452, %v1471
        %v1489 = vmul.f32 %v1453, %v1471
        %v1490 = vmul.f32 %v1454, %v1471
        %v1491 = vmul.f32 %v1455, %v1471
        %v1492 = vmul.f32 %v1456, %v1471
        %v1493 = vmul.f32 %v1457, %v1471
        %v1494 = vmul.f32 %v1458, %v1471
        %v1495 = vmul.f32 %v1459, %v1471
        %v1496 = vmul.f32 %v1460, %v1471
        %v1497 = vmul.f32 %v1461, %v1471
        %v1498 = vmul.f32 %v1462, %v1471
        %v1499 = vmul.f32 %v1463, %v1471
        %v1500 = vmul.f32 %v1464, %v1471
        %v1501 = vmul.f32 %v1465, %v1471
        %v1502 = vmul.f32 %v1466, %v1471
        %v1503 = vmul.f32 %v1467, %v1471
        %v1504 = vld [vmem:[%s5] sm:$0x1]
        %v1506 = vlaneseq
        %v1507 = vshrl.u32 %v1506, 7
        %v1508 = vsub.s32 0, %v1507
        %v1509 = vrot.slane %v1504, %v1508
        %v1511 = vmul.f32 %v1472, %v1509
        %v1512 = vmul.f32 %v1473, %v1509
        %v1513 = vmul.f32 %v1474, %v1509
        %v1514 = vmul.f32 %v1475, %v1509
        %v1515 = vmul.f32 %v1476, %v1509
        %v1516 = vmul.f32 %v1477, %v1509
        %v1517 = vmul.f32 %v1478, %v1509
        %v1518 = vmul.f32 %v1479, %v1509
        %v1519 = vmul.f32 %v1480, %v1509
        %v1520 = vmul.f32 %v1481, %v1509
        %v1521 = vmul.f32 %v1482, %v1509
        %v1522 = vmul.f32 %v1483, %v1509
        %v1523 = vmul.f32 %v1484, %v1509
        %v1524 = vmul.f32 %v1485, %v1509
        %v1525 = vmul.f32 %v1486, %v1509
        %v1526 = vmul.f32 %v1487, %v1509
        %v1527 = vmul.f32 %v1488, %v1509
        %v1528 = vmul.f32 %v1489, %v1509
        %v1529 = vmul.f32 %v1490, %v1509
        %v1530 = vmul.f32 %v1491, %v1509
        %v1531 = vmul.f32 %v1492, %v1509
        %v1532 = vmul.f32 %v1493, %v1509
        %v1533 = vmul.f32 %v1494, %v1509
        %v1534 = vmul.f32 %v1495, %v1509
        %v1535 = vmul.f32 %v1496, %v1509
        %v1536 = vmul.f32 %v1497, %v1509
        %v1537 = vmul.f32 %v1498, %v1509
        %v1538 = vmul.f32 %v1499, %v1509
        %v1539 = vmul.f32 %v1500, %v1509
        %v1540 = vmul.f32 %v1501, %v1509
        %v1541 = vmul.f32 %v1502, %v1509
        %v1542 = vmul.f32 %v1503, %v1509
        %v1543 = vld [vmem:[%s6] sm:$0x1]
        %v1545 = vlaneseq
        %v1546 = vshrl.u32 %v1545, 7
        %v1547 = vsub.s32 0, %v1546
        %v1548 = vrot.slane %v1543, %v1547
        %v1550 = vadd.f32 %v1511, %v1548
        %v1551 = vadd.f32 %v1512, %v1548
        %v1552 = vadd.f32 %v1513, %v1548
        %v1553 = vadd.f32 %v1514, %v1548
        %v1554 = vadd.f32 %v1515, %v1548
        %v1555 = vadd.f32 %v1516, %v1548
        %v1556 = vadd.f32 %v1517, %v1548
        %v1557 = vadd.f32 %v1518, %v1548
        %v1558 = vadd.f32 %v1519, %v1548
        %v1559 = vadd.f32 %v1520, %v1548
        %v1560 = vadd.f32 %v1521, %v1548
        %v1561 = vadd.f32 %v1522, %v1548
        %v1562 = vadd.f32 %v1523, %v1548
        %v1563 = vadd.f32 %v1524, %v1548
        %v1564 = vadd.f32 %v1525, %v1548
        %v1565 = vadd.f32 %v1526, %v1548
        %v1566 = vadd.f32 %v1527, %v1548
        %v1567 = vadd.f32 %v1528, %v1548
        %v1568 = vadd.f32 %v1529, %v1548
        %v1569 = vadd.f32 %v1530, %v1548
        %v1570 = vadd.f32 %v1531, %v1548
        %v1571 = vadd.f32 %v1532, %v1548
        %v1572 = vadd.f32 %v1533, %v1548
        %v1573 = vadd.f32 %v1534, %v1548
        %v1574 = vadd.f32 %v1535, %v1548
        %v1575 = vadd.f32 %v1536, %v1548
        %v1576 = vadd.f32 %v1537, %v1548
        %v1577 = vadd.f32 %v1538, %v1548
        %v1578 = vadd.f32 %v1539, %v1548
        %v1579 = vadd.f32 %v1540, %v1548
        %v1580 = vadd.f32 %v1541, %v1548
        %v1581 = vadd.f32 %v1542, %v1548
        %v1582 = vpack.c.bf16 %v1551, %v1550
        %v1583 = vpack.c.bf16 %v1553, %v1552
        %v1584 = vpack.c.bf16 %v1555, %v1554
        %v1585 = vpack.c.bf16 %v1557, %v1556
        %v1586 = vpack.c.bf16 %v1559, %v1558
        %v1587 = vpack.c.bf16 %v1561, %v1560
        %v1588 = vpack.c.bf16 %v1563, %v1562
        %v1589 = vpack.c.bf16 %v1565, %v1564
        %v1590 = vpack.c.bf16 %v1567, %v1566
        %v1591 = vpack.c.bf16 %v1569, %v1568
        %v1592 = vpack.c.bf16 %v1571, %v1570
        %v1593 = vpack.c.bf16 %v1573, %v1572
        %v1594 = vpack.c.bf16 %v1575, %v1574
        %v1595 = vpack.c.bf16 %v1577, %v1576
        %v1596 = vpack.c.bf16 %v1579, %v1578
        %v1597 = vpack.c.bf16 %v1581, %v1580
        %1598 = vmatprep.subr.bf16.mxu0 0
        %1599 = vmatpush1.bf16.msra.mxu0 %v1582
        %1600 = vmatprep.subr.bf16.mxu0 0
        %1601 = vmatpush1.bf16.msra.mxu0 %v1583
        %1602 = vmatprep.subr.bf16.mxu0 0
        %1603 = vmatpush1.bf16.msra.mxu0 %v1584
        %1604 = vmatprep.subr.bf16.mxu0 0
        %1605 = vmatpush1.bf16.msra.mxu0 %v1585
        %1606 = vmatprep.subr.bf16.mxu0 0
        %1607 = vmatpush1.bf16.msra.mxu0 %v1586
        %1608 = vmatprep.subr.bf16.mxu0 0
        %1609 = vmatpush1.bf16.msra.mxu0 %v1587
        %1610 = vmatprep.subr.bf16.mxu0 0
        %1611 = vmatpush1.bf16.msra.mxu0 %v1588
        %1612 = vmatprep.subr.bf16.mxu0 0
        %1613 = vmatpush1.bf16.msra.mxu0 %v1589
        %1614 = vmatprep.subr.bf16.mxu0 0
        %1615 = vmatpush1.bf16.msra.mxu0 0
        %1616 = vmatprep.subr.bf16.mxu0 0
        %1617 = vmatpush1.bf16.msra.mxu0 0
        %1618 = vmatprep.subr.bf16.mxu0 0
        %1619 = vmatpush1.bf16.msra.mxu0 0
        %1620 = vmatprep.subr.bf16.mxu0 0
        %1621 = vmatpush1.bf16.msra.mxu0 0
        %1622 = vmatprep.subr.bf16.mxu0 0
        %1623 = vmatpush1.bf16.msra.mxu0 0
        %1624 = vmatprep.subr.bf16.mxu0 0
        %1625 = vmatpush1.bf16.msra.mxu0 0
        %1626 = vmatprep.subr.bf16.mxu0 0
        %1627 = vmatpush1.bf16.msra.mxu0 0
        %1628 = vmatprep.subr.bf16.mxu0 0
        %1629 = vmatpush1.bf16.msra.mxu0 0
        %1630 = vmatprep.mubr.bf16.mxu0 0
        %1631 = vmatmul.mubr.bf16.gmra.mrb[0].mxu0 %v439
        %v1632 = vpop.f32.mrb[0].mxu0
        %v1633 = vadd.f32 0.0, %v1632
        %v1634 = vpop.f32.mrb[0].mxu0
        %v1635 = vpop.f32.mrb[0].mxu0
        %v1636 = vadd.f32 0.0, %v1635
        %v1637 = vpop.f32.mrb[0].mxu0
        %1638 = vmatprep.mubr.bf16.mxu0 0
        %1639 = vmatmul.mubr.bf16.gmra.mrb[0].mxu0 %v440
        %v1640 = vpop.f32.mrb[0].mxu0
        %v1641 = vadd.f32 0.0, %v1640
        %v1642 = vpop.f32.mrb[0].mxu0
        %v1643 = vpop.f32.mrb[0].mxu0
        %v1644 = vadd.f32 0.0, %v1643
        %v1645 = vpop.f32.mrb[0].mxu0
        %1646 = vmatprep.mubr.bf16.mxu0 0
        %1647 = vmatmul.mubr.bf16.gmra.mrb[0].mxu0 %v441
        %v1648 = vpop.f32.mrb[0].mxu0
        %v1649 = vadd.f32 0.0, %v1648
        %v1650 = vpop.f32.mrb[0].mxu0
        %v1651 = vpop.f32.mrb[0].mxu0
        %v1652 = vadd.f32 0.0, %v1651
        %v1653 = vpop.f32.mrb[0].mxu0
        %1654 = vmatprep.mubr.bf16.mxu0 0
        %1655 = vmatmul.mubr.bf16.gmra.mrb[0].mxu0 %v442
        %v1656 = vpop.f32.mrb[0].mxu0
        %v1657 = vadd.f32 0.0, %v1656
        %v1658 = vpop.f32.mrb[0].mxu0
        %v1659 = vpop.f32.mrb[0].mxu0
        %v1660 = vadd.f32 0.0, %v1659
        %v1661 = vpop.f32.mrb[0].mxu0
        %1662 = vmatprep.mubr.bf16.mxu0 0
        %1663 = vmatmul.mubr.bf16.gmra.mrb[0].mxu0 %v443
        %v1664 = vpop.f32.mrb[0].mxu0
        %v1665 = vadd.f32 0.0, %v1664
        %v1666 = vpop.f32.mrb[0].mxu0
        %v1667 = vpop.f32.mrb[0].mxu0
        %v1668 = vadd.f32 0.0, %v1667
        %v1669 = vpop.f32.mrb[0].mxu0
        %1670 = vmatprep.mubr.bf16.mxu0 0
        %1671 = vmatmul.mubr.bf16.gmra.mrb[0].mxu0 %v444
        %v1672 = vpop.f32.mrb[0].mxu0
        %v1673 = vadd.f32 0.0, %v1672
        %v1674 = vpop.f32.mrb[0].mxu0
        %v1675 = vpop.f32.mrb[0].mxu0
        %v1676 = vadd.f32 0.0, %v1675
        %v1677 = vpop.f32.mrb[0].mxu0
        %1678 = vmatprep.mubr.bf16.mxu0 0
        %1679 = vmatmul.mubr.bf16.gmra.mrb[0].mxu0 %v445
        %v1680 = vpop.f32.mrb[0].mxu0
        %v1681 = vadd.f32 0.0, %v1680
        %v1682 = vpop.f32.mrb[0].mxu0
        %v1683 = vpop.f32.mrb[0].mxu0
        %v1684 = vadd.f32 0.0, %v1683
        %v1685 = vpop.f32.mrb[0].mxu0
        %1686 = vmatprep.mubr.bf16.mxu0 0
        %1687 = vmatmul.mubr.bf16.gmra.mrb[0].mxu0 %v446
        %v1688 = vpop.f32.mrb[0].mxu0
        %v1689 = vadd.f32 0.0, %v1688
        %v1690 = vpop.f32.mrb[0].mxu0
        %v1691 = vpop.f32.mrb[0].mxu0
        %v1692 = vadd.f32 0.0, %v1691
        %v1693 = vpop.f32.mrb[0].mxu0
        %1694 = vdwg.mxu0
        %1695 = vmatprep.subr.bf16.mxu0 0
        %1696 = vmatpush1.bf16.msra.mxu0 %v1590
        %1697 = vmatprep.subr.bf16.mxu0 0
        %1698 = vmatpush1.bf16.msra.mxu0 %v1591
        %1699 = vmatprep.subr.bf16.mxu0 0
        %1700 = vmatpush1.bf16.msra.mxu0 %v1592
        %1701 = vmatprep.subr.bf16.mxu0 0
        %1702 = vmatpush1.bf16.msra.mxu0 %v1593
        %1703 = vmatprep.subr.bf16.mxu0 0
        %1704 = vmatpush1.bf16.msra.mxu0 %v1594
        %1705 = vmatprep.subr.bf16.mxu0 0
        %1706 = vmatpush1.bf16.msra.mxu0 %v1595
        %1707 = vmatprep.subr.bf16.mxu0 0
        %1708 = vmatpush1.bf16.msra.mxu0 %v1596
        %1709 = vmatprep.subr.bf16.mxu0 0
        %1710 = vmatpush1.bf16.msra.mxu0 %v1597
        %1711 = vmatprep.subr.bf16.mxu0 0
        %1712 = vmatpush1.bf16.msra.mxu0 0
        %1713 = vmatprep.subr.bf16.mxu0 0
        %1714 = vmatpush1.bf16.msra.mxu0 0
        %1715 = vmatprep.subr.bf16.mxu0 0
        %1716 = vmatpush1.bf16.msra.mxu0 0
        %1717 = vmatprep.subr.bf16.mxu0 0
        %1718 = vmatpush1.bf16.msra.mxu0 0
        %1719 = vmatprep.subr.bf16.mxu0 0
        %1720 = vmatpush1.bf16.msra.mxu0 0
        %1721 = vmatprep.subr.bf16.mxu0 0
        %1722 = vmatpush1.bf16.msra.mxu0 0
        %1723 = vmatprep.subr.bf16.mxu0 0
        %1724 = vmatpush1.bf16.msra.mxu0 0
        %1725 = vmatprep.subr.bf16.mxu0 0
        %1726 = vmatpush1.bf16.msra.mxu0 0
        %1727 = vmatprep.mubr.bf16.mxu0 0
        %1728 = vmatmul.mubr.bf16.gmra.mrb[0].mxu0 %v584
        %v1729 = vpop.f32.mrb[0].mxu0
        %v1730 = vadd.f32 0.0, %v1729
        %v1731 = vpop.f32.mrb[0].mxu0
        %v1732 = vpop.f32.mrb[0].mxu0
        %v1733 = vadd.f32 0.0, %v1732
        %v1734 = vpop.f32.mrb[0].mxu0
        %1735 = vmatprep.mubr.bf16.mxu0 0
        %1736 = vmatmul.mubr.bf16.gmra.mrb[0].mxu0 %v585
        %v1737 = vpop.f32.mrb[0].mxu0
        %v1738 = vadd.f32 0.0, %v1737
        %v1739 = vpop.f32.mrb[0].mxu0
        %v1740 = vpop.f32.mrb[0].mxu0
        %v1741 = vadd.f32 0.0, %v1740
        %v1742 = vpop.f32.mrb[0].mxu0
        %1743 = vmatprep.mubr.bf16.mxu0 0
        %1744 = vmatmul.mubr.bf16.gmra.mrb[0].mxu0 %v586
        %v1745 = vpop.f32.mrb[0].mxu0
        %v1746 = vadd.f32 0.0, %v1745
        %v1747 = vpop.f32.mrb[0].mxu0
        %v1748 = vpop.f32.mrb[0].mxu0
        %v1749 = vadd.f32 0.0, %v1748
        %v1750 = vpop.f32.mrb[0].mxu0
        %1751 = vmatprep.mubr.bf16.mxu0 0
        %1752 = vmatmul.mubr.bf16.gmra.mrb[0].mxu0 %v587
        %v1753 = vpop.f32.mrb[0].mxu0
        %v1754 = vadd.f32 0.0, %v1753
        %v1755 = vpop.f32.mrb[0].mxu0
        %v1756 = vpop.f32.mrb[0].mxu0
        %v1757 = vadd.f32 0.0, %v1756
        %v1758 = vpop.f32.mrb[0].mxu0
        %1759 = vmatprep.mubr.bf16.mxu0 0
        %1760 = vmatmul.mubr.bf16.gmra.mrb[0].mxu0 %v588
        %v1761 = vpop.f32.mrb[0].mxu0
        %v1762 = vadd.f32 0.0, %v1761
        %v1763 = vpop.f32.mrb[0].mxu0
        %v1764 = vpop.f32.mrb[0].mxu0
        %v1765 = vadd.f32 0.0, %v1764
        %v1766 = vpop.f32.mrb[0].mxu0
        %1767 = vmatprep.mubr.bf16.mxu0 0
        %1768 = vmatmul.mubr.bf16.gmra.mrb[0].mxu0 %v589
        %v1769 = vpop.f32.mrb[0].mxu0
        %v1770 = vadd.f32 0.0, %v1769
        %v1771 = vpop.f32.mrb[0].mxu0
        %v1772 = vpop.f32.mrb[0].mxu0
        %v1773 = vadd.f32 0.0, %v1772
        %v1774 = vpop.f32.mrb[0].mxu0
        %1775 = vmatprep.mubr.bf16.mxu0 0
        %1776 = vmatmul.mubr.bf16.gmra.mrb[0].mxu0 %v590
        %v1777 = vpop.f32.mrb[0].mxu0
        %v1778 = vadd.f32 0.0, %v1777
        %v1779 = vpop.f32.mrb[0].mxu0
        %v1780 = vpop.f32.mrb[0].mxu0
        %v1781 = vadd.f32 0.0, %v1780
        %v1782 = vpop.f32.mrb[0].mxu0
        %1783 = vmatprep.mubr.bf16.mxu0 0
        %1784 = vmatmul.mubr.bf16.gmra.mrb[0].mxu0 %v591
        %v1785 = vpop.f32.mrb[0].mxu0
        %v1786 = vadd.f32 0.0, %v1785
        %v1787 = vpop.f32.mrb[0].mxu0
        %v1788 = vpop.f32.mrb[0].mxu0
        %v1789 = vadd.f32 0.0, %v1788
        %v1790 = vpop.f32.mrb[0].mxu0
        %1791 = vdwg.mxu0
        %s1792 = sld [smem:[#allocation2 + $0x1]]
        %s1793 = sadd.f32 %s1792, 1.0
        %v1794 = vstv %s1793
        %v1795 = vmul.f32 %v1794, %v1550
        %v1796 = vmul.f32 %v1794, %v1551
        %v1797 = vmul.f32 %v1794, %v1552
        %v1798 = vmul.f32 %v1794, %v1553
        %v1799 = vmul.f32 %v1794, %v1554
        %v1800 = vmul.f32 %v1794, %v1555
        %v1801 = vmul.f32 %v1794, %v1556
        %v1802 = vmul.f32 %v1794, %v1557
        %v1803 = vmul.f32 %v1794, %v1558
        %v1804 = vmul.f32 %v1794, %v1559
        %v1805 = vmul.f32 %v1794, %v1560
        %v1806 = vmul.f32 %v1794, %v1561
        %v1807 = vmul.f32 %v1794, %v1562
        %v1808 = vmul.f32 %v1794, %v1563
        %v1809 = vmul.f32 %v1794, %v1564
        %v1810 = vmul.f32 %v1794, %v1565
        %v1811 = vmul.f32 %v1794, %v1566
        %v1812 = vmul.f32 %v1794, %v1567
        %v1813 = vmul.f32 %v1794, %v1568
        %v1814 = vmul.f32 %v1794, %v1569
        %v1815 = vmul.f32 %v1794, %v1570
        %v1816 = vmul.f32 %v1794, %v1571
        %v1817 = vmul.f32 %v1794, %v1572
        %v1818 = vmul.f32 %v1794, %v1573
        %v1819 = vmul.f32 %v1794, %v1574
        %v1820 = vmul.f32 %v1794, %v1575
        %v1821 = vmul.f32 %v1794, %v1576
        %v1822 = vmul.f32 %v1794, %v1577
        %v1823 = vmul.f32 %v1794, %v1578
        %v1824 = vmul.f32 %v1794, %v1579
        %v1825 = vmul.f32 %v1794, %v1580
        %v1826 = vmul.f32 %v1794, %v1581
        %v1827 = vadd.f32 %v1795, %v1633
        %v1828 = vadd.f32 %v1796, %v1636
        %v1829 = vadd.f32 %v1797, %v1641
        %v1830 = vadd.f32 %v1798, %v1644
        %v1831 = vadd.f32 %v1799, %v1649
        %v1832 = vadd.f32 %v1800, %v1652
        %v1833 = vadd.f32 %v1801, %v1657
        %v1834 = vadd.f32 %v1802, %v1660
        %v1835 = vadd.f32 %v1803, %v1665
        %v1836 = vadd.f32 %v1804, %v1668
        %v1837 = vadd.f32 %v1805, %v1673
        %v1838 = vadd.f32 %v1806, %v1676
        %v1839 = vadd.f32 %v1807, %v1681
        %v1840 = vadd.f32 %v1808, %v1684
        %v1841 = vadd.f32 %v1809, %v1689
        %v1842 = vadd.f32 %v1810, %v1692
        %v1843 = vadd.f32 %v1811, %v1730
        %v1844 = vadd.f32 %v1812, %v1733
        %v1845 = vadd.f32 %v1813, %v1738
        %v1846 = vadd.f32 %v1814, %v1741
        %v1847 = vadd.f32 %v1815, %v1746
        %v1848 = vadd.f32 %v1816, %v1749
        %v1849 = vadd.f32 %v1817, %v1754
        %v1850 = vadd.f32 %v1818, %v1757
        %v1851 = vadd.f32 %v1819, %v1762
        %v1852 = vadd.f32 %v1820, %v1765
        %v1853 = vadd.f32 %v1821, %v1770
        %v1854 = vadd.f32 %v1822, %v1773
        %v1855 = vadd.f32 %v1823, %v1778
        %v1856 = vadd.f32 %v1824, %v1781
        %v1857 = vadd.f32 %v1825, %v1786
        %v1858 = vadd.f32 %v1826, %v1789
        %v1859 = vpack.c.bf16 %v1828, %v1827
        %v1860 = vpack.c.bf16 %v1830, %v1829
        %v1861 = vpack.c.bf16 %v1832, %v1831
        %v1862 = vpack.c.bf16 %v1834, %v1833
        %v1863 = vpack.c.bf16 %v1836, %v1835
        %v1864 = vpack.c.bf16 %v1838, %v1837
        %v1865 = vpack.c.bf16 %v1840, %v1839
        %v1866 = vpack.c.bf16 %v1842, %v1841
        %v1867 = vpack.c.bf16 %v1844, %v1843
        %v1868 = vpack.c.bf16 %v1846, %v1845
        %v1869 = vpack.c.bf16 %v1848, %v1847
        %v1870 = vpack.c.bf16 %v1850, %v1849
        %v1871 = vpack.c.bf16 %v1852, %v1851
        %v1872 = vpack.c.bf16 %v1854, %v1853
        %v1873 = vpack.c.bf16 %v1856, %v1855
        %v1874 = vpack.c.bf16 %v1858, %v1857
        %s1875 = scalar_lea.vmem %s3, 64
        %v1876 = vld [vmem:[%s1875] sm:$0xf]
        %v1877 = vld [vmem:[%s1875 + $0x4] sm:$0xf]
        %v1878 = vld [vmem:[%s1875 + $0x8] sm:$0xf]
        %v1879 = vld [vmem:[%s1875 + $0xc] sm:$0xf]
        %v1880 = vld [vmem:[%s1875 + $0x10] sm:$0xf]
        %v1881 = vld [vmem:[%s1875 + $0x14] sm:$0xf]
        %v1882 = vld [vmem:[%s1875 + $0x18] sm:$0xf]
        %v1883 = vld [vmem:[%s1875 + $0x1c] sm:$0xf]
        %v1884 = vld [vmem:[%s1875 + $0x20] sm:$0xf]
        %v1885 = vld [vmem:[%s1875 + $0x24] sm:$0xf]
        %v1886 = vld [vmem:[%s1875 + $0x28] sm:$0xf]
        %v1887 = vld [vmem:[%s1875 + $0x2c] sm:$0xf]
        %v1888 = vld [vmem:[%s1875 + $0x30] sm:$0xf]
        %v1889 = vld [vmem:[%s1875 + $0x34] sm:$0xf]
        %v1890 = vld [vmem:[%s1875 + $0x38] sm:$0xf]
        %v1891 = vld [vmem:[%s1875 + $0x3c] sm:$0xf]
        %v1908 = vunpack.c.l.b16 %v1876
        %v1909 = vunpack.c.l.b16 %v1877
        %v1910 = vunpack.c.l.b16 %v1878
        %v1911 = vunpack.c.l.b16 %v1879
        %v1912 = vunpack.c.l.b16 %v1880
        %v1913 = vunpack.c.l.b16 %v1881
        %v1914 = vunpack.c.l.b16 %v1882
        %v1915 = vunpack.c.l.b16 %v1883
        %v1916 = vunpack.c.l.b16 %v1884
        %v1917 = vunpack.c.l.b16 %v1885
        %v1918 = vunpack.c.l.b16 %v1886
        %v1919 = vunpack.c.l.b16 %v1887
        %v1920 = vunpack.c.l.b16 %v1888
        %v1921 = vunpack.c.l.b16 %v1889
        %v1922 = vunpack.c.l.b16 %v1890
        %v1923 = vunpack.c.l.b16 %v1891
        %v1924 = vpack.c.b16 %v1909, %v1908
        %v1925 = vpack.c.b16 %v1911, %v1910
        %v1926 = vpack.c.b16 %v1913, %v1912
        %v1927 = vpack.c.b16 %v1915, %v1914
        %v1928 = vpack.c.b16 %v1917, %v1916
        %v1929 = vpack.c.b16 %v1919, %v1918
        %v1930 = vpack.c.b16 %v1921, %v1920
        %v1931 = vpack.c.b16 %v1923, %v1922
        %1940 = vmatprep.subr.bf16.mxu0 0
        %1941 = vmatpush1.bf16.msra.mxu0 %v1924
        %1942 = vmatprep.subr.bf16.mxu0 0
        %1943 = vmatpush1.bf16.msra.mxu0 %v1925
        %1944 = vmatprep.subr.bf16.mxu0 0
        %1945 = vmatpush1.bf16.msra.mxu0 %v1926
        %1946 = vmatprep.subr.bf16.mxu0 0
        %1947 = vmatpush1.bf16.msra.mxu0 %v1927
        %1948 = vmatprep.subr.bf16.mxu0 0
        %1949 = vmatpush1.bf16.msra.mxu0 %v1928
        %1950 = vmatprep.subr.bf16.mxu0 0
        %1951 = vmatpush1.bf16.msra.mxu0 %v1929
        %1952 = vmatprep.subr.bf16.mxu0 0
        %1953 = vmatpush1.bf16.msra.mxu0 %v1930
        %1954 = vmatprep.subr.bf16.mxu0 0
        %1955 = vmatpush1.bf16.msra.mxu0 %v1931
        %1956 = vmatprep.subr.bf16.mxu0 0
        %1957 = vmatpush1.bf16.msra.mxu0 0
        %1958 = vmatprep.subr.bf16.mxu0 0
        %1959 = vmatpush1.bf16.msra.mxu0 0
        %1960 = vmatprep.subr.bf16.mxu0 0
        %1961 = vmatpush1.bf16.msra.mxu0 0
        %1962 = vmatprep.subr.bf16.mxu0 0
        %1963 = vmatpush1.bf16.msra.mxu0 0
        %1964 = vmatprep.subr.bf16.mxu0 0
        %1965 = vmatpush1.bf16.msra.mxu0 0
        %1966 = vmatprep.subr.bf16.mxu0 0
        %1967 = vmatpush1.bf16.msra.mxu0 0
        %1968 = vmatprep.subr.bf16.mxu0 0
        %1969 = vmatpush1.bf16.msra.mxu0 0
        %1970 = vmatprep.subr.bf16.mxu0 0
        %1971 = vmatpush1.bf16.msra.mxu0 0
        %1972 = vmatprep.mubr.bf16.mxu0 0
        %1973 = vmatmul.mubr.bf16.gmra.mrb[0].mxu0 %v1859
        %v1974 = vpop.f32.mrb[0].mxu0
        %v1975 = vadd.f32 0.0, %v1974
        %v1976 = vpop.f32.mrb[0].mxu0
        %v1977 = vpop.f32.mrb[0].mxu0
        %v1978 = vadd.f32 0.0, %v1977
        %v1979 = vpop.f32.mrb[0].mxu0
        %1980 = vmatprep.mubr.bf16.mxu0 0
        %1981 = vmatmul.mubr.bf16.gmra.mrb[0].mxu0 %v1860
        %v1982 = vpop.f32.mrb[0].mxu0
        %v1983 = vadd.f32 0.0, %v1982
        %v1984 = vpop.f32.mrb[0].mxu0
        %v1985 = vpop.f32.mrb[0].mxu0
        %v1986 = vadd.f32 0.0, %v1985
        %v1987 = vpop.f32.mrb[0].mxu0
        %1988 = vmatprep.mubr.bf16.mxu0 0
        %1989 = vmatmul.mubr.bf16.gmra.mrb[0].mxu0 %v1861
        %v1990 = vpop.f32.mrb[0].mxu0
        %v1991 = vadd.f32 0.0, %v1990
        %v1992 = vpop.f32.mrb[0].mxu0
        %v1993 = vpop.f32.mrb[0].mxu0
        %v1994 = vadd.f32 0.0, %v1993
        %v1995 = vpop.f32.mrb[0].mxu0
        %1996 = vmatprep.mubr.bf16.mxu0 0
        %1997 = vmatmul.mubr.bf16.gmra.mrb[0].mxu0 %v1862
        %v1998 = vpop.f32.mrb[0].mxu0
        %v1999 = vadd.f32 0.0, %v1998
        %v2000 = vpop.f32.mrb[0].mxu0
        %v2001 = vpop.f32.mrb[0].mxu0
        %v2002 = vadd.f32 0.0, %v2001
        %v2003 = vpop.f32.mrb[0].mxu0
        %2004 = vmatprep.mubr.bf16.mxu0 0
        %2005 = vmatmul.mubr.bf16.gmra.mrb[0].mxu0 %v1863
        %v2006 = vpop.f32.mrb[0].mxu0
        %v2007 = vadd.f32 0.0, %v2006
        %v2008 = vpop.f32.mrb[0].mxu0
        %v2009 = vpop.f32.mrb[0].mxu0
        %v2010 = vadd.f32 0.0, %v2009
        %v2011 = vpop.f32.mrb[0].mxu0
        %2012 = vmatprep.mubr.bf16.mxu0 0
        %2013 = vmatmul.mubr.bf16.gmra.mrb[0].mxu0 %v1864
        %v2014 = vpop.f32.mrb[0].mxu0
        %v2015 = vadd.f32 0.0, %v2014
        %v2016 = vpop.f32.mrb[0].mxu0
        %v2017 = vpop.f32.mrb[0].mxu0
        %v2018 = vadd.f32 0.0, %v2017
        %v2019 = vpop.f32.mrb[0].mxu0
        %2020 = vmatprep.mubr.bf16.mxu0 0
        %2021 = vmatmul.mubr.bf16.gmra.mrb[0].mxu0 %v1865
        %v2022 = vpop.f32.mrb[0].mxu0
        %v2023 = vadd.f32 0.0, %v2022
        %v2024 = vpop.f32.mrb[0].mxu0
        %v2025 = vpop.f32.mrb[0].mxu0
        %v2026 = vadd.f32 0.0, %v2025
        %v2027 = vpop.f32.mrb[0].mxu0
        %2028 = vmatprep.mubr.bf16.mxu0 0
        %2029 = vmatmul.mubr.bf16.gmra.mrb[0].mxu0 %v1866
        %v2030 = vpop.f32.mrb[0].mxu0
        %v2031 = vadd.f32 0.0, %v2030
        %v2032 = vpop.f32.mrb[0].mxu0
        %v2033 = vpop.f32.mrb[0].mxu0
        %v2034 = vadd.f32 0.0, %v2033
        %v2035 = vpop.f32.mrb[0].mxu0
        %2036 = vmatprep.mubr.bf16.mxu0 0
        %2037 = vmatmul.mubr.bf16.gmra.mrb[0].mxu0 %v1867
        %v2038 = vpop.f32.mrb[0].mxu0
        %v2039 = vadd.f32 0.0, %v2038
        %v2040 = vpop.f32.mrb[0].mxu0
        %v2041 = vpop.f32.mrb[0].mxu0
        %v2042 = vadd.f32 0.0, %v2041
        %v2043 = vpop.f32.mrb[0].mxu0
        %2044 = vmatprep.mubr.bf16.mxu0 0
        %2045 = vmatmul.mubr.bf16.gmra.mrb[0].mxu0 %v1868
        %v2046 = vpop.f32.mrb[0].mxu0
        %v2047 = vadd.f32 0.0, %v2046
        %v2048 = vpop.f32.mrb[0].mxu0
        %v2049 = vpop.f32.mrb[0].mxu0
        %v2050 = vadd.f32 0.0, %v2049
        %v2051 = vpop.f32.mrb[0].mxu0
        %2052 = vmatprep.mubr.bf16.mxu0 0
        %2053 = vmatmul.mubr.bf16.gmra.mrb[0].mxu0 %v1869
        %v2054 = vpop.f32.mrb[0].mxu0
        %v2055 = vadd.f32 0.0, %v2054
        %v2056 = vpop.f32.mrb[0].mxu0
        %v2057 = vpop.f32.mrb[0].mxu0
        %v2058 = vadd.f32 0.0, %v2057
        %v2059 = vpop.f32.mrb[0].mxu0
        %2060 = vmatprep.mubr.bf16.mxu0 0
        %2061 = vmatmul.mubr.bf16.gmra.mrb[0].mxu0 %v1870
        %v2062 = vpop.f32.mrb[0].mxu0
        %v2063 = vadd.f32 0.0, %v2062
        %v2064 = vpop.f32.mrb[0].mxu0
        %v2065 = vpop.f32.mrb[0].mxu0
        %v2066 = vadd.f32 0.0, %v2065
        %v2067 = vpop.f32.mrb[0].mxu0
        %2068 = vmatprep.mubr.bf16.mxu0 0
        %2069 = vmatmul.mubr.bf16.gmra.mrb[0].mxu0 %v1871
        %v2070 = vpop.f32.mrb[0].mxu0
        %v2071 = vadd.f32 0.0, %v2070
        %v2072 = vpop.f32.mrb[0].mxu0
        %v2073 = vpop.f32.mrb[0].mxu0
        %v2074 = vadd.f32 0.0, %v2073
        %v2075 = vpop.f32.mrb[0].mxu0
        %2076 = vmatprep.mubr.bf16.mxu0 0
        %2077 = vmatmul.mubr.bf16.gmra.mrb[0].mxu0 %v1872
        %v2078 = vpop.f32.mrb[0].mxu0
        %v2079 = vadd.f32 0.0, %v2078
        %v2080 = vpop.f32.mrb[0].mxu0
        %v2081 = vpop.f32.mrb[0].mxu0
        %v2082 = vadd.f32 0.0, %v2081
        %v2083 = vpop.f32.mrb[0].mxu0
        %2084 = vmatprep.mubr.bf16.mxu0 0
        %2085 = vmatmul.mubr.bf16.gmra.mrb[0].mxu0 %v1873
        %v2086 = vpop.f32.mrb[0].mxu0
        %v2087 = vadd.f32 0.0, %v2086
        %v2088 = vpop.f32.mrb[0].mxu0
        %v2089 = vpop.f32.mrb[0].mxu0
        %v2090 = vadd.f32 0.0, %v2089
        %v2091 = vpop.f32.mrb[0].mxu0
        %2092 = vmatprep.mubr.bf16.mxu0 0
        %2093 = vmatmul.mubr.bf16.gmra.mrb[0].mxu0 %v1874
        %v2094 = vpop.f32.mrb[0].mxu0
        %v2095 = vadd.f32 0.0, %v2094
        %v2096 = vpop.f32.mrb[0].mxu0
        %v2097 = vpop.f32.mrb[0].mxu0
        %v2098 = vadd.f32 0.0, %v2097
        %v2099 = vpop.f32.mrb[0].mxu0
        %2100 = vdwg.mxu0
        %v2101 = vmax.f32 %v1975, 0.0
        %v2102 = vmax.f32 %v1978, 0.0
        %v2103 = vmax.f32 %v1983, 0.0
        %v2104 = vmax.f32 %v1986, 0.0
        %v2105 = vmax.f32 %v1991, 0.0
        %v2106 = vmax.f32 %v1994, 0.0
        %v2107 = vmax.f32 %v1999, 0.0
        %v2108 = vmax.f32 %v2002, 0.0
        %v2109 = vmax.f32 %v2007, 0.0
        %v2110 = vmax.f32 %v2010, 0.0
        %v2111 = vmax.f32 %v2015, 0.0
        %v2112 = vmax.f32 %v2018, 0.0
        %v2113 = vmax.f32 %v2023, 0.0
        %v2114 = vmax.f32 %v2026, 0.0
        %v2115 = vmax.f32 %v2031, 0.0
        %v2116 = vmax.f32 %v2034, 0.0
        %v2117 = vmax.f32 %v2039, 0.0
        %v2118 = vmax.f32 %v2042, 0.0
        %v2119 = vmax.f32 %v2047, 0.0
        %v2120 = vmax.f32 %v2050, 0.0
        %v2121 = vmax.f32 %v2055, 0.0
        %v2122 = vmax.f32 %v2058, 0.0
        %v2123 = vmax.f32 %v2063, 0.0
        %v2124 = vmax.f32 %v2066, 0.0
        %v2125 = vmax.f32 %v2071, 0.0
        %v2126 = vmax.f32 %v2074, 0.0
        %v2127 = vmax.f32 %v2079, 0.0
        %v2128 = vmax.f32 %v2082, 0.0
        %v2129 = vmax.f32 %v2087, 0.0
        %v2130 = vmax.f32 %v2090, 0.0
        %v2131 = vmax.f32 %v2095, 0.0
        %v2132 = vmax.f32 %v2098, 0.0
        %v2133 = vpack.c.bf16 %v2102, %v2101
        %v2134 = vpack.c.bf16 %v2104, %v2103
        %v2135 = vpack.c.bf16 %v2106, %v2105
        %v2136 = vpack.c.bf16 %v2108, %v2107
        %v2137 = vpack.c.bf16 %v2110, %v2109
        %v2138 = vpack.c.bf16 %v2112, %v2111
        %v2139 = vpack.c.bf16 %v2114, %v2113
        %v2140 = vpack.c.bf16 %v2116, %v2115
        %v2141 = vpack.c.bf16 %v2118, %v2117
        %v2142 = vpack.c.bf16 %v2120, %v2119
        %v2143 = vpack.c.bf16 %v2122, %v2121
        %v2144 = vpack.c.bf16 %v2124, %v2123
        %v2145 = vpack.c.bf16 %v2126, %v2125
        %v2146 = vpack.c.bf16 %v2128, %v2127
        %v2147 = vpack.c.bf16 %v2130, %v2129
        %v2148 = vpack.c.bf16 %v2132, %v2131
        %s2149 = scalar_lea.vmem %s4, 64
        %v2150 = vld [vmem:[%s2149] sm:$0xf]
        %v2151 = vld [vmem:[%s2149 + $0x4] sm:$0xf]
        %v2152 = vld [vmem:[%s2149 + $0x8] sm:$0xf]
        %v2153 = vld [vmem:[%s2149 + $0xc] sm:$0xf]
        %v2154 = vld [vmem:[%s2149 + $0x10] sm:$0xf]
        %v2155 = vld [vmem:[%s2149 + $0x14] sm:$0xf]
        %v2156 = vld [vmem:[%s2149 + $0x18] sm:$0xf]
        %v2157 = vld [vmem:[%s2149 + $0x1c] sm:$0xf]
        %v2158 = vld [vmem:[%s2149 + $0x20] sm:$0xf]
        %v2159 = vld [vmem:[%s2149 + $0x24] sm:$0xf]
        %v2160 = vld [vmem:[%s2149 + $0x28] sm:$0xf]
        %v2161 = vld [vmem:[%s2149 + $0x2c] sm:$0xf]
        %v2162 = vld [vmem:[%s2149 + $0x30] sm:$0xf]
        %v2163 = vld [vmem:[%s2149 + $0x34] sm:$0xf]
        %v2164 = vld [vmem:[%s2149 + $0x38] sm:$0xf]
        %v2165 = vld [vmem:[%s2149 + $0x3c] sm:$0xf]
        %v2182 = vunpack.c.l.b16 %v2150
        %v2183 = vunpack.c.l.b16 %v2151
        %v2184 = vunpack.c.l.b16 %v2152
        %v2185 = vunpack.c.l.b16 %v2153
        %v2186 = vunpack.c.l.b16 %v2154
        %v2187 = vunpack.c.l.b16 %v2155
        %v2188 = vunpack.c.l.b16 %v2156
        %v2189 = vunpack.c.l.b16 %v2157
        %v2190 = vunpack.c.l.b16 %v2158
        %v2191 = vunpack.c.l.b16 %v2159
        %v2192 = vunpack.c.l.b16 %v2160
        %v2193 = vunpack.c.l.b16 %v2161
        %v2194 = vunpack.c.l.b16 %v2162
        %v2195 = vunpack.c.l.b16 %v2163
        %v2196 = vunpack.c.l.b16 %v2164
        %v2197 = vunpack.c.l.b16 %v2165
        %v2198 = vpack.c.b16 %v2183, %v2182
        %v2199 = vpack.c.b16 %v2185, %v2184
        %v2200 = vpack.c.b16 %v2187, %v2186
        %v2201 = vpack.c.b16 %v2189, %v2188
        %v2202 = vpack.c.b16 %v2191, %v2190
        %v2203 = vpack.c.b16 %v2193, %v2192
        %v2204 = vpack.c.b16 %v2195, %v2194
        %v2205 = vpack.c.b16 %v2197, %v2196
        %2214 = vmatprep.subr.bf16.mxu0 0
        %2215 = vmatpush1.bf16.msra.mxu0 %v2198
        %2216 = vmatprep.subr.bf16.mxu0 0
        %2217 = vmatpush1.bf16.msra.mxu0 %v2199
        %2218 = vmatprep.subr.bf16.mxu0 0
        %2219 = vmatpush1.bf16.msra.mxu0 %v2200
        %2220 = vmatprep.subr.bf16.mxu0 0
        %2221 = vmatpush1.bf16.msra.mxu0 %v2201
        %2222 = vmatprep.subr.bf16.mxu0 0
        %2223 = vmatpush1.bf16.msra.mxu0 %v2202
        %2224 = vmatprep.subr.bf16.mxu0 0
        %2225 = vmatpush1.bf16.msra.mxu0 %v2203
        %2226 = vmatprep.subr.bf16.mxu0 0
        %2227 = vmatpush1.bf16.msra.mxu0 %v2204
        %2228 = vmatprep.subr.bf16.mxu0 0
        %2229 = vmatpush1.bf16.msra.mxu0 %v2205
        %2230 = vmatprep.subr.bf16.mxu0 0
        %2231 = vmatpush1.bf16.msra.mxu0 0
        %2232 = vmatprep.subr.bf16.mxu0 0
        %2233 = vmatpush1.bf16.msra.mxu0 0
        %2234 = vmatprep.subr.bf16.mxu0 0
        %2235 = vmatpush1.bf16.msra.mxu0 0
        %2236 = vmatprep.subr.bf16.mxu0 0
        %2237 = vmatpush1.bf16.msra.mxu0 0
        %2238 = vmatprep.subr.bf16.mxu0 0
        %2239 = vmatpush1.bf16.msra.mxu0 0
        %2240 = vmatprep.subr.bf16.mxu0 0
        %2241 = vmatpush1.bf16.msra.mxu0 0
        %2242 = vmatprep.subr.bf16.mxu0 0
        %2243 = vmatpush1.bf16.msra.mxu0 0
        %2244 = vmatprep.subr.bf16.mxu0 0
        %2245 = vmatpush1.bf16.msra.mxu0 0
        %2246 = vmatprep.mubr.bf16.mxu0 0
        %2247 = vmatmul.mubr.bf16.gmra.mrb[0].mxu0 %v2133
        %v2248 = vpop.f32.mrb[0].mxu0
        %v2249 = vadd.f32 0.0, %v2248
        %v2250 = vpop.f32.mrb[0].mxu0
        %v2251 = vpop.f32.mrb[0].mxu0
        %v2252 = vadd.f32 0.0, %v2251
        %v2253 = vpop.f32.mrb[0].mxu0
        %2254 = vmatprep.mubr.bf16.mxu0 0
        %2255 = vmatmul.mubr.bf16.gmra.mrb[0].mxu0 %v2134
        %v2256 = vpop.f32.mrb[0].mxu0
        %v2257 = vadd.f32 0.0, %v2256
        %v2258 = vpop.f32.mrb[0].mxu0
        %v2259 = vpop.f32.mrb[0].mxu0
        %v2260 = vadd.f32 0.0, %v2259
        %v2261 = vpop.f32.mrb[0].mxu0
        %2262 = vmatprep.mubr.bf16.mxu0 0
        %2263 = vmatmul.mubr.bf16.gmra.mrb[0].mxu0 %v2135
        %v2264 = vpop.f32.mrb[0].mxu0
        %v2265 = vadd.f32 0.0, %v2264
        %v2266 = vpop.f32.mrb[0].mxu0
        %v2267 = vpop.f32.mrb[0].mxu0
        %v2268 = vadd.f32 0.0, %v2267
        %v2269 = vpop.f32.mrb[0].mxu0
        %2270 = vmatprep.mubr.bf16.mxu0 0
        %2271 = vmatmul.mubr.bf16.gmra.mrb[0].mxu0 %v2136
        %v2272 = vpop.f32.mrb[0].mxu0
        %v2273 = vadd.f32 0.0, %v2272
        %v2274 = vpop.f32.mrb[0].mxu0
        %v2275 = vpop.f32.mrb[0].mxu0
        %v2276 = vadd.f32 0.0, %v2275
        %v2277 = vpop.f32.mrb[0].mxu0
        %2278 = vmatprep.mubr.bf16.mxu0 0
        %2279 = vmatmul.mubr.bf16.gmra.mrb[0].mxu0 %v2137
        %v2280 = vpop.f32.mrb[0].mxu0
        %v2281 = vadd.f32 0.0, %v2280
        %v2282 = vpop.f32.mrb[0].mxu0
        %v2283 = vpop.f32.mrb[0].mxu0
        %v2284 = vadd.f32 0.0, %v2283
        %v2285 = vpop.f32.mrb[0].mxu0
        %2286 = vmatprep.mubr.bf16.mxu0 0
        %2287 = vmatmul.mubr.bf16.gmra.mrb[0].mxu0 %v2138
        %v2288 = vpop.f32.mrb[0].mxu0
        %v2289 = vadd.f32 0.0, %v2288
        %v2290 = vpop.f32.mrb[0].mxu0
        %v2291 = vpop.f32.mrb[0].mxu0
        %v2292 = vadd.f32 0.0, %v2291
        %v2293 = vpop.f32.mrb[0].mxu0
        %2294 = vmatprep.mubr.bf16.mxu0 0
        %2295 = vmatmul.mubr.bf16.gmra.mrb[0].mxu0 %v2139
        %v2296 = vpop.f32.mrb[0].mxu0
        %v2297 = vadd.f32 0.0, %v2296
        %v2298 = vpop.f32.mrb[0].mxu0
        %v2299 = vpop.f32.mrb[0].mxu0
        %v2300 = vadd.f32 0.0, %v2299
        %v2301 = vpop.f32.mrb[0].mxu0
        %2302 = vmatprep.mubr.bf16.mxu0 0
        %2303 = vmatmul.mubr.bf16.gmra.mrb[0].mxu0 %v2140
        %v2304 = vpop.f32.mrb[0].mxu0
        %v2305 = vadd.f32 0.0, %v2304
        %v2306 = vpop.f32.mrb[0].mxu0
        %v2307 = vpop.f32.mrb[0].mxu0
        %v2308 = vadd.f32 0.0, %v2307
        %v2309 = vpop.f32.mrb[0].mxu0
        %2310 = vmatprep.mubr.bf16.mxu0 0
        %2311 = vmatmul.mubr.bf16.gmra.mrb[0].mxu0 %v2141
        %v2312 = vpop.f32.mrb[0].mxu0
        %v2313 = vadd.f32 0.0, %v2312
        %v2314 = vpop.f32.mrb[0].mxu0
        %v2315 = vpop.f32.mrb[0].mxu0
        %v2316 = vadd.f32 0.0, %v2315
        %v2317 = vpop.f32.mrb[0].mxu0
        %2318 = vmatprep.mubr.bf16.mxu0 0
        %2319 = vmatmul.mubr.bf16.gmra.mrb[0].mxu0 %v2142
        %v2320 = vpop.f32.mrb[0].mxu0
        %v2321 = vadd.f32 0.0, %v2320
        %v2322 = vpop.f32.mrb[0].mxu0
        %v2323 = vpop.f32.mrb[0].mxu0
        %v2324 = vadd.f32 0.0, %v2323
        %v2325 = vpop.f32.mrb[0].mxu0
        %2326 = vmatprep.mubr.bf16.mxu0 0
        %2327 = vmatmul.mubr.bf16.gmra.mrb[0].mxu0 %v2143
        %v2328 = vpop.f32.mrb[0].mxu0
        %v2329 = vadd.f32 0.0, %v2328
        %v2330 = vpop.f32.mrb[0].mxu0
        %v2331 = vpop.f32.mrb[0].mxu0
        %v2332 = vadd.f32 0.0, %v2331
        %v2333 = vpop.f32.mrb[0].mxu0
        %2334 = vmatprep.mubr.bf16.mxu0 0
        %2335 = vmatmul.mubr.bf16.gmra.mrb[0].mxu0 %v2144
        %v2336 = vpop.f32.mrb[0].mxu0
        %v2337 = vadd.f32 0.0, %v2336
        %v2338 = vpop.f32.mrb[0].mxu0
        %v2339 = vpop.f32.mrb[0].mxu0
        %v2340 = vadd.f32 0.0, %v2339
        %v2341 = vpop.f32.mrb[0].mxu0
        %2342 = vmatprep.mubr.bf16.mxu0 0
        %2343 = vmatmul.mubr.bf16.gmra.mrb[0].mxu0 %v2145
        %v2344 = vpop.f32.mrb[0].mxu0
        %v2345 = vadd.f32 0.0, %v2344
        %v2346 = vpop.f32.mrb[0].mxu0
        %v2347 = vpop.f32.mrb[0].mxu0
        %v2348 = vadd.f32 0.0, %v2347
        %v2349 = vpop.f32.mrb[0].mxu0
        %2350 = vmatprep.mubr.bf16.mxu0 0
        %2351 = vmatmul.mubr.bf16.gmra.mrb[0].mxu0 %v2146
        %v2352 = vpop.f32.mrb[0].mxu0
        %v2353 = vadd.f32 0.0, %v2352
        %v2354 = vpop.f32.mrb[0].mxu0
        %v2355 = vpop.f32.mrb[0].mxu0
        %v2356 = vadd.f32 0.0, %v2355
        %v2357 = vpop.f32.mrb[0].mxu0
        %2358 = vmatprep.mubr.bf16.mxu0 0
        %2359 = vmatmul.mubr.bf16.gmra.mrb[0].mxu0 %v2147
        %v2360 = vpop.f32.mrb[0].mxu0
        %v2361 = vadd.f32 0.0, %v2360
        %v2362 = vpop.f32.mrb[0].mxu0
        %v2363 = vpop.f32.mrb[0].mxu0
        %v2364 = vadd.f32 0.0, %v2363
        %v2365 = vpop.f32.mrb[0].mxu0
        %2366 = vmatprep.mubr.bf16.mxu0 0
        %2367 = vmatmul.mubr.bf16.gmra.mrb[0].mxu0 %v2148
        %v2368 = vpop.f32.mrb[0].mxu0
        %v2369 = vadd.f32 0.0, %v2368
        %v2370 = vpop.f32.mrb[0].mxu0
        %v2371 = vpop.f32.mrb[0].mxu0
        %v2372 = vadd.f32 0.0, %v2371
        %v2373 = vpop.f32.mrb[0].mxu0
        %2374 = vdwg.mxu0
        %v2375 = vmax.f32 %v2249, 0.0
        %v2376 = vmax.f32 %v2252, 0.0
        %v2377 = vmax.f32 %v2257, 0.0
        %v2378 = vmax.f32 %v2260, 0.0
        %v2379 = vmax.f32 %v2265, 0.0
        %v2380 = vmax.f32 %v2268, 0.0
        %v2381 = vmax.f32 %v2273, 0.0
        %v2382 = vmax.f32 %v2276, 0.0
        %v2383 = vmax.f32 %v2281, 0.0
        %v2384 = vmax.f32 %v2284, 0.0
        %v2385 = vmax.f32 %v2289, 0.0
        %v2386 = vmax.f32 %v2292, 0.0
        %v2387 = vmax.f32 %v2297, 0.0
        %v2388 = vmax.f32 %v2300, 0.0
        %v2389 = vmax.f32 %v2305, 0.0
        %v2390 = vmax.f32 %v2308, 0.0
        %v2391 = vmax.f32 %v2313, 0.0
        %v2392 = vmax.f32 %v2316, 0.0
        %v2393 = vmax.f32 %v2321, 0.0
        %v2394 = vmax.f32 %v2324, 0.0
        %v2395 = vmax.f32 %v2329, 0.0
        %v2396 = vmax.f32 %v2332, 0.0
        %v2397 = vmax.f32 %v2337, 0.0
        %v2398 = vmax.f32 %v2340, 0.0
        %v2399 = vmax.f32 %v2345, 0.0
        %v2400 = vmax.f32 %v2348, 0.0
        %v2401 = vmax.f32 %v2353, 0.0
        %v2402 = vmax.f32 %v2356, 0.0
        %v2403 = vmax.f32 %v2361, 0.0
        %v2404 = vmax.f32 %v2364, 0.0
        %v2405 = vmax.f32 %v2369, 0.0
        %v2406 = vmax.f32 %v2372, 0.0
        %v2407 = vmul.f32 %v2375, %v2375
        %v2408 = vmul.f32 %v2376, %v2376
        %v2409 = vmul.f32 %v2377, %v2377
        %v2410 = vmul.f32 %v2378, %v2378
        %v2411 = vmul.f32 %v2379, %v2379
        %v2412 = vmul.f32 %v2380, %v2380
        %v2413 = vmul.f32 %v2381, %v2381
        %v2414 = vmul.f32 %v2382, %v2382
        %v2415 = vmul.f32 %v2383, %v2383
        %v2416 = vmul.f32 %v2384, %v2384
        %v2417 = vmul.f32 %v2385, %v2385
        %v2418 = vmul.f32 %v2386, %v2386
        %v2419 = vmul.f32 %v2387, %v2387
        %v2420 = vmul.f32 %v2388, %v2388
        %v2421 = vmul.f32 %v2389, %v2389
        %v2422 = vmul.f32 %v2390, %v2390
        %v2423 = vmul.f32 %v2391, %v2391
        %v2424 = vmul.f32 %v2392, %v2392
        %v2425 = vmul.f32 %v2393, %v2393
        %v2426 = vmul.f32 %v2394, %v2394
        %v2427 = vmul.f32 %v2395, %v2395
        %v2428 = vmul.f32 %v2396, %v2396
        %v2429 = vmul.f32 %v2397, %v2397
        %v2430 = vmul.f32 %v2398, %v2398
        %v2431 = vmul.f32 %v2399, %v2399
        %v2432 = vmul.f32 %v2400, %v2400
        %v2433 = vmul.f32 %v2401, %v2401
        %v2434 = vmul.f32 %v2402, %v2402
        %v2435 = vmul.f32 %v2403, %v2403
        %v2436 = vmul.f32 %v2404, %v2404
        %v2437 = vmul.f32 %v2405, %v2405
        %v2438 = vmul.f32 %v2406, %v2406
        %v2439 = vadd.f32 %v2375, %v2376
        %v2440 = vadd.f32 %v2439, %v2377
        %v2441 = vadd.f32 %v2440, %v2378
        %v2442 = vadd.f32 %v2441, %v2379
        %v2443 = vadd.f32 %v2442, %v2380
        %v2444 = vadd.f32 %v2443, %v2381
        %v2445 = vadd.f32 %v2444, %v2382
        %v2446 = vadd.f32 %v2445, %v2383
        %v2447 = vadd.f32 %v2446, %v2384
        %v2448 = vadd.f32 %v2447, %v2385
        %v2449 = vadd.f32 %v2448, %v2386
        %v2450 = vadd.f32 %v2449, %v2387
        %v2451 = vadd.f32 %v2450, %v2388
        %v2452 = vadd.f32 %v2451, %v2389
        %v2453 = vadd.f32 %v2452, %v2390
        %v2454 = vrot.slane %v2453, 4
        %v2455 = vadd.f32 %v2453, %v2454
        %v2456 = vrot.slane %v2455, 2
        %v2457 = vadd.f32 %v2455, %v2456
        %v2458 = vrot.slane %v2457, 1
        %v2459 = vadd.f32 %v2457, %v2458
        %v2460 = vadd.f32 %v2407, %v2408
        %v2461 = vadd.f32 %v2460, %v2409
        %v2462 = vadd.f32 %v2461, %v2410
        %v2463 = vadd.f32 %v2462, %v2411
        %v2464 = vadd.f32 %v2463, %v2412
        %v2465 = vadd.f32 %v2464, %v2413
        %v2466 = vadd.f32 %v2465, %v2414
        %v2467 = vadd.f32 %v2466, %v2415
        %v2468 = vadd.f32 %v2467, %v2416
        %v2469 = vadd.f32 %v2468, %v2417
        %v2470 = vadd.f32 %v2469, %v2418
        %v2471 = vadd.f32 %v2470, %v2419
        %v2472 = vadd.f32 %v2471, %v2420
        %v2473 = vadd.f32 %v2472, %v2421
        %v2474 = vadd.f32 %v2473, %v2422
        %v2475 = vrot.slane %v2474, 4
        %v2476 = vadd.f32 %v2474, %v2475
        %v2477 = vrot.slane %v2476, 2
        %v2478 = vadd.f32 %v2476, %v2477
        %v2479 = vrot.slane %v2478, 1
        %v2480 = vadd.f32 %v2478, %v2479
        %v2481 = vadd.f32 %v2391, %v2392
        %v2482 = vadd.f32 %v2481, %v2393
        %v2483 = vadd.f32 %v2482, %v2394
        %v2484 = vadd.f32 %v2483, %v2395
        %v2485 = vadd.f32 %v2484, %v2396
        %v2486 = vadd.f32 %v2485, %v2397
        %v2487 = vadd.f32 %v2486, %v2398
        %v2488 = vadd.f32 %v2487, %v2399
        %v2489 = vadd.f32 %v2488, %v2400
        %v2490 = vadd.f32 %v2489, %v2401
        %v2491 = vadd.f32 %v2490, %v2402
        %v2492 = vadd.f32 %v2491, %v2403
        %v2493 = vadd.f32 %v2492, %v2404
        %v2494 = vadd.f32 %v2493, %v2405
        %v2495 = vadd.f32 %v2494, %v2406
        %v2496 = vrot.slane %v2495, 4
        %v2497 = vadd.f32 %v2495, %v2496
        %v2498 = vrot.slane %v2497, 2
        %v2499 = vadd.f32 %v2497, %v2498
        %v2500 = vrot.slane %v2499, 1
        %v2501 = vadd.f32 %v2499, %v2500
        %v2502 = vadd.f32 %v2423, %v2424
        %v2503 = vadd.f32 %v2502, %v2425
        %v2504 = vadd.f32 %v2503, %v2426
        %v2505 = vadd.f32 %v2504, %v2427
        %v2506 = vadd.f32 %v2505, %v2428
        %v2507 = vadd.f32 %v2506, %v2429
        %v2508 = vadd.f32 %v2507, %v2430
        %v2509 = vadd.f32 %v2508, %v2431
        %v2510 = vadd.f32 %v2509, %v2432
        %v2511 = vadd.f32 %v2510, %v2433
        %v2512 = vadd.f32 %v2511, %v2434
        %v2513 = vadd.f32 %v2512, %v2435
        %v2514 = vadd.f32 %v2513, %v2436
        %v2515 = vadd.f32 %v2514, %v2437
        %v2516 = vadd.f32 %v2515, %v2438
        %v2517 = vrot.slane %v2516, 4
        %v2518 = vadd.f32 %v2516, %v2517
        %v2519 = vrot.slane %v2518, 2
        %v2520 = vadd.f32 %v2518, %v2519
        %v2521 = vrot.slane %v2520, 1
        %v2522 = vadd.f32 %v2520, %v2521
        %v2523 = vmul.f32 %v2459, 0.0078125
        %v2524 = vmul.f32 %v2501, 0.0078125
        %v2525 = vmul.f32 %v2480, 0.0078125
        %v2526 = vmul.f32 %v2522, 0.0078125
        %v2527 = vmul.f32 %v2523, %v2523
        %v2528 = vmul.f32 %v2524, %v2524
        %v2529 = vsub.f32 %v2525, %v2527
        %v2530 = vsub.f32 %v2526, %v2528
        %v2531 = vmax.f32 %v2529, 0.0
        %v2532 = vmax.f32 %v2530, 0.0
        %v2533 = vsub.f32 %v2375, %v2523
        %v2534 = vsub.f32 %v2376, %v2523
        %v2535 = vsub.f32 %v2377, %v2523
        %v2536 = vsub.f32 %v2378, %v2523
        %v2537 = vsub.f32 %v2379, %v2523
        %v2538 = vsub.f32 %v2380, %v2523
        %v2539 = vsub.f32 %v2381, %v2523
        %v2540 = vsub.f32 %v2382, %v2523
        %v2541 = vsub.f32 %v2383, %v2523
        %v2542 = vsub.f32 %v2384, %v2523
        %v2543 = vsub.f32 %v2385, %v2523
        %v2544 = vsub.f32 %v2386, %v2523
        %v2545 = vsub.f32 %v2387, %v2523
        %v2546 = vsub.f32 %v2388, %v2523
        %v2547 = vsub.f32 %v2389, %v2523
        %v2548 = vsub.f32 %v2390, %v2523
        %v2549 = vsub.f32 %v2391, %v2524
        %v2550 = vsub.f32 %v2392, %v2524
        %v2551 = vsub.f32 %v2393, %v2524
        %v2552 = vsub.f32 %v2394, %v2524
        %v2553 = vsub.f32 %v2395, %v2524
        %v2554 = vsub.f32 %v2396, %v2524
        %v2555 = vsub.f32 %v2397, %v2524
        %v2556 = vsub.f32 %v2398, %v2524
        %v2557 = vsub.f32 %v2399, %v2524
        %v2558 = vsub.f32 %v2400, %v2524
        %v2559 = vsub.f32 %v2401, %v2524
        %v2560 = vsub.f32 %v2402, %v2524
        %v2561 = vsub.f32 %v2403, %v2524
        %v2562 = vsub.f32 %v2404, %v2524
        %v2563 = vsub.f32 %v2405, %v2524
        %v2564 = vsub.f32 %v2406, %v2524
        %v2565 = vadd.f32 %v2531, 1e-05
        %v2566 = vadd.f32 %v2532, 1e-05
        %v2567 = vrsqrt.pop %v2565
        %v2568 = vrsqrt.pop %v2566
        %v2569 = vmul.f32 %v2533, %v2567
        %v2570 = vmul.f32 %v2534, %v2567
        %v2571 = vmul.f32 %v2535, %v2567
        %v2572 = vmul.f32 %v2536, %v2567
        %v2573 = vmul.f32 %v2537, %v2567
        %v2574 = vmul.f32 %v2538, %v2567
        %v2575 = vmul.f32 %v2539, %v2567
        %v2576 = vmul.f32 %v2540, %v2567
        %v2577 = vmul.f32 %v2541, %v2567
        %v2578 = vmul.f32 %v2542, %v2567
        %v2579 = vmul.f32 %v2543, %v2567
        %v2580 = vmul.f32 %v2544, %v2567
        %v2581 = vmul.f32 %v2545, %v2567
        %v2582 = vmul.f32 %v2546, %v2567
        %v2583 = vmul.f32 %v2547, %v2567
        %v2584 = vmul.f32 %v2548, %v2567
        %v2585 = vmul.f32 %v2549, %v2568
        %v2586 = vmul.f32 %v2550, %v2568
        %v2587 = vmul.f32 %v2551, %v2568
        %v2588 = vmul.f32 %v2552, %v2568
        %v2589 = vmul.f32 %v2553, %v2568
        %v2590 = vmul.f32 %v2554, %v2568
        %v2591 = vmul.f32 %v2555, %v2568
        %v2592 = vmul.f32 %v2556, %v2568
        %v2593 = vmul.f32 %v2557, %v2568
        %v2594 = vmul.f32 %v2558, %v2568
        %v2595 = vmul.f32 %v2559, %v2568
        %v2596 = vmul.f32 %v2560, %v2568
        %v2597 = vmul.f32 %v2561, %v2568
        %v2598 = vmul.f32 %v2562, %v2568
        %v2599 = vmul.f32 %v2563, %v2568
        %v2600 = vmul.f32 %v2564, %v2568
        %s2601 = scalar_lea.vmem %s5, 1
        %v2602 = vld [vmem:[%s2601] sm:$0x1]
        %v2604 = vlaneseq
        %v2605 = vshrl.u32 %v2604, 7
        %v2606 = vsub.s32 0, %v2605
        %v2607 = vrot.slane %v2602, %v2606
        %v2609 = vmul.f32 %v2569, %v2607
        %v2610 = vmul.f32 %v2570, %v2607
        %v2611 = vmul.f32 %v2571, %v2607
        %v2612 = vmul.f32 %v2572, %v2607
        %v2613 = vmul.f32 %v2573, %v2607
        %v2614 = vmul.f32 %v2574, %v2607
        %v2615 = vmul.f32 %v2575, %v2607
        %v2616 = vmul.f32 %v2576, %v2607
        %v2617 = vmul.f32 %v2577, %v2607
        %v2618 = vmul.f32 %v2578, %v2607
        %v2619 = vmul.f32 %v2579, %v2607
        %v2620 = vmul.f32 %v2580, %v2607
        %v2621 = vmul.f32 %v2581, %v2607
        %v2622 = vmul.f32 %v2582, %v2607
        %v2623 = vmul.f32 %v2583, %v2607
        %v2624 = vmul.f32 %v2584, %v2607
        %v2625 = vmul.f32 %v2585, %v2607
        %v2626 = vmul.f32 %v2586, %v2607
        %v2627 = vmul.f32 %v2587, %v2607
        %v2628 = vmul.f32 %v2588, %v2607
        %v2629 = vmul.f32 %v2589, %v2607
        %v2630 = vmul.f32 %v2590, %v2607
        %v2631 = vmul.f32 %v2591, %v2607
        %v2632 = vmul.f32 %v2592, %v2607
        %v2633 = vmul.f32 %v2593, %v2607
        %v2634 = vmul.f32 %v2594, %v2607
        %v2635 = vmul.f32 %v2595, %v2607
        %v2636 = vmul.f32 %v2596, %v2607
        %v2637 = vmul.f32 %v2597, %v2607
        %v2638 = vmul.f32 %v2598, %v2607
        %v2639 = vmul.f32 %v2599, %v2607
        %v2640 = vmul.f32 %v2600, %v2607
        %s2641 = scalar_lea.vmem %s6, 1
        %v2642 = vld [vmem:[%s2641] sm:$0x1]
        %v2644 = vlaneseq
        %v2645 = vshrl.u32 %v2644, 7
        %v2646 = vsub.s32 0, %v2645
        %v2647 = vrot.slane %v2642, %v2646
        %v2649 = vadd.f32 %v2609, %v2647
        %v2650 = vadd.f32 %v2610, %v2647
        %v2651 = vadd.f32 %v2611, %v2647
        %v2652 = vadd.f32 %v2612, %v2647
        %v2653 = vadd.f32 %v2613, %v2647
        %v2654 = vadd.f32 %v2614, %v2647
        %v2655 = vadd.f32 %v2615, %v2647
        %v2656 = vadd.f32 %v2616, %v2647
        %v2657 = vadd.f32 %v2617, %v2647
        %v2658 = vadd.f32 %v2618, %v2647
        %v2659 = vadd.f32 %v2619, %v2647
        %v2660 = vadd.f32 %v2620, %v2647
        %v2661 = vadd.f32 %v2621, %v2647
        %v2662 = vadd.f32 %v2622, %v2647
        %v2663 = vadd.f32 %v2623, %v2647
        %v2664 = vadd.f32 %v2624, %v2647
        %v2665 = vadd.f32 %v2625, %v2647
        %v2666 = vadd.f32 %v2626, %v2647
        %v2667 = vadd.f32 %v2627, %v2647
        %v2668 = vadd.f32 %v2628, %v2647
        %v2669 = vadd.f32 %v2629, %v2647
        %v2670 = vadd.f32 %v2630, %v2647
        %v2671 = vadd.f32 %v2631, %v2647
        %v2672 = vadd.f32 %v2632, %v2647
        %v2673 = vadd.f32 %v2633, %v2647
        %v2674 = vadd.f32 %v2634, %v2647
        %v2675 = vadd.f32 %v2635, %v2647
        %v2676 = vadd.f32 %v2636, %v2647
        %v2677 = vadd.f32 %v2637, %v2647
        %v2678 = vadd.f32 %v2638, %v2647
        %v2679 = vadd.f32 %v2639, %v2647
        %v2680 = vadd.f32 %v2640, %v2647
        %v2681 = vpack.c.bf16 %v2650, %v2649
        %v2682 = vpack.c.bf16 %v2652, %v2651
        %v2683 = vpack.c.bf16 %v2654, %v2653
        %v2684 = vpack.c.bf16 %v2656, %v2655
        %v2685 = vpack.c.bf16 %v2658, %v2657
        %v2686 = vpack.c.bf16 %v2660, %v2659
        %v2687 = vpack.c.bf16 %v2662, %v2661
        %v2688 = vpack.c.bf16 %v2664, %v2663
        %v2689 = vpack.c.bf16 %v2666, %v2665
        %v2690 = vpack.c.bf16 %v2668, %v2667
        %v2691 = vpack.c.bf16 %v2670, %v2669
        %v2692 = vpack.c.bf16 %v2672, %v2671
        %v2693 = vpack.c.bf16 %v2674, %v2673
        %v2694 = vpack.c.bf16 %v2676, %v2675
        %v2695 = vpack.c.bf16 %v2678, %v2677
        %v2696 = vpack.c.bf16 %v2680, %v2679
        %2697 = vmatprep.subr.bf16.mxu0 0
        %2698 = vmatpush1.bf16.msra.mxu0 %v2681
        %2699 = vmatprep.subr.bf16.mxu0 0
        %2700 = vmatpush1.bf16.msra.mxu0 %v2682
        %2701 = vmatprep.subr.bf16.mxu0 0
        %2702 = vmatpush1.bf16.msra.mxu0 %v2683
        %2703 = vmatprep.subr.bf16.mxu0 0
        %2704 = vmatpush1.bf16.msra.mxu0 %v2684
        %2705 = vmatprep.subr.bf16.mxu0 0
        %2706 = vmatpush1.bf16.msra.mxu0 %v2685
        %2707 = vmatprep.subr.bf16.mxu0 0
        %2708 = vmatpush1.bf16.msra.mxu0 %v2686
        %2709 = vmatprep.subr.bf16.mxu0 0
        %2710 = vmatpush1.bf16.msra.mxu0 %v2687
        %2711 = vmatprep.subr.bf16.mxu0 0
        %2712 = vmatpush1.bf16.msra.mxu0 %v2688
        %2713 = vmatprep.subr.bf16.mxu0 0
        %2714 = vmatpush1.bf16.msra.mxu0 0
        %2715 = vmatprep.subr.bf16.mxu0 0
        %2716 = vmatpush1.bf16.msra.mxu0 0
        %2717 = vmatprep.subr.bf16.mxu0 0
        %2718 = vmatpush1.bf16.msra.mxu0 0
        %2719 = vmatprep.subr.bf16.mxu0 0
        %2720 = vmatpush1.bf16.msra.mxu0 0
        %2721 = vmatprep.subr.bf16.mxu0 0
        %2722 = vmatpush1.bf16.msra.mxu0 0
        %2723 = vmatprep.subr.bf16.mxu0 0
        %2724 = vmatpush1.bf16.msra.mxu0 0
        %2725 = vmatprep.subr.bf16.mxu0 0
        %2726 = vmatpush1.bf16.msra.mxu0 0
        %2727 = vmatprep.subr.bf16.mxu0 0
        %2728 = vmatpush1.bf16.msra.mxu0 0
        %2729 = vmatprep.mubr.bf16.mxu0 0
        %2730 = vmatmul.mubr.bf16.gmra.mrb[0].mxu0 %v439
        %v2731 = vpop.f32.mrb[0].mxu0
        %v2732 = vadd.f32 0.0, %v2731
        %v2733 = vpop.f32.mrb[0].mxu0
        %v2734 = vpop.f32.mrb[0].mxu0
        %v2735 = vadd.f32 0.0, %v2734
        %v2736 = vpop.f32.mrb[0].mxu0
        %2737 = vmatprep.mubr.bf16.mxu0 0
        %2738 = vmatmul.mubr.bf16.gmra.mrb[0].mxu0 %v440
        %v2739 = vpop.f32.mrb[0].mxu0
        %v2740 = vadd.f32 0.0, %v2739
        %v2741 = vpop.f32.mrb[0].mxu0
        %v2742 = vpop.f32.mrb[0].mxu0
        %v2743 = vadd.f32 0.0, %v2742
        %v2744 = vpop.f32.mrb[0].mxu0
        %2745 = vmatprep.mubr.bf16.mxu0 0
        %2746 = vmatmul.mubr.bf16.gmra.mrb[0].mxu0 %v441
        %v2747 = vpop.f32.mrb[0].mxu0
        %v2748 = vadd.f32 0.0, %v2747
        %v2749 = vpop.f32.mrb[0].mxu0
        %v2750 = vpop.f32.mrb[0].mxu0
        %v2751 = vadd.f32 0.0, %v2750
        %v2752 = vpop.f32.mrb[0].mxu0
        %2753 = vmatprep.mubr.bf16.mxu0 0
        %2754 = vmatmul.mubr.bf16.gmra.mrb[0].mxu0 %v442
        %v2755 = vpop.f32.mrb[0].mxu0
        %v2756 = vadd.f32 0.0, %v2755
        %v2757 = vpop.f32.mrb[0].mxu0
        %v2758 = vpop.f32.mrb[0].mxu0
        %v2759 = vadd.f32 0.0, %v2758
        %v2760 = vpop.f32.mrb[0].mxu0
        %2761 = vmatprep.mubr.bf16.mxu0 0
        %2762 = vmatmul.mubr.bf16.gmra.mrb[0].mxu0 %v443
        %v2763 = vpop.f32.mrb[0].mxu0
        %v2764 = vadd.f32 0.0, %v2763
        %v2765 = vpop.f32.mrb[0].mxu0
        %v2766 = vpop.f32.mrb[0].mxu0
        %v2767 = vadd.f32 0.0, %v2766
        %v2768 = vpop.f32.mrb[0].mxu0
        %2769 = vmatprep.mubr.bf16.mxu0 0
        %2770 = vmatmul.mubr.bf16.gmra.mrb[0].mxu0 %v444
        %v2771 = vpop.f32.mrb[0].mxu0
        %v2772 = vadd.f32 0.0, %v2771
        %v2773 = vpop.f32.mrb[0].mxu0
        %v2774 = vpop.f32.mrb[0].mxu0
        %v2775 = vadd.f32 0.0, %v2774
        %v2776 = vpop.f32.mrb[0].mxu0
        %2777 = vmatprep.mubr.bf16.mxu0 0
        %2778 = vmatmul.mubr.bf16.gmra.mrb[0].mxu0 %v445
        %v2779 = vpop.f32.mrb[0].mxu0
        %v2780 = vadd.f32 0.0, %v2779
        %v2781 = vpop.f32.mrb[0].mxu0
        %v2782 = vpop.f32.mrb[0].mxu0
        %v2783 = vadd.f32 0.0, %v2782
        %v2784 = vpop.f32.mrb[0].mxu0
        %2785 = vmatprep.mubr.bf16.mxu0 0
        %2786 = vmatmul.mubr.bf16.gmra.mrb[0].mxu0 %v446
        %v2787 = vpop.f32.mrb[0].mxu0
        %v2788 = vadd.f32 0.0, %v2787
        %v2789 = vpop.f32.mrb[0].mxu0
        %v2790 = vpop.f32.mrb[0].mxu0
        %v2791 = vadd.f32 0.0, %v2790
        %v2792 = vpop.f32.mrb[0].mxu0
        %2793 = vdwg.mxu0
        %2794 = vmatprep.subr.bf16.mxu0 0
        %2795 = vmatpush1.bf16.msra.mxu0 %v2689
        %2796 = vmatprep.subr.bf16.mxu0 0
        %2797 = vmatpush1.bf16.msra.mxu0 %v2690
        %2798 = vmatprep.subr.bf16.mxu0 0
        %2799 = vmatpush1.bf16.msra.mxu0 %v2691
        %2800 = vmatprep.subr.bf16.mxu0 0
        %2801 = vmatpush1.bf16.msra.mxu0 %v2692
        %2802 = vmatprep.subr.bf16.mxu0 0
        %2803 = vmatpush1.bf16.msra.mxu0 %v2693
        %2804 = vmatprep.subr.bf16.mxu0 0
        %2805 = vmatpush1.bf16.msra.mxu0 %v2694
        %2806 = vmatprep.subr.bf16.mxu0 0
        %2807 = vmatpush1.bf16.msra.mxu0 %v2695
        %2808 = vmatprep.subr.bf16.mxu0 0
        %2809 = vmatpush1.bf16.msra.mxu0 %v2696
        %2810 = vmatprep.subr.bf16.mxu0 0
        %2811 = vmatpush1.bf16.msra.mxu0 0
        %2812 = vmatprep.subr.bf16.mxu0 0
        %2813 = vmatpush1.bf16.msra.mxu0 0
        %2814 = vmatprep.subr.bf16.mxu0 0
        %2815 = vmatpush1.bf16.msra.mxu0 0
        %2816 = vmatprep.subr.bf16.mxu0 0
        %2817 = vmatpush1.bf16.msra.mxu0 0
        %2818 = vmatprep.subr.bf16.mxu0 0
        %2819 = vmatpush1.bf16.msra.mxu0 0
        %2820 = vmatprep.subr.bf16.mxu0 0
        %2821 = vmatpush1.bf16.msra.mxu0 0
        %2822 = vmatprep.subr.bf16.mxu0 0
        %2823 = vmatpush1.bf16.msra.mxu0 0
        %2824 = vmatprep.subr.bf16.mxu0 0
        %2825 = vmatpush1.bf16.msra.mxu0 0
        %2826 = vmatprep.mubr.bf16.mxu0 0
        %2827 = vmatmul.mubr.bf16.gmra.mrb[0].mxu0 %v584
        %v2828 = vpop.f32.mrb[0].mxu0
        %v2829 = vadd.f32 0.0, %v2828
        %v2830 = vpop.f32.mrb[0].mxu0
        %v2831 = vpop.f32.mrb[0].mxu0
        %v2832 = vadd.f32 0.0, %v2831
        %v2833 = vpop.f32.mrb[0].mxu0
        %2834 = vmatprep.mubr.bf16.mxu0 0
        %2835 = vmatmul.mubr.bf16.gmra.mrb[0].mxu0 %v585
        %v2836 = vpop.f32.mrb[0].mxu0
        %v2837 = vadd.f32 0.0, %v2836
        %v2838 = vpop.f32.mrb[0].mxu0
        %v2839 = vpop.f32.mrb[0].mxu0
        %v2840 = vadd.f32 0.0, %v2839
        %v2841 = vpop.f32.mrb[0].mxu0
        %2842 = vmatprep.mubr.bf16.mxu0 0
        %2843 = vmatmul.mubr.bf16.gmra.mrb[0].mxu0 %v586
        %v2844 = vpop.f32.mrb[0].mxu0
        %v2845 = vadd.f32 0.0, %v2844
        %v2846 = vpop.f32.mrb[0].mxu0
        %v2847 = vpop.f32.mrb[0].mxu0
        %v2848 = vadd.f32 0.0, %v2847
        %v2849 = vpop.f32.mrb[0].mxu0
        %2850 = vmatprep.mubr.bf16.mxu0 0
        %2851 = vmatmul.mubr.bf16.gmra.mrb[0].mxu0 %v587
        %v2852 = vpop.f32.mrb[0].mxu0
        %v2853 = vadd.f32 0.0, %v2852
        %v2854 = vpop.f32.mrb[0].mxu0
        %v2855 = vpop.f32.mrb[0].mxu0
        %v2856 = vadd.f32 0.0, %v2855
        %v2857 = vpop.f32.mrb[0].mxu0
        %2858 = vmatprep.mubr.bf16.mxu0 0
        %2859 = vmatmul.mubr.bf16.gmra.mrb[0].mxu0 %v588
        %v2860 = vpop.f32.mrb[0].mxu0
        %v2861 = vadd.f32 0.0, %v2860
        %v2862 = vpop.f32.mrb[0].mxu0
        %v2863 = vpop.f32.mrb[0].mxu0
        %v2864 = vadd.f32 0.0, %v2863
        %v2865 = vpop.f32.mrb[0].mxu0
        %2866 = vmatprep.mubr.bf16.mxu0 0
        %2867 = vmatmul.mubr.bf16.gmra.mrb[0].mxu0 %v589
        %v2868 = vpop.f32.mrb[0].mxu0
        %v2869 = vadd.f32 0.0, %v2868
        %v2870 = vpop.f32.mrb[0].mxu0
        %v2871 = vpop.f32.mrb[0].mxu0
        %v2872 = vadd.f32 0.0, %v2871
        %v2873 = vpop.f32.mrb[0].mxu0
        %2874 = vmatprep.mubr.bf16.mxu0 0
        %2875 = vmatmul.mubr.bf16.gmra.mrb[0].mxu0 %v590
        %v2876 = vpop.f32.mrb[0].mxu0
        %v2877 = vadd.f32 0.0, %v2876
        %v2878 = vpop.f32.mrb[0].mxu0
        %v2879 = vpop.f32.mrb[0].mxu0
        %v2880 = vadd.f32 0.0, %v2879
        %v2881 = vpop.f32.mrb[0].mxu0
        %2882 = vmatprep.mubr.bf16.mxu0 0
        %2883 = vmatmul.mubr.bf16.gmra.mrb[0].mxu0 %v591
        %v2884 = vpop.f32.mrb[0].mxu0
        %v2885 = vadd.f32 0.0, %v2884
        %v2886 = vpop.f32.mrb[0].mxu0
        %v2887 = vpop.f32.mrb[0].mxu0
        %v2888 = vadd.f32 0.0, %v2887
        %v2889 = vpop.f32.mrb[0].mxu0
        %2890 = vdwg.mxu0
        %s2891 = sld [smem:[#allocation2 + $0x2]]
        %s2892 = sadd.f32 %s2891, 1.0
        %v2893 = vstv %s2892
        %v2894 = vmul.f32 %v2893, %v2649
        %v2895 = vmul.f32 %v2893, %v2650
        %v2896 = vmul.f32 %v2893, %v2651
        %v2897 = vmul.f32 %v2893, %v2652
        %v2898 = vmul.f32 %v2893, %v2653
        %v2899 = vmul.f32 %v2893, %v2654
        %v2900 = vmul.f32 %v2893, %v2655
        %v2901 = vmul.f32 %v2893, %v2656
        %v2902 = vmul.f32 %v2893, %v2657
        %v2903 = vmul.f32 %v2893, %v2658
        %v2904 = vmul.f32 %v2893, %v2659
        %v2905 = vmul.f32 %v2893, %v2660
        %v2906 = vmul.f32 %v2893, %v2661
        %v2907 = vmul.f32 %v2893, %v2662
        %v2908 = vmul.f32 %v2893, %v2663
        %v2909 = vmul.f32 %v2893, %v2664
        %v2910 = vmul.f32 %v2893, %v2665
        %v2911 = vmul.f32 %v2893, %v2666
        %v2912 = vmul.f32 %v2893, %v2667
        %v2913 = vmul.f32 %v2893, %v2668
        %v2914 = vmul.f32 %v2893, %v2669
        %v2915 = vmul.f32 %v2893, %v2670
        %v2916 = vmul.f32 %v2893, %v2671
        %v2917 = vmul.f32 %v2893, %v2672
        %v2918 = vmul.f32 %v2893, %v2673
        %v2919 = vmul.f32 %v2893, %v2674
        %v2920 = vmul.f32 %v2893, %v2675
        %v2921 = vmul.f32 %v2893, %v2676
        %v2922 = vmul.f32 %v2893, %v2677
        %v2923 = vmul.f32 %v2893, %v2678
        %v2924 = vmul.f32 %v2893, %v2679
        %v2925 = vmul.f32 %v2893, %v2680
        %v2926 = vadd.f32 %v2894, %v2732
        %v2927 = vadd.f32 %v2895, %v2735
        %v2928 = vadd.f32 %v2896, %v2740
        %v2929 = vadd.f32 %v2897, %v2743
        %v2930 = vadd.f32 %v2898, %v2748
        %v2931 = vadd.f32 %v2899, %v2751
        %v2932 = vadd.f32 %v2900, %v2756
        %v2933 = vadd.f32 %v2901, %v2759
        %v2934 = vadd.f32 %v2902, %v2764
        %v2935 = vadd.f32 %v2903, %v2767
        %v2936 = vadd.f32 %v2904, %v2772
        %v2937 = vadd.f32 %v2905, %v2775
        %v2938 = vadd.f32 %v2906, %v2780
        %v2939 = vadd.f32 %v2907, %v2783
        %v2940 = vadd.f32 %v2908, %v2788
        %v2941 = vadd.f32 %v2909, %v2791
        %v2942 = vadd.f32 %v2910, %v2829
        %v2943 = vadd.f32 %v2911, %v2832
        %v2944 = vadd.f32 %v2912, %v2837
        %v2945 = vadd.f32 %v2913, %v2840
        %v2946 = vadd.f32 %v2914, %v2845
        %v2947 = vadd.f32 %v2915, %v2848
        %v2948 = vadd.f32 %v2916, %v2853
        %v2949 = vadd.f32 %v2917, %v2856
        %v2950 = vadd.f32 %v2918, %v2861
        %v2951 = vadd.f32 %v2919, %v2864
        %v2952 = vadd.f32 %v2920, %v2869
        %v2953 = vadd.f32 %v2921, %v2872
        %v2954 = vadd.f32 %v2922, %v2877
        %v2955 = vadd.f32 %v2923, %v2880
        %v2956 = vadd.f32 %v2924, %v2885
        %v2957 = vadd.f32 %v2925, %v2888
        %v2958 = vpack.c.bf16 %v2927, %v2926
        %v2959 = vpack.c.bf16 %v2929, %v2928
        %v2960 = vpack.c.bf16 %v2931, %v2930
        %v2961 = vpack.c.bf16 %v2933, %v2932
        %v2962 = vpack.c.bf16 %v2935, %v2934
        %v2963 = vpack.c.bf16 %v2937, %v2936
        %v2964 = vpack.c.bf16 %v2939, %v2938
        %v2965 = vpack.c.bf16 %v2941, %v2940
        %v2966 = vpack.c.bf16 %v2943, %v2942
        %v2967 = vpack.c.bf16 %v2945, %v2944
        %v2968 = vpack.c.bf16 %v2947, %v2946
        %v2969 = vpack.c.bf16 %v2949, %v2948
        %v2970 = vpack.c.bf16 %v2951, %v2950
        %v2971 = vpack.c.bf16 %v2953, %v2952
        %v2972 = vpack.c.bf16 %v2955, %v2954
        %v2973 = vpack.c.bf16 %v2957, %v2956
        %s2974 = scalar_lea.vmem %s3, 128
        %v2975 = vld [vmem:[%s2974] sm:$0xf]
        %v2976 = vld [vmem:[%s2974 + $0x4] sm:$0xf]
        %v2977 = vld [vmem:[%s2974 + $0x8] sm:$0xf]
        %v2978 = vld [vmem:[%s2974 + $0xc] sm:$0xf]
        %v2979 = vld [vmem:[%s2974 + $0x10] sm:$0xf]
        %v2980 = vld [vmem:[%s2974 + $0x14] sm:$0xf]
        %v2981 = vld [vmem:[%s2974 + $0x18] sm:$0xf]
        %v2982 = vld [vmem:[%s2974 + $0x1c] sm:$0xf]
        %v2983 = vld [vmem:[%s2974 + $0x20] sm:$0xf]
        %v2984 = vld [vmem:[%s2974 + $0x24] sm:$0xf]
        %v2985 = vld [vmem:[%s2974 + $0x28] sm:$0xf]
        %v2986 = vld [vmem:[%s2974 + $0x2c] sm:$0xf]
        %v2987 = vld [vmem:[%s2974 + $0x30] sm:$0xf]
        %v2988 = vld [vmem:[%s2974 + $0x34] sm:$0xf]
        %v2989 = vld [vmem:[%s2974 + $0x38] sm:$0xf]
        %v2990 = vld [vmem:[%s2974 + $0x3c] sm:$0xf]
        %v3007 = vunpack.c.l.b16 %v2975
        %v3008 = vunpack.c.l.b16 %v2976
        %v3009 = vunpack.c.l.b16 %v2977
        %v3010 = vunpack.c.l.b16 %v2978
        %v3011 = vunpack.c.l.b16 %v2979
        %v3012 = vunpack.c.l.b16 %v2980
        %v3013 = vunpack.c.l.b16 %v2981
        %v3014 = vunpack.c.l.b16 %v2982
        %v3015 = vunpack.c.l.b16 %v2983
        %v3016 = vunpack.c.l.b16 %v2984
        %v3017 = vunpack.c.l.b16 %v2985
        %v3018 = vunpack.c.l.b16 %v2986
        %v3019 = vunpack.c.l.b16 %v2987
        %v3020 = vunpack.c.l.b16 %v2988
        %v3021 = vunpack.c.l.b16 %v2989
        %v3022 = vunpack.c.l.b16 %v2990
        %v3023 = vpack.c.b16 %v3008, %v3007
        %v3024 = vpack.c.b16 %v3010, %v3009
        %v3025 = vpack.c.b16 %v3012, %v3011
        %v3026 = vpack.c.b16 %v3014, %v3013
        %v3027 = vpack.c.b16 %v3016, %v3015
        %v3028 = vpack.c.b16 %v3018, %v3017
        %v3029 = vpack.c.b16 %v3020, %v3019
        %v3030 = vpack.c.b16 %v3022, %v3021
        %3039 = vmatprep.subr.bf16.mxu0 0
        %3040 = vmatpush1.bf16.msra.mxu0 %v3023
        %3041 = vmatprep.subr.bf16.mxu0 0
        %3042 = vmatpush1.bf16.msra.mxu0 %v3024
        %3043 = vmatprep.subr.bf16.mxu0 0
        %3044 = vmatpush1.bf16.msra.mxu0 %v3025
        %3045 = vmatprep.subr.bf16.mxu0 0
        %3046 = vmatpush1.bf16.msra.mxu0 %v3026
        %3047 = vmatprep.subr.bf16.mxu0 0
        %3048 = vmatpush1.bf16.msra.mxu0 %v3027
        %3049 = vmatprep.subr.bf16.mxu0 0
        %3050 = vmatpush1.bf16.msra.mxu0 %v3028
        %3051 = vmatprep.subr.bf16.mxu0 0
        %3052 = vmatpush1.bf16.msra.mxu0 %v3029
        %3053 = vmatprep.subr.bf16.mxu0 0
        %3054 = vmatpush1.bf16.msra.mxu0 %v3030
        %3055 = vmatprep.subr.bf16.mxu0 0
        %3056 = vmatpush1.bf16.msra.mxu0 0
        %3057 = vmatprep.subr.bf16.mxu0 0
        %3058 = vmatpush1.bf16.msra.mxu0 0
        %3059 = vmatprep.subr.bf16.mxu0 0
        %3060 = vmatpush1.bf16.msra.mxu0 0
        %3061 = vmatprep.subr.bf16.mxu0 0
        %3062 = vmatpush1.bf16.msra.mxu0 0
        %3063 = vmatprep.subr.bf16.mxu0 0
        %3064 = vmatpush1.bf16.msra.mxu0 0
        %3065 = vmatprep.subr.bf16.mxu0 0
        %3066 = vmatpush1.bf16.msra.mxu0 0
        %3067 = vmatprep.subr.bf16.mxu0 0
        %3068 = vmatpush1.bf16.msra.mxu0 0
        %3069 = vmatprep.subr.bf16.mxu0 0
        %3070 = vmatpush1.bf16.msra.mxu0 0
        %3071 = vmatprep.mubr.bf16.mxu0 0
        %3072 = vmatmul.mubr.bf16.gmra.mrb[0].mxu0 %v2958
        %v3073 = vpop.f32.mrb[0].mxu0
        %v3074 = vadd.f32 0.0, %v3073
        %v3075 = vpop.f32.mrb[0].mxu0
        %v3076 = vpop.f32.mrb[0].mxu0
        %v3077 = vadd.f32 0.0, %v3076
        %v3078 = vpop.f32.mrb[0].mxu0
        %3079 = vmatprep.mubr.bf16.mxu0 0
        %3080 = vmatmul.mubr.bf16.gmra.mrb[0].mxu0 %v2959
        %v3081 = vpop.f32.mrb[0].mxu0
        %v3082 = vadd.f32 0.0, %v3081
        %v3083 = vpop.f32.mrb[0].mxu0
        %v3084 = vpop.f32.mrb[0].mxu0
        %v3085 = vadd.f32 0.0, %v3084
        %v3086 = vpop.f32.mrb[0].mxu0
        %3087 = vmatprep.mubr.bf16.mxu0 0
        %3088 = vmatmul.mubr.bf16.gmra.mrb[0].mxu0 %v2960
        %v3089 = vpop.f32.mrb[0].mxu0
        %v3090 = vadd.f32 0.0, %v3089
        %v3091 = vpop.f32.mrb[0].mxu0
        %v3092 = vpop.f32.mrb[0].mxu0
        %v3093 = vadd.f32 0.0, %v3092
        %v3094 = vpop.f32.mrb[0].mxu0
        %3095 = vmatprep.mubr.bf16.mxu0 0
        %3096 = vmatmul.mubr.bf16.gmra.mrb[0].mxu0 %v2961
        %v3097 = vpop.f32.mrb[0].mxu0
        %v3098 = vadd.f32 0.0, %v3097
        %v3099 = vpop.f32.mrb[0].mxu0
        %v3100 = vpop.f32.mrb[0].mxu0
        %v3101 = vadd.f32 0.0, %v3100
        %v3102 = vpop.f32.mrb[0].mxu0
        %3103 = vmatprep.mubr.bf16.mxu0 0
        %3104 = vmatmul.mubr.bf16.gmra.mrb[0].mxu0 %v2962
        %v3105 = vpop.f32.mrb[0].mxu0
        %v3106 = vadd.f32 0.0, %v3105
        %v3107 = vpop.f32.mrb[0].mxu0
        %v3108 = vpop.f32.mrb[0].mxu0
        %v3109 = vadd.f32 0.0, %v3108
        %v3110 = vpop.f32.mrb[0].mxu0
        %3111 = vmatprep.mubr.bf16.mxu0 0
        %3112 = vmatmul.mubr.bf16.gmra.mrb[0].mxu0 %v2963
        %v3113 = vpop.f32.mrb[0].mxu0
        %v3114 = vadd.f32 0.0, %v3113
        %v3115 = vpop.f32.mrb[0].mxu0
        %v3116 = vpop.f32.mrb[0].mxu0
        %v3117 = vadd.f32 0.0, %v3116
        %v3118 = vpop.f32.mrb[0].mxu0
        %3119 = vmatprep.mubr.bf16.mxu0 0
        %3120 = vmatmul.mubr.bf16.gmra.mrb[0].mxu0 %v2964
        %v3121 = vpop.f32.mrb[0].mxu0
        %v3122 = vadd.f32 0.0, %v3121
        %v3123 = vpop.f32.mrb[0].mxu0
        %v3124 = vpop.f32.mrb[0].mxu0
        %v3125 = vadd.f32 0.0, %v3124
        %v3126 = vpop.f32.mrb[0].mxu0
        %3127 = vmatprep.mubr.bf16.mxu0 0
        %3128 = vmatmul.mubr.bf16.gmra.mrb[0].mxu0 %v2965
        %v3129 = vpop.f32.mrb[0].mxu0
        %v3130 = vadd.f32 0.0, %v3129
        %v3131 = vpop.f32.mrb[0].mxu0
        %v3132 = vpop.f32.mrb[0].mxu0
        %v3133 = vadd.f32 0.0, %v3132
        %v3134 = vpop.f32.mrb[0].mxu0
        %3135 = vmatprep.mubr.bf16.mxu0 0
        %3136 = vmatmul.mubr.bf16.gmra.mrb[0].mxu0 %v2966
        %v3137 = vpop.f32.mrb[0].mxu0
        %v3138 = vadd.f32 0.0, %v3137
        %v3139 = vpop.f32.mrb[0].mxu0
        %v3140 = vpop.f32.mrb[0].mxu0
        %v3141 = vadd.f32 0.0, %v3140
        %v3142 = vpop.f32.mrb[0].mxu0
        %3143 = vmatprep.mubr.bf16.mxu0 0
        %3144 = vmatmul.mubr.bf16.gmra.mrb[0].mxu0 %v2967
        %v3145 = vpop.f32.mrb[0].mxu0
        %v3146 = vadd.f32 0.0, %v3145
        %v3147 = vpop.f32.mrb[0].mxu0
        %v3148 = vpop.f32.mrb[0].mxu0
        %v3149 = vadd.f32 0.0, %v3148
        %v3150 = vpop.f32.mrb[0].mxu0
        %3151 = vmatprep.mubr.bf16.mxu0 0
        %3152 = vmatmul.mubr.bf16.gmra.mrb[0].mxu0 %v2968
        %v3153 = vpop.f32.mrb[0].mxu0
        %v3154 = vadd.f32 0.0, %v3153
        %v3155 = vpop.f32.mrb[0].mxu0
        %v3156 = vpop.f32.mrb[0].mxu0
        %v3157 = vadd.f32 0.0, %v3156
        %v3158 = vpop.f32.mrb[0].mxu0
        %3159 = vmatprep.mubr.bf16.mxu0 0
        %3160 = vmatmul.mubr.bf16.gmra.mrb[0].mxu0 %v2969
        %v3161 = vpop.f32.mrb[0].mxu0
        %v3162 = vadd.f32 0.0, %v3161
        %v3163 = vpop.f32.mrb[0].mxu0
        %v3164 = vpop.f32.mrb[0].mxu0
        %v3165 = vadd.f32 0.0, %v3164
        %v3166 = vpop.f32.mrb[0].mxu0
        %3167 = vmatprep.mubr.bf16.mxu0 0
        %3168 = vmatmul.mubr.bf16.gmra.mrb[0].mxu0 %v2970
        %v3169 = vpop.f32.mrb[0].mxu0
        %v3170 = vadd.f32 0.0, %v3169
        %v3171 = vpop.f32.mrb[0].mxu0
        %v3172 = vpop.f32.mrb[0].mxu0
        %v3173 = vadd.f32 0.0, %v3172
        %v3174 = vpop.f32.mrb[0].mxu0
        %3175 = vmatprep.mubr.bf16.mxu0 0
        %3176 = vmatmul.mubr.bf16.gmra.mrb[0].mxu0 %v2971
        %v3177 = vpop.f32.mrb[0].mxu0
        %v3178 = vadd.f32 0.0, %v3177
        %v3179 = vpop.f32.mrb[0].mxu0
        %v3180 = vpop.f32.mrb[0].mxu0
        %v3181 = vadd.f32 0.0, %v3180
        %v3182 = vpop.f32.mrb[0].mxu0
        %3183 = vmatprep.mubr.bf16.mxu0 0
        %3184 = vmatmul.mubr.bf16.gmra.mrb[0].mxu0 %v2972
        %v3185 = vpop.f32.mrb[0].mxu0
        %v3186 = vadd.f32 0.0, %v3185
        %v3187 = vpop.f32.mrb[0].mxu0
        %v3188 = vpop.f32.mrb[0].mxu0
        %v3189 = vadd.f32 0.0, %v3188
        %v3190 = vpop.f32.mrb[0].mxu0
        %3191 = vmatprep.mubr.bf16.mxu0 0
        %3192 = vmatmul.mubr.bf16.gmra.mrb[0].mxu0 %v2973
        %v3193 = vpop.f32.mrb[0].mxu0
        %v3194 = vadd.f32 0.0, %v3193
        %v3195 = vpop.f32.mrb[0].mxu0
        %v3196 = vpop.f32.mrb[0].mxu0
        %v3197 = vadd.f32 0.0, %v3196
        %v3198 = vpop.f32.mrb[0].mxu0
        %3199 = vdwg.mxu0
        %v3200 = vmax.f32 %v3074, 0.0
        %v3201 = vmax.f32 %v3077, 0.0
        %v3202 = vmax.f32 %v3082, 0.0
        %v3203 = vmax.f32 %v3085, 0.0
        %v3204 = vmax.f32 %v3090, 0.0
        %v3205 = vmax.f32 %v3093, 0.0
        %v3206 = vmax.f32 %v3098, 0.0
        %v3207 = vmax.f32 %v3101, 0.0
        %v3208 = vmax.f32 %v3106, 0.0
        %v3209 = vmax.f32 %v3109, 0.0
        %v3210 = vmax.f32 %v3114, 0.0
        %v3211 = vmax.f32 %v3117, 0.0
        %v3212 = vmax.f32 %v3122, 0.0
        %v3213 = vmax.f32 %v3125, 0.0
        %v3214 = vmax.f32 %v3130, 0.0
        %v3215 = vmax.f32 %v3133, 0.0
        %v3216 = vmax.f32 %v3138, 0.0
        %v3217 = vmax.f32 %v3141, 0.0
        %v3218 = vmax.f32 %v3146, 0.0
        %v3219 = vmax.f32 %v3149, 0.0
        %v3220 = vmax.f32 %v3154, 0.0
        %v3221 = vmax.f32 %v3157, 0.0
        %v3222 = vmax.f32 %v3162, 0.0
        %v3223 = vmax.f32 %v3165, 0.0
        %v3224 = vmax.f32 %v3170, 0.0
        %v3225 = vmax.f32 %v3173, 0.0
        %v3226 = vmax.f32 %v3178, 0.0
        %v3227 = vmax.f32 %v3181, 0.0
        %v3228 = vmax.f32 %v3186, 0.0
        %v3229 = vmax.f32 %v3189, 0.0
        %v3230 = vmax.f32 %v3194, 0.0
        %v3231 = vmax.f32 %v3197, 0.0
        %v3232 = vpack.c.bf16 %v3201, %v3200
        %v3233 = vpack.c.bf16 %v3203, %v3202
        %v3234 = vpack.c.bf16 %v3205, %v3204
        %v3235 = vpack.c.bf16 %v3207, %v3206
        %v3236 = vpack.c.bf16 %v3209, %v3208
        %v3237 = vpack.c.bf16 %v3211, %v3210
        %v3238 = vpack.c.bf16 %v3213, %v3212
        %v3239 = vpack.c.bf16 %v3215, %v3214
        %v3240 = vpack.c.bf16 %v3217, %v3216
        %v3241 = vpack.c.bf16 %v3219, %v3218
        %v3242 = vpack.c.bf16 %v3221, %v3220
        %v3243 = vpack.c.bf16 %v3223, %v3222
        %v3244 = vpack.c.bf16 %v3225, %v3224
        %v3245 = vpack.c.bf16 %v3227, %v3226
        %v3246 = vpack.c.bf16 %v3229, %v3228
        %v3247 = vpack.c.bf16 %v3231, %v3230
        %s3248 = scalar_lea.vmem %s4, 128
        %v3249 = vld [vmem:[%s3248] sm:$0xf]
        %v3250 = vld [vmem:[%s3248 + $0x4] sm:$0xf]
        %v3251 = vld [vmem:[%s3248 + $0x8] sm:$0xf]
        %v3252 = vld [vmem:[%s3248 + $0xc] sm:$0xf]
        %v3253 = vld [vmem:[%s3248 + $0x10] sm:$0xf]
        %v3254 = vld [vmem:[%s3248 + $0x14] sm:$0xf]
        %v3255 = vld [vmem:[%s3248 + $0x18] sm:$0xf]
        %v3256 = vld [vmem:[%s3248 + $0x1c] sm:$0xf]
        %v3257 = vld [vmem:[%s3248 + $0x20] sm:$0xf]
        %v3258 = vld [vmem:[%s3248 + $0x24] sm:$0xf]
        %v3259 = vld [vmem:[%s3248 + $0x28] sm:$0xf]
        %v3260 = vld [vmem:[%s3248 + $0x2c] sm:$0xf]
        %v3261 = vld [vmem:[%s3248 + $0x30] sm:$0xf]
        %v3262 = vld [vmem:[%s3248 + $0x34] sm:$0xf]
        %v3263 = vld [vmem:[%s3248 + $0x38] sm:$0xf]
        %v3264 = vld [vmem:[%s3248 + $0x3c] sm:$0xf]
        %v3281 = vunpack.c.l.b16 %v3249
        %v3282 = vunpack.c.l.b16 %v3250
        %v3283 = vunpack.c.l.b16 %v3251
        %v3284 = vunpack.c.l.b16 %v3252
        %v3285 = vunpack.c.l.b16 %v3253
        %v3286 = vunpack.c.l.b16 %v3254
        %v3287 = vunpack.c.l.b16 %v3255
        %v3288 = vunpack.c.l.b16 %v3256
        %v3289 = vunpack.c.l.b16 %v3257
        %v3290 = vunpack.c.l.b16 %v3258
        %v3291 = vunpack.c.l.b16 %v3259
        %v3292 = vunpack.c.l.b16 %v3260
        %v3293 = vunpack.c.l.b16 %v3261
        %v3294 = vunpack.c.l.b16 %v3262
        %v3295 = vunpack.c.l.b16 %v3263
        %v3296 = vunpack.c.l.b16 %v3264
        %v3297 = vpack.c.b16 %v3282, %v3281
        %v3298 = vpack.c.b16 %v3284, %v3283
        %v3299 = vpack.c.b16 %v3286, %v3285
        %v3300 = vpack.c.b16 %v3288, %v3287
        %v3301 = vpack.c.b16 %v3290, %v3289
        %v3302 = vpack.c.b16 %v3292, %v3291
        %v3303 = vpack.c.b16 %v3294, %v3293
        %v3304 = vpack.c.b16 %v3296, %v3295
        %3313 = vmatprep.subr.bf16.mxu0 0
        %3314 = vmatpush1.bf16.msra.mxu0 %v3297
        %3315 = vmatprep.subr.bf16.mxu0 0
        %3316 = vmatpush1.bf16.msra.mxu0 %v3298
        %3317 = vmatprep.subr.bf16.mxu0 0
        %3318 = vmatpush1.bf16.msra.mxu0 %v3299
        %3319 = vmatprep.subr.bf16.mxu0 0
        %3320 = vmatpush1.bf16.msra.mxu0 %v3300
        %3321 = vmatprep.subr.bf16.mxu0 0
        %3322 = vmatpush1.bf16.msra.mxu0 %v3301
        %3323 = vmatprep.subr.bf16.mxu0 0
        %3324 = vmatpush1.bf16.msra.mxu0 %v3302
        %3325 = vmatprep.subr.bf16.mxu0 0
        %3326 = vmatpush1.bf16.msra.mxu0 %v3303
        %3327 = vmatprep.subr.bf16.mxu0 0
        %3328 = vmatpush1.bf16.msra.mxu0 %v3304
        %3329 = vmatprep.subr.bf16.mxu0 0
        %3330 = vmatpush1.bf16.msra.mxu0 0
        %3331 = vmatprep.subr.bf16.mxu0 0
        %3332 = vmatpush1.bf16.msra.mxu0 0
        %3333 = vmatprep.subr.bf16.mxu0 0
        %3334 = vmatpush1.bf16.msra.mxu0 0
        %3335 = vmatprep.subr.bf16.mxu0 0
        %3336 = vmatpush1.bf16.msra.mxu0 0
        %3337 = vmatprep.subr.bf16.mxu0 0
        %3338 = vmatpush1.bf16.msra.mxu0 0
        %3339 = vmatprep.subr.bf16.mxu0 0
        %3340 = vmatpush1.bf16.msra.mxu0 0
        %3341 = vmatprep.subr.bf16.mxu0 0
        %3342 = vmatpush1.bf16.msra.mxu0 0
        %3343 = vmatprep.subr.bf16.mxu0 0
        %3344 = vmatpush1.bf16.msra.mxu0 0
        %3345 = vmatprep.mubr.bf16.mxu0 0
        %3346 = vmatmul.mubr.bf16.gmra.mrb[0].mxu0 %v3232
        %v3347 = vpop.f32.mrb[0].mxu0
        %v3348 = vadd.f32 0.0, %v3347
        %v3349 = vpop.f32.mrb[0].mxu0
        %v3350 = vpop.f32.mrb[0].mxu0
        %v3351 = vadd.f32 0.0, %v3350
        %v3352 = vpop.f32.mrb[0].mxu0
        %3353 = vmatprep.mubr.bf16.mxu0 0
        %3354 = vmatmul.mubr.bf16.gmra.mrb[0].mxu0 %v3233
        %v3355 = vpop.f32.mrb[0].mxu0
        %v3356 = vadd.f32 0.0, %v3355
        %v3357 = vpop.f32.mrb[0].mxu0
        %v3358 = vpop.f32.mrb[0].mxu0
        %v3359 = vadd.f32 0.0, %v3358
        %v3360 = vpop.f32.mrb[0].mxu0
        %3361 = vmatprep.mubr.bf16.mxu0 0
        %3362 = vmatmul.mubr.bf16.gmra.mrb[0].mxu0 %v3234
        %v3363 = vpop.f32.mrb[0].mxu0
        %v3364 = vadd.f32 0.0, %v3363
        %v3365 = vpop.f32.mrb[0].mxu0
        %v3366 = vpop.f32.mrb[0].mxu0
        %v3367 = vadd.f32 0.0, %v3366
        %v3368 = vpop.f32.mrb[0].mxu0
        %3369 = vmatprep.mubr.bf16.mxu0 0
        %3370 = vmatmul.mubr.bf16.gmra.mrb[0].mxu0 %v3235
        %v3371 = vpop.f32.mrb[0].mxu0
        %v3372 = vadd.f32 0.0, %v3371
        %v3373 = vpop.f32.mrb[0].mxu0
        %v3374 = vpop.f32.mrb[0].mxu0
        %v3375 = vadd.f32 0.0, %v3374
        %v3376 = vpop.f32.mrb[0].mxu0
        %3377 = vmatprep.mubr.bf16.mxu0 0
        %3378 = vmatmul.mubr.bf16.gmra.mrb[0].mxu0 %v3236
        %v3379 = vpop.f32.mrb[0].mxu0
        %v3380 = vadd.f32 0.0, %v3379
        %v3381 = vpop.f32.mrb[0].mxu0
        %v3382 = vpop.f32.mrb[0].mxu0
        %v3383 = vadd.f32 0.0, %v3382
        %v3384 = vpop.f32.mrb[0].mxu0
        %3385 = vmatprep.mubr.bf16.mxu0 0
        %3386 = vmatmul.mubr.bf16.gmra.mrb[0].mxu0 %v3237
        %v3387 = vpop.f32.mrb[0].mxu0
        %v3388 = vadd.f32 0.0, %v3387
        %v3389 = vpop.f32.mrb[0].mxu0
        %v3390 = vpop.f32.mrb[0].mxu0
        %v3391 = vadd.f32 0.0, %v3390
        %v3392 = vpop.f32.mrb[0].mxu0
        %3393 = vmatprep.mubr.bf16.mxu0 0
        %3394 = vmatmul.mubr.bf16.gmra.mrb[0].mxu0 %v3238
        %v3395 = vpop.f32.mrb[0].mxu0
        %v3396 = vadd.f32 0.0, %v3395
        %v3397 = vpop.f32.mrb[0].mxu0
        %v3398 = vpop.f32.mrb[0].mxu0
        %v3399 = vadd.f32 0.0, %v3398
        %v3400 = vpop.f32.mrb[0].mxu0
        %3401 = vmatprep.mubr.bf16.mxu0 0
        %3402 = vmatmul.mubr.bf16.gmra.mrb[0].mxu0 %v3239
        %v3403 = vpop.f32.mrb[0].mxu0
        %v3404 = vadd.f32 0.0, %v3403
        %v3405 = vpop.f32.mrb[0].mxu0
        %v3406 = vpop.f32.mrb[0].mxu0
        %v3407 = vadd.f32 0.0, %v3406
        %v3408 = vpop.f32.mrb[0].mxu0
        %3409 = vmatprep.mubr.bf16.mxu0 0
        %3410 = vmatmul.mubr.bf16.gmra.mrb[0].mxu0 %v3240
        %v3411 = vpop.f32.mrb[0].mxu0
        %v3412 = vadd.f32 0.0, %v3411
        %v3413 = vpop.f32.mrb[0].mxu0
        %v3414 = vpop.f32.mrb[0].mxu0
        %v3415 = vadd.f32 0.0, %v3414
        %v3416 = vpop.f32.mrb[0].mxu0
        %3417 = vmatprep.mubr.bf16.mxu0 0
        %3418 = vmatmul.mubr.bf16.gmra.mrb[0].mxu0 %v3241
        %v3419 = vpop.f32.mrb[0].mxu0
        %v3420 = vadd.f32 0.0, %v3419
        %v3421 = vpop.f32.mrb[0].mxu0
        %v3422 = vpop.f32.mrb[0].mxu0
        %v3423 = vadd.f32 0.0, %v3422
        %v3424 = vpop.f32.mrb[0].mxu0
        %3425 = vmatprep.mubr.bf16.mxu0 0
        %3426 = vmatmul.mubr.bf16.gmra.mrb[0].mxu0 %v3242
        %v3427 = vpop.f32.mrb[0].mxu0
        %v3428 = vadd.f32 0.0, %v3427
        %v3429 = vpop.f32.mrb[0].mxu0
        %v3430 = vpop.f32.mrb[0].mxu0
        %v3431 = vadd.f32 0.0, %v3430
        %v3432 = vpop.f32.mrb[0].mxu0
        %3433 = vmatprep.mubr.bf16.mxu0 0
        %3434 = vmatmul.mubr.bf16.gmra.mrb[0].mxu0 %v3243
        %v3435 = vpop.f32.mrb[0].mxu0
        %v3436 = vadd.f32 0.0, %v3435
        %v3437 = vpop.f32.mrb[0].mxu0
        %v3438 = vpop.f32.mrb[0].mxu0
        %v3439 = vadd.f32 0.0, %v3438
        %v3440 = vpop.f32.mrb[0].mxu0
        %3441 = vmatprep.mubr.bf16.mxu0 0
        %3442 = vmatmul.mubr.bf16.gmra.mrb[0].mxu0 %v3244
        %v3443 = vpop.f32.mrb[0].mxu0
        %v3444 = vadd.f32 0.0, %v3443
        %v3445 = vpop.f32.mrb[0].mxu0
        %v3446 = vpop.f32.mrb[0].mxu0
        %v3447 = vadd.f32 0.0, %v3446
        %v3448 = vpop.f32.mrb[0].mxu0
        %3449 = vmatprep.mubr.bf16.mxu0 0
        %3450 = vmatmul.mubr.bf16.gmra.mrb[0].mxu0 %v3245
        %v3451 = vpop.f32.mrb[0].mxu0
        %v3452 = vadd.f32 0.0, %v3451
        %v3453 = vpop.f32.mrb[0].mxu0
        %v3454 = vpop.f32.mrb[0].mxu0
        %v3455 = vadd.f32 0.0, %v3454
        %v3456 = vpop.f32.mrb[0].mxu0
        %3457 = vmatprep.mubr.bf16.mxu0 0
        %3458 = vmatmul.mubr.bf16.gmra.mrb[0].mxu0 %v3246
        %v3459 = vpop.f32.mrb[0].mxu0
        %v3460 = vadd.f32 0.0, %v3459
        %v3461 = vpop.f32.mrb[0].mxu0
        %v3462 = vpop.f32.mrb[0].mxu0
        %v3463 = vadd.f32 0.0, %v3462
        %v3464 = vpop.f32.mrb[0].mxu0
        %3465 = vmatprep.mubr.bf16.mxu0 0
        %3466 = vmatmul.mubr.bf16.gmra.mrb[0].mxu0 %v3247
        %v3467 = vpop.f32.mrb[0].mxu0
        %v3468 = vadd.f32 0.0, %v3467
        %v3469 = vpop.f32.mrb[0].mxu0
        %v3470 = vpop.f32.mrb[0].mxu0
        %v3471 = vadd.f32 0.0, %v3470
        %v3472 = vpop.f32.mrb[0].mxu0
        %3473 = vdwg.mxu0
        %v3474 = vmax.f32 %v3348, 0.0
        %v3475 = vmax.f32 %v3351, 0.0
        %v3476 = vmax.f32 %v3356, 0.0
        %v3477 = vmax.f32 %v3359, 0.0
        %v3478 = vmax.f32 %v3364, 0.0
        %v3479 = vmax.f32 %v3367, 0.0
        %v3480 = vmax.f32 %v3372, 0.0
        %v3481 = vmax.f32 %v3375, 0.0
        %v3482 = vmax.f32 %v3380, 0.0
        %v3483 = vmax.f32 %v3383, 0.0
        %v3484 = vmax.f32 %v3388, 0.0
        %v3485 = vmax.f32 %v3391, 0.0
        %v3486 = vmax.f32 %v3396, 0.0
        %v3487 = vmax.f32 %v3399, 0.0
        %v3488 = vmax.f32 %v3404, 0.0
        %v3489 = vmax.f32 %v3407, 0.0
        %v3490 = vmax.f32 %v3412, 0.0
        %v3491 = vmax.f32 %v3415, 0.0
        %v3492 = vmax.f32 %v3420, 0.0
        %v3493 = vmax.f32 %v3423, 0.0
        %v3494 = vmax.f32 %v3428, 0.0
        %v3495 = vmax.f32 %v3431, 0.0
        %v3496 = vmax.f32 %v3436, 0.0
        %v3497 = vmax.f32 %v3439, 0.0
        %v3498 = vmax.f32 %v3444, 0.0
        %v3499 = vmax.f32 %v3447, 0.0
        %v3500 = vmax.f32 %v3452, 0.0
        %v3501 = vmax.f32 %v3455, 0.0
        %v3502 = vmax.f32 %v3460, 0.0
        %v3503 = vmax.f32 %v3463, 0.0
        %v3504 = vmax.f32 %v3468, 0.0
        %v3505 = vmax.f32 %v3471, 0.0
        %v3506 = vmul.f32 %v3474, %v3474
        %v3507 = vmul.f32 %v3475, %v3475
        %v3508 = vmul.f32 %v3476, %v3476
        %v3509 = vmul.f32 %v3477, %v3477
        %v3510 = vmul.f32 %v3478, %v3478
        %v3511 = vmul.f32 %v3479, %v3479
        %v3512 = vmul.f32 %v3480, %v3480
        %v3513 = vmul.f32 %v3481, %v3481
        %v3514 = vmul.f32 %v3482, %v3482
        %v3515 = vmul.f32 %v3483, %v3483
        %v3516 = vmul.f32 %v3484, %v3484
        %v3517 = vmul.f32 %v3485, %v3485
        %v3518 = vmul.f32 %v3486, %v3486
        %v3519 = vmul.f32 %v3487, %v3487
        %v3520 = vmul.f32 %v3488, %v3488
        %v3521 = vmul.f32 %v3489, %v3489
        %v3522 = vmul.f32 %v3490, %v3490
        %v3523 = vmul.f32 %v3491, %v3491
        %v3524 = vmul.f32 %v3492, %v3492
        %v3525 = vmul.f32 %v3493, %v3493
        %v3526 = vmul.f32 %v3494, %v3494
        %v3527 = vmul.f32 %v3495, %v3495
        %v3528 = vmul.f32 %v3496, %v3496
        %v3529 = vmul.f32 %v3497, %v3497
        %v3530 = vmul.f32 %v3498, %v3498
        %v3531 = vmul.f32 %v3499, %v3499
        %v3532 = vmul.f32 %v3500, %v3500
        %v3533 = vmul.f32 %v3501, %v3501
        %v3534 = vmul.f32 %v3502, %v3502
        %v3535 = vmul.f32 %v3503, %v3503
        %v3536 = vmul.f32 %v3504, %v3504
        %v3537 = vmul.f32 %v3505, %v3505
        %v3538 = vadd.f32 %v3474, %v3475
        %v3539 = vadd.f32 %v3538, %v3476
        %v3540 = vadd.f32 %v3539, %v3477
        %v3541 = vadd.f32 %v3540, %v3478
        %v3542 = vadd.f32 %v3541, %v3479
        %v3543 = vadd.f32 %v3542, %v3480
        %v3544 = vadd.f32 %v3543, %v3481
        %v3545 = vadd.f32 %v3544, %v3482
        %v3546 = vadd.f32 %v3545, %v3483
        %v3547 = vadd.f32 %v3546, %v3484
        %v3548 = vadd.f32 %v3547, %v3485
        %v3549 = vadd.f32 %v3548, %v3486
        %v3550 = vadd.f32 %v3549, %v3487
        %v3551 = vadd.f32 %v3550, %v3488
        %v3552 = vadd.f32 %v3551, %v3489
        %v3553 = vrot.slane %v3552, 4
        %v3554 = vadd.f32 %v3552, %v3553
        %v3555 = vrot.slane %v3554, 2
        %v3556 = vadd.f32 %v3554, %v3555
        %v3557 = vrot.slane %v3556, 1
        %v3558 = vadd.f32 %v3556, %v3557
        %v3559 = vadd.f32 %v3506, %v3507
        %v3560 = vadd.f32 %v3559, %v3508
        %v3561 = vadd.f32 %v3560, %v3509
        %v3562 = vadd.f32 %v3561, %v3510
        %v3563 = vadd.f32 %v3562, %v3511
        %v3564 = vadd.f32 %v3563, %v3512
        %v3565 = vadd.f32 %v3564, %v3513
        %v3566 = vadd.f32 %v3565, %v3514
        %v3567 = vadd.f32 %v3566, %v3515
        %v3568 = vadd.f32 %v3567, %v3516
        %v3569 = vadd.f32 %v3568, %v3517
        %v3570 = vadd.f32 %v3569, %v3518
        %v3571 = vadd.f32 %v3570, %v3519
        %v3572 = vadd.f32 %v3571, %v3520
        %v3573 = vadd.f32 %v3572, %v3521
        %v3574 = vrot.slane %v3573, 4
        %v3575 = vadd.f32 %v3573, %v3574
        %v3576 = vrot.slane %v3575, 2
        %v3577 = vadd.f32 %v3575, %v3576
        %v3578 = vrot.slane %v3577, 1
        %v3579 = vadd.f32 %v3577, %v3578
        %v3580 = vadd.f32 %v3490, %v3491
        %v3581 = vadd.f32 %v3580, %v3492
        %v3582 = vadd.f32 %v3581, %v3493
        %v3583 = vadd.f32 %v3582, %v3494
        %v3584 = vadd.f32 %v3583, %v3495
        %v3585 = vadd.f32 %v3584, %v3496
        %v3586 = vadd.f32 %v3585, %v3497
        %v3587 = vadd.f32 %v3586, %v3498
        %v3588 = vadd.f32 %v3587, %v3499
        %v3589 = vadd.f32 %v3588, %v3500
        %v3590 = vadd.f32 %v3589, %v3501
        %v3591 = vadd.f32 %v3590, %v3502
        %v3592 = vadd.f32 %v3591, %v3503
        %v3593 = vadd.f32 %v3592, %v3504
        %v3594 = vadd.f32 %v3593, %v3505
        %v3595 = vrot.slane %v3594, 4
        %v3596 = vadd.f32 %v3594, %v3595
        %v3597 = vrot.slane %v3596, 2
        %v3598 = vadd.f32 %v3596, %v3597
        %v3599 = vrot.slane %v3598, 1
        %v3600 = vadd.f32 %v3598, %v3599
        %v3601 = vadd.f32 %v3522, %v3523
        %v3602 = vadd.f32 %v3601, %v3524
        %v3603 = vadd.f32 %v3602, %v3525
        %v3604 = vadd.f32 %v3603, %v3526
        %v3605 = vadd.f32 %v3604, %v3527
        %v3606 = vadd.f32 %v3605, %v3528
        %v3607 = vadd.f32 %v3606, %v3529
        %v3608 = vadd.f32 %v3607, %v3530
        %v3609 = vadd.f32 %v3608, %v3531
        %v3610 = vadd.f32 %v3609, %v3532
        %v3611 = vadd.f32 %v3610, %v3533
        %v3612 = vadd.f32 %v3611, %v3534
        %v3613 = vadd.f32 %v3612, %v3535
        %v3614 = vadd.f32 %v3613, %v3536
        %v3615 = vadd.f32 %v3614, %v3537
        %v3616 = vrot.slane %v3615, 4
        %v3617 = vadd.f32 %v3615, %v3616
        %v3618 = vrot.slane %v3617, 2
        %v3619 = vadd.f32 %v3617, %v3618
        %v3620 = vrot.slane %v3619, 1
        %v3621 = vadd.f32 %v3619, %v3620
        %v3622 = vmul.f32 %v3558, 0.0078125
        %v3623 = vmul.f32 %v3600, 0.0078125
        %v3624 = vmul.f32 %v3579, 0.0078125
        %v3625 = vmul.f32 %v3621, 0.0078125
        %v3626 = vmul.f32 %v3622, %v3622
        %v3627 = vmul.f32 %v3623, %v3623
        %v3628 = vsub.f32 %v3624, %v3626
        %v3629 = vsub.f32 %v3625, %v3627
        %v3630 = vmax.f32 %v3628, 0.0
        %v3631 = vmax.f32 %v3629, 0.0
        %v3632 = vsub.f32 %v3474, %v3622
        %v3633 = vsub.f32 %v3475, %v3622
        %v3634 = vsub.f32 %v3476, %v3622
        %v3635 = vsub.f32 %v3477, %v3622
        %v3636 = vsub.f32 %v3478, %v3622
        %v3637 = vsub.f32 %v3479, %v3622
        %v3638 = vsub.f32 %v3480, %v3622
        %v3639 = vsub.f32 %v3481, %v3622
        %v3640 = vsub.f32 %v3482, %v3622
        %v3641 = vsub.f32 %v3483, %v3622
        %v3642 = vsub.f32 %v3484, %v3622
        %v3643 = vsub.f32 %v3485, %v3622
        %v3644 = vsub.f32 %v3486, %v3622
        %v3645 = vsub.f32 %v3487, %v3622
        %v3646 = vsub.f32 %v3488, %v3622
        %v3647 = vsub.f32 %v3489, %v3622
        %v3648 = vsub.f32 %v3490, %v3623
        %v3649 = vsub.f32 %v3491, %v3623
        %v3650 = vsub.f32 %v3492, %v3623
        %v3651 = vsub.f32 %v3493, %v3623
        %v3652 = vsub.f32 %v3494, %v3623
        %v3653 = vsub.f32 %v3495, %v3623
        %v3654 = vsub.f32 %v3496, %v3623
        %v3655 = vsub.f32 %v3497, %v3623
        %v3656 = vsub.f32 %v3498, %v3623
        %v3657 = vsub.f32 %v3499, %v3623
        %v3658 = vsub.f32 %v3500, %v3623
        %v3659 = vsub.f32 %v3501, %v3623
        %v3660 = vsub.f32 %v3502, %v3623
        %v3661 = vsub.f32 %v3503, %v3623
        %v3662 = vsub.f32 %v3504, %v3623
        %v3663 = vsub.f32 %v3505, %v3623
        %v3664 = vadd.f32 %v3630, 1e-05
        %v3665 = vadd.f32 %v3631, 1e-05
        %v3666 = vrsqrt.pop %v3664
        %v3667 = vrsqrt.pop %v3665
        %v3668 = vmul.f32 %v3632, %v3666
        %v3669 = vmul.f32 %v3633, %v3666
        %v3670 = vmul.f32 %v3634, %v3666
        %v3671 = vmul.f32 %v3635, %v3666
        %v3672 = vmul.f32 %v3636, %v3666
        %v3673 = vmul.f32 %v3637, %v3666
        %v3674 = vmul.f32 %v3638, %v3666
        %v3675 = vmul.f32 %v3639, %v3666
        %v3676 = vmul.f32 %v3640, %v3666
        %v3677 = vmul.f32 %v3641, %v3666
        %v3678 = vmul.f32 %v3642, %v3666
        %v3679 = vmul.f32 %v3643, %v3666
        %v3680 = vmul.f32 %v3644, %v3666
        %v3681 = vmul.f32 %v3645, %v3666
        %v3682 = vmul.f32 %v3646, %v3666
        %v3683 = vmul.f32 %v3647, %v3666
        %v3684 = vmul.f32 %v3648, %v3667
        %v3685 = vmul.f32 %v3649, %v3667
        %v3686 = vmul.f32 %v3650, %v3667
        %v3687 = vmul.f32 %v3651, %v3667
        %v3688 = vmul.f32 %v3652, %v3667
        %v3689 = vmul.f32 %v3653, %v3667
        %v3690 = vmul.f32 %v3654, %v3667
        %v3691 = vmul.f32 %v3655, %v3667
        %v3692 = vmul.f32 %v3656, %v3667
        %v3693 = vmul.f32 %v3657, %v3667
        %v3694 = vmul.f32 %v3658, %v3667
        %v3695 = vmul.f32 %v3659, %v3667
        %v3696 = vmul.f32 %v3660, %v3667
        %v3697 = vmul.f32 %v3661, %v3667
        %v3698 = vmul.f32 %v3662, %v3667
        %v3699 = vmul.f32 %v3663, %v3667
        %s3700 = scalar_lea.vmem %s5, 2
        %v3701 = vld [vmem:[%s3700] sm:$0x1]
        %v3703 = vlaneseq
        %v3704 = vshrl.u32 %v3703, 7
        %v3705 = vsub.s32 0, %v3704
        %v3706 = vrot.slane %v3701, %v3705
        %v3708 = vmul.f32 %v3668, %v3706
        %v3709 = vmul.f32 %v3669, %v3706
        %v3710 = vmul.f32 %v3670, %v3706
        %v3711 = vmul.f32 %v3671, %v3706
        %v3712 = vmul.f32 %v3672, %v3706
        %v3713 = vmul.f32 %v3673, %v3706
        %v3714 = vmul.f32 %v3674, %v3706
        %v3715 = vmul.f32 %v3675, %v3706
        %v3716 = vmul.f32 %v3676, %v3706
        %v3717 = vmul.f32 %v3677, %v3706
        %v3718 = vmul.f32 %v3678, %v3706
        %v3719 = vmul.f32 %v3679, %v3706
        %v3720 = vmul.f32 %v3680, %v3706
        %v3721 = vmul.f32 %v3681, %v3706
        %v3722 = vmul.f32 %v3682, %v3706
        %v3723 = vmul.f32 %v3683, %v3706
        %v3724 = vmul.f32 %v3684, %v3706
        %v3725 = vmul.f32 %v3685, %v3706
        %v3726 = vmul.f32 %v3686, %v3706
        %v3727 = vmul.f32 %v3687, %v3706
        %v3728 = vmul.f32 %v3688, %v3706
        %v3729 = vmul.f32 %v3689, %v3706
        %v3730 = vmul.f32 %v3690, %v3706
        %v3731 = vmul.f32 %v3691, %v3706
        %v3732 = vmul.f32 %v3692, %v3706
        %v3733 = vmul.f32 %v3693, %v3706
        %v3734 = vmul.f32 %v3694, %v3706
        %v3735 = vmul.f32 %v3695, %v3706
        %v3736 = vmul.f32 %v3696, %v3706
        %v3737 = vmul.f32 %v3697, %v3706
        %v3738 = vmul.f32 %v3698, %v3706
        %v3739 = vmul.f32 %v3699, %v3706
        %s3740 = scalar_lea.vmem %s6, 2
        %v3741 = vld [vmem:[%s3740] sm:$0x1]
        %v3743 = vlaneseq
        %v3744 = vshrl.u32 %v3743, 7
        %v3745 = vsub.s32 0, %v3744
        %v3746 = vrot.slane %v3741, %v3745
        %v3748 = vadd.f32 %v3708, %v3746
        %v3749 = vadd.f32 %v3709, %v3746
        %v3750 = vadd.f32 %v3710, %v3746
        %v3751 = vadd.f32 %v3711, %v3746
        %v3752 = vadd.f32 %v3712, %v3746
        %v3753 = vadd.f32 %v3713, %v3746
        %v3754 = vadd.f32 %v3714, %v3746
        %v3755 = vadd.f32 %v3715, %v3746
        %v3756 = vadd.f32 %v3716, %v3746
        %v3757 = vadd.f32 %v3717, %v3746
        %v3758 = vadd.f32 %v3718, %v3746
        %v3759 = vadd.f32 %v3719, %v3746
        %v3760 = vadd.f32 %v3720, %v3746
        %v3761 = vadd.f32 %v3721, %v3746
        %v3762 = vadd.f32 %v3722, %v3746
        %v3763 = vadd.f32 %v3723, %v3746
        %v3764 = vadd.f32 %v3724, %v3746
        %v3765 = vadd.f32 %v3725, %v3746
        %v3766 = vadd.f32 %v3726, %v3746
        %v3767 = vadd.f32 %v3727, %v3746
        %v3768 = vadd.f32 %v3728, %v3746
        %v3769 = vadd.f32 %v3729, %v3746
        %v3770 = vadd.f32 %v3730, %v3746
        %v3771 = vadd.f32 %v3731, %v3746
        %v3772 = vadd.f32 %v3732, %v3746
        %v3773 = vadd.f32 %v3733, %v3746
        %v3774 = vadd.f32 %v3734, %v3746
        %v3775 = vadd.f32 %v3735, %v3746
        %v3776 = vadd.f32 %v3736, %v3746
        %v3777 = vadd.f32 %v3737, %v3746
        %v3778 = vadd.f32 %v3738, %v3746
        %v3779 = vadd.f32 %v3739, %v3746
        %3780 = vst [vmem:[%s324] sm:$0xff] %v3748
        %3781 = vst [vmem:[%s324 + $0x8] sm:$0xff] %v3749
        %3782 = vst [vmem:[%s324 + $0x10] sm:$0xff] %v3750
        %3783 = vst [vmem:[%s324 + $0x18] sm:$0xff] %v3751
        %3784 = vst [vmem:[%s324 + $0x20] sm:$0xff] %v3752
        %3785 = vst [vmem:[%s324 + $0x28] sm:$0xff] %v3753
        %3786 = vst [vmem:[%s324 + $0x30] sm:$0xff] %v3754
        %3787 = vst [vmem:[%s324 + $0x38] sm:$0xff] %v3755
        %3788 = vst [vmem:[%s324 + $0x40] sm:$0xff] %v3756
        %3789 = vst [vmem:[%s324 + $0x48] sm:$0xff] %v3757
        %3790 = vst [vmem:[%s324 + $0x50] sm:$0xff] %v3758
        %3791 = vst [vmem:[%s324 + $0x58] sm:$0xff] %v3759
        %3792 = vst [vmem:[%s324 + $0x60] sm:$0xff] %v3760
        %3793 = vst [vmem:[%s324 + $0x68] sm:$0xff] %v3761
        %3794 = vst [vmem:[%s324 + $0x70] sm:$0xff] %v3762
        %3795 = vst [vmem:[%s324 + $0x78] sm:$0xff] %v3763
        %3796 = vst [vmem:[%s324 + $0x80] sm:$0xff] %v3764
        %3797 = vst [vmem:[%s324 + $0x88] sm:$0xff] %v3765
        %3798 = vst [vmem:[%s324 + $0x90] sm:$0xff] %v3766
        %3799 = vst [vmem:[%s324 + $0x98] sm:$0xff] %v3767
        %3800 = vst [vmem:[%s324 + $0xa0] sm:$0xff] %v3768
        %3801 = vst [vmem:[%s324 + $0xa8] sm:$0xff] %v3769
        %3802 = vst [vmem:[%s324 + $0xb0] sm:$0xff] %v3770
        %3803 = vst [vmem:[%s324 + $0xb8] sm:$0xff] %v3771
        %3804 = vst [vmem:[%s324 + $0xc0] sm:$0xff] %v3772
        %3805 = vst [vmem:[%s324 + $0xc8] sm:$0xff] %v3773
        %3806 = vst [vmem:[%s324 + $0xd0] sm:$0xff] %v3774
        %3807 = vst [vmem:[%s324 + $0xd8] sm:$0xff] %v3775
        %3808 = vst [vmem:[%s324 + $0xe0] sm:$0xff] %v3776
        %3809 = vst [vmem:[%s324 + $0xe8] sm:$0xff] %v3777
        %3810 = vst [vmem:[%s324 + $0xf0] sm:$0xff] %v3778
        %3811 = vst [vmem:[%s324 + $0xf8] sm:$0xff] %v3779
        %s3812 = smul.u32 2, %s19
        %p3813 = scmp.lt.s32.totalorder %s3812, 3
        %s3814 = scalar_select %p3813, %s3812, 3
        %s3815 = smul.addr %s3814, 16
        %s3816 = smul.addr %s3815, 8
        %s3817 = scalar_lea.vmem %s7, %s3816
        // Predicated region
        $region53: #{gin_forward_batched.1} parent=47 // pred_check
          %p3818 = pneg %p194
        $region54: #{gin_forward_batched.1} parent=47 // pred_check_branch
          %3820 = sbr.rel (%p3818) target = $region56
        $region55: #{gin_forward_batched.1} parent=47 // pred_region
          %s3821 = smul.u32 2, %s19
        $region56: #{gin_forward_batched.1} parent=47 // pred_fallthru
          _
      $region48: #{gin_forward_batched.1} parent=5 // pred_fallthru
        _
      %p3822 = scmp.le.s32.totalorder 2, %s14
      // Predicated region
      $region57: #{gin_forward_batched.1} parent=5 // pred_check
        %p3823 = pneg %p3822
      $region58: #{gin_forward_batched.1} parent=5 // pred_check_branch
        %3825 = sbr.rel (%p3823) target = $region60
      $region59: #{gin_forward_batched.1} parent=5 // pred_region
        %s3826 = ssub.s32 %s14, 2
        // Predicated region
        $region61: #{gin_forward_batched.1} parent=59 // pred_check
          %p3827 = pneg %p200
        $region62: #{gin_forward_batched.1} parent=59 // pred_check_branch
          %3829 = sbr.rel (%p3827) target = $region64
        $region63: #{gin_forward_batched.1} parent=59 // pred_region
          %s3830 = smul.u32 2, %s20
          %p3831 = scmp.lt.s32.totalorder %s3830, 3
          %s3832 = scalar_select %p3831, %s3830, 3
          %s3833 = smul.addr %s3832, 16
          %s3834 = smul.addr %s3833, 8
          %s3835 = scalar_lea.vmem %s7, %s3834
        $region64: #{gin_forward_batched.1} parent=59 // pred_fallthru
          _
      $region60: #{gin_forward_batched.1} parent=5 // pred_fallthru
        _
    $region6: #{gin_forward_batched.1} parent=1 // loop_footer
      %s18 = sadd.s32 1, %s14
    $region7: #{gin_forward_batched.1} parent=1 // loop_footer_branch
      %13 = sbr.rel target = $region3
    $region8: #{gin_forward_batched.1} parent=1 // loop_exit
      _
    %3836 = vsyncpa [#allocation3], 1
    %s3837 = scalar_lea.sflag [#allocation3], 1
    %3838 = vsyncpa %s3837, 1

</llo_original>
